<compile_context>
chip_gen: v6e
topology: v6e:2x2x1
jax: 0.10.0
libtpu: 0.0.40
codegen_flags: <defaults>
</compile_context>

<pallas_src>
import functools

import numpy as np
import jax
import jax.numpy as jnp
from jax import lax
from jax.experimental import pallas as pl
from jax.experimental.pallas import tpu as pltpu

# ----------------------------- constants (from the module) -------------------
BETA = 4.0
DT = 0.5
G_Z = 9.81
RHO = 1.0 / G_Z
DX = 1.0  # grid spacing (dx[0] in the torch source); deterministic choice

# Reference stencils (the torch source loads w1,w2,w3,wm externally; these are
# the standard AI4PDE SWE finite-difference choices).  The kernel hard-codes
# their *structure* (uniform-ring diffusion, uniform mean, separable x/y
# advection) instead of doing generic 3x3 convolutions.
W1 = np.array([[1 / 3, 1 / 3, 1 / 3],
               [1 / 3, -8 / 3, 1 / 3],
               [1 / 3, 1 / 3, 1 / 3]], dtype=np.float32)
W2 = np.array([[1 / 12, 0.0, -1 / 12],
               [1 / 3, 0.0, -1 / 3],
               [1 / 12, 0.0, -1 / 12]], dtype=np.float32)
W3 = np.array([[-1 / 12, -1 / 3, -1 / 12],
               [0.0, 0.0, 0.0],
               [1 / 12, 1 / 3, 1 / 12]], dtype=np.float32)
WM = np.full((3, 3), 1.0 / 9.0, dtype=np.float32)

DIAG = float(-W1[1, 1] / DX ** 2)   # self.diag = 8/3

HALO = 8   # >= 5 (total stencil influence radius of one step); 8 keeps DMA
           # windows and result slices sublane (8-row) aligned.


# ----------------------------- the Pallas kernel ------------------------------
def swe_kernel(*refs, H, W, TILE_H, G1, k1, k2, k3, full_outputs):
    n_in = 7
    n_out = 10 if full_outputs else 4
    in_refs = refs[:n_in]
    out_refs = refs[n_in:n_in + n_out]
    bufs = refs[n_in + n_out:n_in + n_out + n_in]       # (2, WIN, Wp) each
    sem = refs[n_in + n_out + n_in]                      # DMA sems (7, 2)

    WIN = TILE_H + 2 * HALO
    Wp = bufs[0].shape[2]
    i0 = pl.program_id(0)            # "parallel" axis (megacore)
    jj = pl.program_id(1)            # "arbitrary" axis (prefetch chain)
    tile = i0 * G1 + jj
    slot = jj % 2

    # ---- manual window DMA, double-buffered across the inner grid axis ------
    def start_window(t, s):
        row0 = pl.multiple_of(t * TILE_H, 8)
        for f in range(n_in):
            pltpu.make_async_copy(in_refs[f].at[pl.ds(row0, WIN), :],
                                  bufs[f].at[s], sem.at[f, s]).start()

    @pl.when(jj == 0)                # prime this parallel slice (slot 0)
    def _():
        start_window(tile, slot)

    @pl.when(jj < G1 - 1)            # prefetch next tile into the other slot
    def _():
        start_window(tile + 1, 1 - slot)

    for f in range(n_in):            # wait for the current tile's windows
        pltpu.make_async_copy(in_refs[f].at[pl.ds(0, WIN), :],
                              bufs[f].at[slot], sem.at[f, slot]).wait()

    u = bufs[0][slot]
    v = bufs[1][slot]
    Hb = bufs[2][slot]
    h = bufs[3][slot]
    hh = bufs[4][slot]
    dif_h = bufs[5][slot]
    src = bufs[6][slot]

    # ---- global-domain boundary masks (window rows -> global rows) ----------
    row_l = lax.broadcasted_iota(jnp.int32, (WIN, Wp), 0)
    col_i = lax.broadcasted_iota(jnp.int32, (WIN, Wp), 1)
    g_row = row_l + (tile * TILE_H - HALO)
    top = g_row == 0
    bot = g_row == (H - 1)
    left = col_i == 0
    right = col_i == (W - 1)

    C13 = 1.0 / 3.0
    C112 = 1.0 / 12.0
    C19 = 1.0 / 9.0

    # ---- neighbour views via XLU rotates + boundary masks -------------------
    def col_pair(f, clamp_cols):
        fl = pltpu.roll(f, shift=1, axis=1)         # f[:, j-1]
        fr = pltpu.roll(f, shift=Wp - 1, axis=1)    # f[:, j+1]
        if clamp_cols:   # v-type BC: boundary columns replicate
            fl = jnp.where(left, f, fl)
            fr = jnp.where(right, f, fr)
        else:            # zero-pad / u-type BC: boundary columns are zero
            fl = jnp.where(left, 0.0, fl)
            fr = jnp.where(right, 0.0, fr)
        return fl, fr

    def row_pair(a, clamp_rows):
        au = pltpu.roll(a, shift=1, axis=0)         # a[i-1, :]
        ad = pltpu.roll(a, shift=WIN - 1, axis=0)   # a[i+1, :]
        if clamp_rows:   # u-type BC: boundary rows replicate
            au = jnp.where(top, a, au)
            ad = jnp.where(bot, a, ad)
        else:            # zero-pad / v-type BC: boundary rows are zero
            au = jnp.where(top, 0.0, au)
            ad = jnp.where(bot, 0.0, ad)
        return au, ad

    # ---- fused, structure-exploiting stencils --------------------------------
    def stencils_dxy(f, clamp_cols, clamp_rows):
        """diff (w1), xadv (w2), yadv (w3) of one BC-padded field, fused."""
        fl, fr = col_pair(f, clamp_cols)
        csum = fl + f + fr                      # uniform column sum (diff)
        cdif = fl - fr                          # column difference (xadv)
        cwgt = C112 * (fl + fr) + C13 * f       # weighted column sum (yadv)
        su, sd_ = row_pair(csum, clamp_rows)
        du, dd = row_pair(cdif, clamp_rows)
        wu, wd = row_pair(cwgt, clamp_rows)
        diff = C13 * (su + csum + sd_) - 3.0 * f
        xadv = C112 * (du + dd) + C13 * cdif
        yadv = wd - wu
        return diff, xadv, yadv

    def stencil_diff0(f):                       # w1 on a zero-padded field
        fl, fr = col_pair(f, False)
        csum = fl + f + fr
        su, sd_ = row_pair(csum, False)
        return C13 * (su + csum + sd_) - 3.0 * f

    def stencil_mean0(f):                       # wm (cmm) on a zero-padded field
        fl, fr = col_pair(f, False)
        csum = fl + f + fr
        su, sd_ = row_pair(csum, False)
        return C19 * (su + csum + sd_)

    def stencil_xy0(f):                         # w2 & w3 on a zero-padded field
        fl, fr = col_pair(f, False)
        cdif = fl - fr
        cwgt = C112 * (fl + fr) + C13 * f
        du, dd = row_pair(cdif, False)
        wu, wd = row_pair(cwgt, False)
        return C112 * (du + dd) + C13 * cdif, wd - wu

    def stencil_xadv(f, clamp_cols, clamp_rows):
        fl, fr = col_pair(f, clamp_cols)
        cdif = fl - fr
        du, dd = row_pair(cdif, clamp_rows)
        return C112 * (du + dd) + C13 * cdif

    def stencil_yadv(f, clamp_cols, clamp_rows):
        fl, fr = col_pair(f, clamp_cols)
        cwgt = C112 * (fl + fr) + C13 * f
        wu, wd = row_pair(cwgt, clamp_rows)
        return wd - wu

    # --------------------------- PG_vector -----------------------------------
    diff_uu, xadv_uu, yadv_uu = stencils_dxy(u, clamp_cols=False, clamp_rows=True)
    diff_vv, xadv_vv, yadv_vv = stencils_dxy(v, clamp_cols=True, clamp_rows=False)

    half_speed = 0.5 * (jnp.abs(u) + jnp.abs(v))            # dx = 1
    k_u = (0.25 * jnp.abs(half_speed * diff_uu)) * pl.reciprocal(
        0.001 + 0.5 * (jnp.abs(xadv_uu) + jnp.abs(yadv_uu)), approx=True)
    k_v = (0.25 * jnp.abs(half_speed * diff_vv)) * pl.reciprocal(
        0.001 + 0.5 * (jnp.abs(xadv_vv) + jnp.abs(yadv_vv)), approx=True)
    k_uu = jnp.minimum(k_u, k3)
    k_vv = jnp.minimum(k_v, k3)
    # (uu * k_uu) / (vv * k_vv) have an all-zero padding ring -> zero-pad diff.
    k_x = 0.5 * (k_u * diff_uu + stencil_diff0(u * k_uu) - u * stencil_diff0(k_uu))
    k_y = 0.5 * (k_v * diff_vv + stencil_diff0(v * k_vv) - v * stencil_diff0(k_vv))

    # --------------------------- momentum predictor ---------------------------
    u1 = (k_x - u * xadv_uu - v * yadv_uu) * (0.5 * DT) + u
    v1 = (k_y - u1 * xadv_vv - v * yadv_vv) * (0.5 * DT) + v

    xadv_h, yadv_h = stencil_xy0(h)
    u2 = u1 - xadv_h * DT
    v2 = v1 - yadv_h * DT

    # --------------------------- Manning friction -----------------------------
    eta = Hb + h
    depth = jnp.maximum(k1, stencil_mean0(eta) * 0.01 + eta * 0.99)
    inv_depth43 = jnp.exp((-4.0 / 3.0) * jnp.log(depth))    # depth**(-4/3), depth>0
    sigma_q = jnp.sqrt(u2 * u2 + v2 * v2) * (0.055 ** 2) * inv_depth43
    fric = 1.0 / (1.0 + sigma_q * (DT / RHO))               # reused for u and v
    u3 = u2 * fric
    v3 = v2 * fric

    # --------------------------- pressure rhs (b) -----------------------------
    eta1 = jnp.maximum(k2, eta)
    eta2 = jnp.maximum(k1, eta)
    inv_eta2 = 1.0 / eta2                                   # reused in b, c

    diff_e, xadv_e, yadv_e = stencils_dxy(eta1, clamp_cols=False, clamp_rows=False)
    half_speed3 = 0.5 * (jnp.abs(u3) + jnp.abs(v3))
    k_u_s = (0.25 * jnp.abs(half_speed3 * diff_e)) * pl.reciprocal(
        0.001 + 0.5 * (jnp.abs(xadv_e) + jnp.abs(yadv_e)), approx=True)
    k_uu_s = jnp.minimum(k_u_s, k3)
    pg_s = 0.5 * (k_u_s * diff_e + stencil_diff0(eta1 * k_uu_s)
                  - eta1 * stencil_diff0(k_uu_s))

    xadv_u3 = stencil_xadv(u3, clamp_cols=False, clamp_rows=True)   # bc_u(u3)
    yadv_v3 = stencil_yadv(v3, clamp_cols=True, clamp_rows=False)   # bc_v(v3)

    b = (BETA * RHO / DT) * (
        -xadv_e * u3 - yadv_e * v3 - eta1 * (xadv_u3 + yadv_v3)
        + pg_s - stencil_mean0(dif_h) * (1.0 / DT) + src) * inv_eta2

    # --------------------------- 2 Jacobi iterations ---------------------------
    c = (BETA * RHO / (DT * DT)) * inv_eta2
    inv_denom = 1.0 / (DIAG + c)          # hoisted out of the loop
    b_dd = b * inv_denom                  # hoisted out of the loop
    hh_i = hh
    for _ in range(2):
        hh_i = hh_i - (c * hh_i - stencil_diff0(hh_i)) * inv_denom + b_dd

    h_new = h + hh_i                      # dif_values_h == hh_i (aliased outside)

    # --------------------------- velocity corrector ----------------------------
    xadv_hh, yadv_hh = stencil_xy0(hh_i)
    u4 = u3 - xadv_hh * (DT / RHO)
    v4 = v3 - yadv_hh * (DT / RHO)

    # --------------------------- writeback (interior rows only) ----------------
    lo, hi = HALO, HALO + TILE_H
    out_refs[0][...] = u4[lo:hi, :]
    out_refs[1][...] = v4[lo:hi, :]
    out_refs[2][...] = h_new[lo:hi, :]
    out_refs[3][...] = hh_i[lo:hi, :]
    if full_outputs:
        out_refs[4][...] = sigma_q[lo:hi, :]
        out_refs[5][...] = b[lo:hi, :]
        out_refs[6][...] = eta1[lo:hi, :]
        out_refs[7][...] = eta2[lo:hi, :]
        out_refs[8][...] = k_x[lo:hi, :]
        out_refs[9][...] = k_y[lo:hi, :]


# ----------------------------- wrapper ---------------------------------------
def swe_forward(values_u, values_v, values_H, values_h, values_hh,
                dif_values_h, source_h, *, k1=1e-3, k2=1e-3, k3=1e-2,
                tile_h=128, num_splits=2, full_outputs=False):
    """One AI4SWE forward step on (H, W) float32 fields (NCHW, N=C=1 squeezed).

    k1/k2/k3 are the scalar thresholds of the torch model (k1 must be > 0).
    tile_h is the H-tile size (auto-capped so the double-buffered working set
    fits one core's VMEM); num_splits is the size of the "parallel" grid axis
    (megacore sharding on v7x).  The W axis is padded to a multiple of 128.
    """
    H, W = values_u.shape

    Wp = max(128, ((W + 127) // 128) * 128)

    # Cap TILE_H so double-buffered input windows + pipelined output blocks +
    # elementwise temporaries stay well inside one core's VMEM (v7x: 64 MiB).
    cap = (20 * 1024 * 1024) // (Wp * 4 * 48)
    cap = max(8, (cap // 8) * 8)
    TILE_H = max(8, min(int(tile_h), cap, ((H + 7) // 8) * 8))
    TILE_H = ((TILE_H + 7) // 8) * 8

    nt = -(-H // TILE_H)
    G0 = max(1, min(int(num_splits), nt))   # "parallel" axis (megacore)
    G1 = -(-nt // G0)                       # "arbitrary" axis (prefetch chain)
    nt_pad = G0 * G1
    Hp = nt_pad * TILE_H
    WIN = TILE_H + 2 * HALO

    def pad(x):
        x = jnp.asarray(x, jnp.float32)
        return jnp.pad(x, ((HALO, Hp + HALO - H), (0, Wp - W)))

    ins = [pad(x) for x in (values_u, values_v, values_H, values_h, values_hh,
                            dif_values_h, source_h)]

    n_out = 10 if full_outputs else 4
    kern = functools.partial(swe_kernel, H=H, W=W, TILE_H=TILE_H, G1=G1,
                             k1=float(k1), k2=float(k2), k3=float(k3),
                             full_outputs=full_outputs)

    out_block = pl.BlockSpec((TILE_H, Wp), lambda i, j: (i * G1 + j, 0))
    outs = pl.pallas_call(
        kern,
        out_shape=tuple(jax.ShapeDtypeStruct((Hp, Wp), jnp.float32)
                        for _ in range(n_out)),
        grid=(G0, G1),
        in_specs=[pl.BlockSpec(memory_space=pl.ANY)] * 7,   # raw HBM, manual DMA
        out_specs=tuple(out_block for _ in range(n_out)),
        scratch_shapes=[pltpu.VMEM((2, WIN, Wp), jnp.float32) for _ in range(7)]
                       + [pltpu.SemaphoreType.DMA((7, 2))],
        compiler_params=pltpu.CompilerParams(
            dimension_semantics=("parallel", "arbitrary"),
            vmem_limit_bytes=64 * 1024 * 1024,
        ),
    )(*ins)

    crop = lambda x: x[:H, :W]
    res = {
        "values_u": crop(outs[0]),
        "values_v": crop(outs[1]),
        "values_h": crop(outs[2]),
        "values_hh": crop(outs[3]),
    }
    res["dif_values_h"] = res["values_hh"]   # identical by construction
    if full_outputs:
        for name, o in zip(("sigma_q", "b", "eta1", "eta2", "k_x", "k_y"),
                           outs[4:]):
            res[name] = crop(o)
    return res


# ----------------------------- demo -------------------------------------------
if __name__ == "__main__":
    key = jax.random.PRNGKey(0)
    Hn, Wn = 64, 256                       # small, lane-dense demo domain
    ks = jax.random.split(key, 7)
    values_u = 0.1 * jax.random.normal(ks[0], (Hn, Wn), jnp.float32)
    values_v = 0.1 * jax.random.normal(ks[1], (Hn, Wn), jnp.float32)
    values_H = 1.0 + jnp.abs(jax.random.normal(ks[2], (Hn, Wn), jnp.float32))
    values_h = 0.05 * jax.random.normal(ks[3], (Hn, Wn), jnp.float32)
    values_hh = 0.01 * jax.random.normal(ks[4], (Hn, Wn), jnp.float32)
    dif_values_h = 0.01 * jax.random.normal(ks[5], (Hn, Wn), jnp.float32)
    source_h = 0.01 * jax.random.normal(ks[6], (Hn, Wn), jnp.float32)

    # fast path (state only), small tiles -> exercises prime + prefetch + halos
    out = swe_forward(values_u, values_v, values_H, values_h, values_hh,
                      dif_values_h, source_h, tile_h=8)
    jax.block_until_ready(out)

    # ragged shape + full diagnostics (adds torch forward's extra outputs)
    c2 = lambda x: x[:40, :200]
    out_full = swe_forward(c2(values_u), c2(values_v), c2(values_H),
                           c2(values_h), c2(values_hh), c2(dif_values_h),
                           c2(source_h), tile_h=16, full_outputs=True)
    jax.block_until_ready(out_full)

    print("KERNEL_OK")
</pallas_src>

<mosaic_0001>
module attributes {stable_mosaic.version = 11 : i64} {
  func.func @swe_kernel(%arg0: i32, %arg1: i32, %arg2: memref<80x256xf32, #tpu.memory_space<any>>, %arg3: memref<80x256xf32, #tpu.memory_space<any>>, %arg4: memref<80x256xf32, #tpu.memory_space<any>>, %arg5: memref<80x256xf32, #tpu.memory_space<any>>, %arg6: memref<80x256xf32, #tpu.memory_space<any>>, %arg7: memref<80x256xf32, #tpu.memory_space<any>>, %arg8: memref<80x256xf32, #tpu.memory_space<any>>, %arg9: memref<8x256xf32, #tpu.memory_space<vmem>>, %arg10: memref<8x256xf32, #tpu.memory_space<vmem>>, %arg11: memref<8x256xf32, #tpu.memory_space<vmem>>, %arg12: memref<8x256xf32, #tpu.memory_space<vmem>>, %arg13: memref<2x24x256xf32, #tpu.memory_space<vmem>>, %arg14: memref<2x24x256xf32, #tpu.memory_space<vmem>>, %arg15: memref<2x24x256xf32, #tpu.memory_space<vmem>>, %arg16: memref<2x24x256xf32, #tpu.memory_space<vmem>>, %arg17: memref<2x24x256xf32, #tpu.memory_space<vmem>>, %arg18: memref<2x24x256xf32, #tpu.memory_space<vmem>>, %arg19: memref<2x24x256xf32, #tpu.memory_space<vmem>>, %arg20: memref<7x2x!tpu.dma_semaphore, #tpu.memory_space<semaphore_mem>>) attributes {dimension_semantics = [#tpu.dimension_semantics<parallel>, #tpu.dimension_semantics<arbitrary>], iteration_bounds = array<i64: 2, 4>, scalar_prefetch = 0 : i64, scratch_operands = 8 : i64, tpu.core_type = #tpu.core_type<tc>, window_params = [{}, {}, {}, {}, {}, {}, {}, {transform_indices = @transform_7, window_bounds = array<i64: 8, 256>}, {transform_indices = @transform_8, window_bounds = array<i64: 8, 256>}, {transform_indices = @transform_9, window_bounds = array<i64: 8, 256>}, {transform_indices = @transform_10, window_bounds = array<i64: 8, 256>}]} {
    %c4_i32 = arith.constant 4 : i32
    %0 = arith.muli %arg0, %c4_i32 : i32
    %1 = arith.addi %0, %arg1 : i32
    %c2_i32 = arith.constant 2 : i32
    %c0_i32 = arith.constant 0 : i32
    %2 = arith.cmpi eq, %c2_i32, %c0_i32 : i32
    %c1_i32 = arith.constant 1 : i32
    %3 = arith.select %2, %c1_i32, %c2_i32 : i32
    %4 = arith.remsi %arg1, %3 : i32
    %c0_i32_0 = arith.constant 0 : i32
    %5 = arith.cmpi ne, %4, %c0_i32_0 : i32
    %c0_i32_1 = arith.constant 0 : i32
    %6 = arith.cmpi slt, %4, %c0_i32_1 : i32
    %c0_i32_2 = arith.constant 0 : i32
    %7 = arith.cmpi slt, %3, %c0_i32_2 : i32
    %8 = arith.xori %6, %7 : i1
    %9 = arith.andi %8, %5 : i1
    %10 = arith.addi %4, %3 : i32
    %11 = arith.select %9, %10, %4 : i32
    %c0_i32_3 = arith.constant 0 : i32
    %12 = arith.cmpi eq, %arg1, %c0_i32_3 : i32
    %13 = arith.extui %12 : i1 to i32
    %c0_i32_4 = arith.constant 0 : i32
    %14 = arith.cmpi ne, %13, %c0_i32_4 : i32
    scf.if %14 {
      %c8_i32_305 = arith.constant 8 : i32
      %700 = arith.muli %1, %c8_i32_305 : i32
      %701 = tpu.assume_multiple %700, 8 : i32
      %c0_i32_306 = arith.constant 0 : i32
      %c0_i32_307 = arith.constant 0 : i32
      %702 = tpu.memref_slice %arg2[%701, %c0_i32_307] : memref<80x256xf32, #tpu.memory_space<any>> -> memref<24x256xf32, #tpu.memory_space<any>>
      %c0_i32_308 = arith.constant 0 : i32
      %c0_i32_309 = arith.constant 0 : i32
      %703 = tpu.memref_slice %arg13[%11, %c0_i32_308, %c0_i32_309] : memref<2x24x256xf32, #tpu.memory_space<vmem>> -> memref<1x24x256xf32, #tpu.memory_space<vmem>>
      %704 = tpu.memref_squeeze %703 : memref<1x24x256xf32, #tpu.memory_space<vmem>> -> memref<24x256xf32, #tpu.memory_space<vmem>>
      %705 = tpu.memref_slice %arg20[%c0_i32_306, %11] : memref<7x2x!tpu.dma_semaphore, #tpu.memory_space<semaphore_mem>> -> memref<1x1x!tpu.dma_semaphore, #tpu.memory_space<semaphore_mem>>
      %706 = tpu.memref_squeeze %705 : memref<1x1x!tpu.dma_semaphore, #tpu.memory_space<semaphore_mem>> -> memref<!tpu.dma_semaphore, #tpu.memory_space<semaphore_mem>>
      tpu.enqueue_dma source(%702 : memref<24x256xf32, #tpu.memory_space<any>>) target(%704 : memref<24x256xf32, #tpu.memory_space<vmem>>) target_semaphore(%706 : memref<!tpu.dma_semaphore, #tpu.memory_space<semaphore_mem>>)
      %c1_i32_310 = arith.constant 1 : i32
      %c0_i32_311 = arith.constant 0 : i32
      %707 = tpu.memref_slice %arg3[%701, %c0_i32_311] : memref<80x256xf32, #tpu.memory_space<any>> -> memref<24x256xf32, #tpu.memory_space<any>>
      %c0_i32_312 = arith.constant 0 : i32
      %c0_i32_313 = arith.constant 0 : i32
      %708 = tpu.memref_slice %arg14[%11, %c0_i32_312, %c0_i32_313] : memref<2x24x256xf32, #tpu.memory_space<vmem>> -> memref<1x24x256xf32, #tpu.memory_space<vmem>>
      %709 = tpu.memref_squeeze %708 : memref<1x24x256xf32, #tpu.memory_space<vmem>> -> memref<24x256xf32, #tpu.memory_space<vmem>>
      %710 = tpu.memref_slice %arg20[%c1_i32_310, %11] : memref<7x2x!tpu.dma_semaphore, #tpu.memory_space<semaphore_mem>> -> memref<1x1x!tpu.dma_semaphore, #tpu.memory_space<semaphore_mem>>
      %711 = tpu.memref_squeeze %710 : memref<1x1x!tpu.dma_semaphore, #tpu.memory_space<semaphore_mem>> -> memref<!tpu.dma_semaphore, #tpu.memory_space<semaphore_mem>>
      tpu.enqueue_dma source(%707 : memref<24x256xf32, #tpu.memory_space<any>>) target(%709 : memref<24x256xf32, #tpu.memory_space<vmem>>) target_semaphore(%711 : memref<!tpu.dma_semaphore, #tpu.memory_space<semaphore_mem>>)
      %c2_i32_314 = arith.constant 2 : i32
      %c0_i32_315 = arith.constant 0 : i32
      %712 = tpu.memref_slice %arg4[%701, %c0_i32_315] : memref<80x256xf32, #tpu.memory_space<any>> -> memref<24x256xf32, #tpu.memory_space<any>>
      %c0_i32_316 = arith.constant 0 : i32
      %c0_i32_317 = arith.constant 0 : i32
      %713 = tpu.memref_slice %arg15[%11, %c0_i32_316, %c0_i32_317] : memref<2x24x256xf32, #tpu.memory_space<vmem>> -> memref<1x24x256xf32, #tpu.memory_space<vmem>>
      %714 = tpu.memref_squeeze %713 : memref<1x24x256xf32, #tpu.memory_space<vmem>> -> memref<24x256xf32, #tpu.memory_space<vmem>>
      %715 = tpu.memref_slice %arg20[%c2_i32_314, %11] : memref<7x2x!tpu.dma_semaphore, #tpu.memory_space<semaphore_mem>> -> memref<1x1x!tpu.dma_semaphore, #tpu.memory_space<semaphore_mem>>
      %716 = tpu.memref_squeeze %715 : memref<1x1x!tpu.dma_semaphore, #tpu.memory_space<semaphore_mem>> -> memref<!tpu.dma_semaphore, #tpu.memory_space<semaphore_mem>>
      tpu.enqueue_dma source(%712 : memref<24x256xf32, #tpu.memory_space<any>>) target(%714 : memref<24x256xf32, #tpu.memory_space<vmem>>) target_semaphore(%716 : memref<!tpu.dma_semaphore, #tpu.memory_space<semaphore_mem>>)
      %c3_i32_318 = arith.constant 3 : i32
      %c0_i32_319 = arith.constant 0 : i32
      %717 = tpu.memref_slice %arg5[%701, %c0_i32_319] : memref<80x256xf32, #tpu.memory_space<any>> -> memref<24x256xf32, #tpu.memory_space<any>>
      %c0_i32_320 = arith.constant 0 : i32
      %c0_i32_321 = arith.constant 0 : i32
      %718 = tpu.memref_slice %arg16[%11, %c0_i32_320, %c0_i32_321] : memref<2x24x256xf32, #tpu.memory_space<vmem>> -> memref<1x24x256xf32, #tpu.memory_space<vmem>>
      %719 = tpu.memref_squeeze %718 : memref<1x24x256xf32, #tpu.memory_space<vmem>> -> memref<24x256xf32, #tpu.memory_space<vmem>>
      %720 = tpu.memref_slice %arg20[%c3_i32_318, %11] : memref<7x2x!tpu.dma_semaphore, #tpu.memory_space<semaphore_mem>> -> memref<1x1x!tpu.dma_semaphore, #tpu.memory_space<semaphore_mem>>
      %721 = tpu.memref_squeeze %720 : memref<1x1x!tpu.dma_semaphore, #tpu.memory_space<semaphore_mem>> -> memref<!tpu.dma_semaphore, #tpu.memory_space<semaphore_mem>>
      tpu.enqueue_dma source(%717 : memref<24x256xf32, #tpu.memory_space<any>>) target(%719 : memref<24x256xf32, #tpu.memory_space<vmem>>) target_semaphore(%721 : memref<!tpu.dma_semaphore, #tpu.memory_space<semaphore_mem>>)
      %c4_i32_322 = arith.constant 4 : i32
      %c0_i32_323 = arith.constant 0 : i32
      %722 = tpu.memref_slice %arg6[%701, %c0_i32_323] : memref<80x256xf32, #tpu.memory_space<any>> -> memref<24x256xf32, #tpu.memory_space<any>>
      %c0_i32_324 = arith.constant 0 : i32
      %c0_i32_325 = arith.constant 0 : i32
      %723 = tpu.memref_slice %arg17[%11, %c0_i32_324, %c0_i32_325] : memref<2x24x256xf32, #tpu.memory_space<vmem>> -> memref<1x24x256xf32, #tpu.memory_space<vmem>>
      %724 = tpu.memref_squeeze %723 : memref<1x24x256xf32, #tpu.memory_space<vmem>> -> memref<24x256xf32, #tpu.memory_space<vmem>>
      %725 = tpu.memref_slice %arg20[%c4_i32_322, %11] : memref<7x2x!tpu.dma_semaphore, #tpu.memory_space<semaphore_mem>> -> memref<1x1x!tpu.dma_semaphore, #tpu.memory_space<semaphore_mem>>
      %726 = tpu.memref_squeeze %725 : memref<1x1x!tpu.dma_semaphore, #tpu.memory_space<semaphore_mem>> -> memref<!tpu.dma_semaphore, #tpu.memory_space<semaphore_mem>>
      tpu.enqueue_dma source(%722 : memref<24x256xf32, #tpu.memory_space<any>>) target(%724 : memref<24x256xf32, #tpu.memory_space<vmem>>) target_semaphore(%726 : memref<!tpu.dma_semaphore, #tpu.memory_space<semaphore_mem>>)
      %c5_i32_326 = arith.constant 5 : i32
      %c0_i32_327 = arith.constant 0 : i32
      %727 = tpu.memref_slice %arg7[%701, %c0_i32_327] : memref<80x256xf32, #tpu.memory_space<any>> -> memref<24x256xf32, #tpu.memory_space<any>>
      %c0_i32_328 = arith.constant 0 : i32
      %c0_i32_329 = arith.constant 0 : i32
      %728 = tpu.memref_slice %arg18[%11, %c0_i32_328, %c0_i32_329] : memref<2x24x256xf32, #tpu.memory_space<vmem>> -> memref<1x24x256xf32, #tpu.memory_space<vmem>>
      %729 = tpu.memref_squeeze %728 : memref<1x24x256xf32, #tpu.memory_space<vmem>> -> memref<24x256xf32, #tpu.memory_space<vmem>>
      %730 = tpu.memref_slice %arg20[%c5_i32_326, %11] : memref<7x2x!tpu.dma_semaphore, #tpu.memory_space<semaphore_mem>> -> memref<1x1x!tpu.dma_semaphore, #tpu.memory_space<semaphore_mem>>
      %731 = tpu.memref_squeeze %730 : memref<1x1x!tpu.dma_semaphore, #tpu.memory_space<semaphore_mem>> -> memref<!tpu.dma_semaphore, #tpu.memory_space<semaphore_mem>>
      tpu.enqueue_dma source(%727 : memref<24x256xf32, #tpu.memory_space<any>>) target(%729 : memref<24x256xf32, #tpu.memory_space<vmem>>) target_semaphore(%731 : memref<!tpu.dma_semaphore, #tpu.memory_space<semaphore_mem>>)
      %c6_i32_330 = arith.constant 6 : i32
      %c0_i32_331 = arith.constant 0 : i32
      %732 = tpu.memref_slice %arg8[%701, %c0_i32_331] : memref<80x256xf32, #tpu.memory_space<any>> -> memref<24x256xf32, #tpu.memory_space<any>>
      %c0_i32_332 = arith.constant 0 : i32
      %c0_i32_333 = arith.constant 0 : i32
      %733 = tpu.memref_slice %arg19[%11, %c0_i32_332, %c0_i32_333] : memref<2x24x256xf32, #tpu.memory_space<vmem>> -> memref<1x24x256xf32, #tpu.memory_space<vmem>>
      %734 = tpu.memref_squeeze %733 : memref<1x24x256xf32, #tpu.memory_space<vmem>> -> memref<24x256xf32, #tpu.memory_space<vmem>>
      %735 = tpu.memref_slice %arg20[%c6_i32_330, %11] : memref<7x2x!tpu.dma_semaphore, #tpu.memory_space<semaphore_mem>> -> memref<1x1x!tpu.dma_semaphore, #tpu.memory_space<semaphore_mem>>
      %736 = tpu.memref_squeeze %735 : memref<1x1x!tpu.dma_semaphore, #tpu.memory_space<semaphore_mem>> -> memref<!tpu.dma_semaphore, #tpu.memory_space<semaphore_mem>>
      tpu.enqueue_dma source(%732 : memref<24x256xf32, #tpu.memory_space<any>>) target(%734 : memref<24x256xf32, #tpu.memory_space<vmem>>) target_semaphore(%736 : memref<!tpu.dma_semaphore, #tpu.memory_space<semaphore_mem>>)
    } else {
    }
    %c3_i32 = arith.constant 3 : i32
    %15 = arith.cmpi slt, %arg1, %c3_i32 : i32
    %16 = arith.extui %15 : i1 to i32
    %c0_i32_5 = arith.constant 0 : i32
    %17 = arith.cmpi ne, %16, %c0_i32_5 : i32
    scf.if %17 {
      %c1_i32_305 = arith.constant 1 : i32
      %700 = arith.addi %1, %c1_i32_305 : i32
      %c1_i32_306 = arith.constant 1 : i32
      %701 = arith.subi %c1_i32_306, %11 : i32
      %c8_i32_307 = arith.constant 8 : i32
      %702 = arith.muli %700, %c8_i32_307 : i32
      %703 = tpu.assume_multiple %702, 8 : i32
      %c0_i32_308 = arith.constant 0 : i32
      %c0_i32_309 = arith.constant 0 : i32
      %704 = tpu.memref_slice %arg2[%703, %c0_i32_309] : memref<80x256xf32, #tpu.memory_space<any>> -> memref<24x256xf32, #tpu.memory_space<any>>
      %c0_i32_310 = arith.constant 0 : i32
      %c0_i32_311 = arith.constant 0 : i32
      %705 = tpu.memref_slice %arg13[%701, %c0_i32_310, %c0_i32_311] : memref<2x24x256xf32, #tpu.memory_space<vmem>> -> memref<1x24x256xf32, #tpu.memory_space<vmem>>
      %706 = tpu.memref_squeeze %705 : memref<1x24x256xf32, #tpu.memory_space<vmem>> -> memref<24x256xf32, #tpu.memory_space<vmem>>
      %707 = tpu.memref_slice %arg20[%c0_i32_308, %701] : memref<7x2x!tpu.dma_semaphore, #tpu.memory_space<semaphore_mem>> -> memref<1x1x!tpu.dma_semaphore, #tpu.memory_space<semaphore_mem>>
      %708 = tpu.memref_squeeze %707 : memref<1x1x!tpu.dma_semaphore, #tpu.memory_space<semaphore_mem>> -> memref<!tpu.dma_semaphore, #tpu.memory_space<semaphore_mem>>
      tpu.enqueue_dma source(%704 : memref<24x256xf32, #tpu.memory_space<any>>) target(%706 : memref<24x256xf32, #tpu.memory_space<vmem>>) target_semaphore(%708 : memref<!tpu.dma_semaphore, #tpu.memory_space<semaphore_mem>>)
      %c1_i32_312 = arith.constant 1 : i32
      %c0_i32_313 = arith.constant 0 : i32
      %709 = tpu.memref_slice %arg3[%703, %c0_i32_313] : memref<80x256xf32, #tpu.memory_space<any>> -> memref<24x256xf32, #tpu.memory_space<any>>
      %c0_i32_314 = arith.constant 0 : i32
      %c0_i32_315 = arith.constant 0 : i32
      %710 = tpu.memref_slice %arg14[%701, %c0_i32_314, %c0_i32_315] : memref<2x24x256xf32, #tpu.memory_space<vmem>> -> memref<1x24x256xf32, #tpu.memory_space<vmem>>
      %711 = tpu.memref_squeeze %710 : memref<1x24x256xf32, #tpu.memory_space<vmem>> -> memref<24x256xf32, #tpu.memory_space<vmem>>
      %712 = tpu.memref_slice %arg20[%c1_i32_312, %701] : memref<7x2x!tpu.dma_semaphore, #tpu.memory_space<semaphore_mem>> -> memref<1x1x!tpu.dma_semaphore, #tpu.memory_space<semaphore_mem>>
      %713 = tpu.memref_squeeze %712 : memref<1x1x!tpu.dma_semaphore, #tpu.memory_space<semaphore_mem>> -> memref<!tpu.dma_semaphore, #tpu.memory_space<semaphore_mem>>
      tpu.enqueue_dma source(%709 : memref<24x256xf32, #tpu.memory_space<any>>) target(%711 : memref<24x256xf32, #tpu.memory_space<vmem>>) target_semaphore(%713 : memref<!tpu.dma_semaphore, #tpu.memory_space<semaphore_mem>>)
      %c2_i32_316 = arith.constant 2 : i32
      %c0_i32_317 = arith.constant 0 : i32
      %714 = tpu.memref_slice %arg4[%703, %c0_i32_317] : memref<80x256xf32, #tpu.memory_space<any>> -> memref<24x256xf32, #tpu.memory_space<any>>
      %c0_i32_318 = arith.constant 0 : i32
      %c0_i32_319 = arith.constant 0 : i32
      %715 = tpu.memref_slice %arg15[%701, %c0_i32_318, %c0_i32_319] : memref<2x24x256xf32, #tpu.memory_space<vmem>> -> memref<1x24x256xf32, #tpu.memory_space<vmem>>
      %716 = tpu.memref_squeeze %715 : memref<1x24x256xf32, #tpu.memory_space<vmem>> -> memref<24x256xf32, #tpu.memory_space<vmem>>
      %717 = tpu.memref_slice %arg20[%c2_i32_316, %701] : memref<7x2x!tpu.dma_semaphore, #tpu.memory_space<semaphore_mem>> -> memref<1x1x!tpu.dma_semaphore, #tpu.memory_space<semaphore_mem>>
      %718 = tpu.memref_squeeze %717 : memref<1x1x!tpu.dma_semaphore, #tpu.memory_space<semaphore_mem>> -> memref<!tpu.dma_semaphore, #tpu.memory_space<semaphore_mem>>
      tpu.enqueue_dma source(%714 : memref<24x256xf32, #tpu.memory_space<any>>) target(%716 : memref<24x256xf32, #tpu.memory_space<vmem>>) target_semaphore(%718 : memref<!tpu.dma_semaphore, #tpu.memory_space<semaphore_mem>>)
      %c3_i32_320 = arith.constant 3 : i32
      %c0_i32_321 = arith.constant 0 : i32
      %719 = tpu.memref_slice %arg5[%703, %c0_i32_321] : memref<80x256xf32, #tpu.memory_space<any>> -> memref<24x256xf32, #tpu.memory_space<any>>
      %c0_i32_322 = arith.constant 0 : i32
      %c0_i32_323 = arith.constant 0 : i32
      %720 = tpu.memref_slice %arg16[%701, %c0_i32_322, %c0_i32_323] : memref<2x24x256xf32, #tpu.memory_space<vmem>> -> memref<1x24x256xf32, #tpu.memory_space<vmem>>
      %721 = tpu.memref_squeeze %720 : memref<1x24x256xf32, #tpu.memory_space<vmem>> -> memref<24x256xf32, #tpu.memory_space<vmem>>
      %722 = tpu.memref_slice %arg20[%c3_i32_320, %701] : memref<7x2x!tpu.dma_semaphore, #tpu.memory_space<semaphore_mem>> -> memref<1x1x!tpu.dma_semaphore, #tpu.memory_space<semaphore_mem>>
      %723 = tpu.memref_squeeze %722 : memref<1x1x!tpu.dma_semaphore, #tpu.memory_space<semaphore_mem>> -> memref<!tpu.dma_semaphore, #tpu.memory_space<semaphore_mem>>
      tpu.enqueue_dma source(%719 : memref<24x256xf32, #tpu.memory_space<any>>) target(%721 : memref<24x256xf32, #tpu.memory_space<vmem>>) target_semaphore(%723 : memref<!tpu.dma_semaphore, #tpu.memory_space<semaphore_mem>>)
      %c4_i32_324 = arith.constant 4 : i32
      %c0_i32_325 = arith.constant 0 : i32
      %724 = tpu.memref_slice %arg6[%703, %c0_i32_325] : memref<80x256xf32, #tpu.memory_space<any>> -> memref<24x256xf32, #tpu.memory_space<any>>
      %c0_i32_326 = arith.constant 0 : i32
      %c0_i32_327 = arith.constant 0 : i32
      %725 = tpu.memref_slice %arg17[%701, %c0_i32_326, %c0_i32_327] : memref<2x24x256xf32, #tpu.memory_space<vmem>> -> memref<1x24x256xf32, #tpu.memory_space<vmem>>
      %726 = tpu.memref_squeeze %725 : memref<1x24x256xf32, #tpu.memory_space<vmem>> -> memref<24x256xf32, #tpu.memory_space<vmem>>
      %727 = tpu.memref_slice %arg20[%c4_i32_324, %701] : memref<7x2x!tpu.dma_semaphore, #tpu.memory_space<semaphore_mem>> -> memref<1x1x!tpu.dma_semaphore, #tpu.memory_space<semaphore_mem>>
      %728 = tpu.memref_squeeze %727 : memref<1x1x!tpu.dma_semaphore, #tpu.memory_space<semaphore_mem>> -> memref<!tpu.dma_semaphore, #tpu.memory_space<semaphore_mem>>
      tpu.enqueue_dma source(%724 : memref<24x256xf32, #tpu.memory_space<any>>) target(%726 : memref<24x256xf32, #tpu.memory_space<vmem>>) target_semaphore(%728 : memref<!tpu.dma_semaphore, #tpu.memory_space<semaphore_mem>>)
      %c5_i32_328 = arith.constant 5 : i32
      %c0_i32_329 = arith.constant 0 : i32
      %729 = tpu.memref_slice %arg7[%703, %c0_i32_329] : memref<80x256xf32, #tpu.memory_space<any>> -> memref<24x256xf32, #tpu.memory_space<any>>
      %c0_i32_330 = arith.constant 0 : i32
      %c0_i32_331 = arith.constant 0 : i32
      %730 = tpu.memref_slice %arg18[%701, %c0_i32_330, %c0_i32_331] : memref<2x24x256xf32, #tpu.memory_space<vmem>> -> memref<1x24x256xf32, #tpu.memory_space<vmem>>
      %731 = tpu.memref_squeeze %730 : memref<1x24x256xf32, #tpu.memory_space<vmem>> -> memref<24x256xf32, #tpu.memory_space<vmem>>
      %732 = tpu.memref_slice %arg20[%c5_i32_328, %701] : memref<7x2x!tpu.dma_semaphore, #tpu.memory_space<semaphore_mem>> -> memref<1x1x!tpu.dma_semaphore, #tpu.memory_space<semaphore_mem>>
      %733 = tpu.memref_squeeze %732 : memref<1x1x!tpu.dma_semaphore, #tpu.memory_space<semaphore_mem>> -> memref<!tpu.dma_semaphore, #tpu.memory_space<semaphore_mem>>
      tpu.enqueue_dma source(%729 : memref<24x256xf32, #tpu.memory_space<any>>) target(%731 : memref<24x256xf32, #tpu.memory_space<vmem>>) target_semaphore(%733 : memref<!tpu.dma_semaphore, #tpu.memory_space<semaphore_mem>>)
      %c6_i32_332 = arith.constant 6 : i32
      %c0_i32_333 = arith.constant 0 : i32
      %734 = tpu.memref_slice %arg8[%703, %c0_i32_333] : memref<80x256xf32, #tpu.memory_space<any>> -> memref<24x256xf32, #tpu.memory_space<any>>
      %c0_i32_334 = arith.constant 0 : i32
      %c0_i32_335 = arith.constant 0 : i32
      %735 = tpu.memref_slice %arg19[%701, %c0_i32_334, %c0_i32_335] : memref<2x24x256xf32, #tpu.memory_space<vmem>> -> memref<1x24x256xf32, #tpu.memory_space<vmem>>
      %736 = tpu.memref_squeeze %735 : memref<1x24x256xf32, #tpu.memory_space<vmem>> -> memref<24x256xf32, #tpu.memory_space<vmem>>
      %737 = tpu.memref_slice %arg20[%c6_i32_332, %701] : memref<7x2x!tpu.dma_semaphore, #tpu.memory_space<semaphore_mem>> -> memref<1x1x!tpu.dma_semaphore, #tpu.memory_space<semaphore_mem>>
      %738 = tpu.memref_squeeze %737 : memref<1x1x!tpu.dma_semaphore, #tpu.memory_space<semaphore_mem>> -> memref<!tpu.dma_semaphore, #tpu.memory_space<semaphore_mem>>
      tpu.enqueue_dma source(%734 : memref<24x256xf32, #tpu.memory_space<any>>) target(%736 : memref<24x256xf32, #tpu.memory_space<vmem>>) target_semaphore(%738 : memref<!tpu.dma_semaphore, #tpu.memory_space<semaphore_mem>>)
    } else {
    }
    %c0_i32_6 = arith.constant 0 : i32
    %c0_i32_7 = arith.constant 0 : i32
    %c0_i32_8 = arith.constant 0 : i32
    %18 = tpu.memref_slice %arg2[%c0_i32_7, %c0_i32_8] : memref<80x256xf32, #tpu.memory_space<any>> -> memref<24x256xf32, #tpu.memory_space<any>>
    %c0_i32_9 = arith.constant 0 : i32
    %c0_i32_10 = arith.constant 0 : i32
    %19 = tpu.memref_slice %arg13[%11, %c0_i32_9, %c0_i32_10] : memref<2x24x256xf32, #tpu.memory_space<vmem>> -> memref<1x24x256xf32, #tpu.memory_space<vmem>>
    %20 = tpu.memref_squeeze %19 : memref<1x24x256xf32, #tpu.memory_space<vmem>> -> memref<24x256xf32, #tpu.memory_space<vmem>>
    %21 = tpu.memref_slice %arg20[%c0_i32_6, %11] : memref<7x2x!tpu.dma_semaphore, #tpu.memory_space<semaphore_mem>> -> memref<1x1x!tpu.dma_semaphore, #tpu.memory_space<semaphore_mem>>
    %22 = tpu.memref_squeeze %21 : memref<1x1x!tpu.dma_semaphore, #tpu.memory_space<semaphore_mem>> -> memref<!tpu.dma_semaphore, #tpu.memory_space<semaphore_mem>>
    tpu.wait_dma2 semaphore(%22 : memref<!tpu.dma_semaphore, #tpu.memory_space<semaphore_mem>>) src(%18 : memref<24x256xf32, #tpu.memory_space<any>>) dst(%20 : memref<24x256xf32, #tpu.memory_space<vmem>>)
    %c1_i32_11 = arith.constant 1 : i32
    %c0_i32_12 = arith.constant 0 : i32
    %c0_i32_13 = arith.constant 0 : i32
    %23 = tpu.memref_slice %arg3[%c0_i32_12, %c0_i32_13] : memref<80x256xf32, #tpu.memory_space<any>> -> memref<24x256xf32, #tpu.memory_space<any>>
    %c0_i32_14 = arith.constant 0 : i32
    %c0_i32_15 = arith.constant 0 : i32
    %24 = tpu.memref_slice %arg14[%11, %c0_i32_14, %c0_i32_15] : memref<2x24x256xf32, #tpu.memory_space<vmem>> -> memref<1x24x256xf32, #tpu.memory_space<vmem>>
    %25 = tpu.memref_squeeze %24 : memref<1x24x256xf32, #tpu.memory_space<vmem>> -> memref<24x256xf32, #tpu.memory_space<vmem>>
    %26 = tpu.memref_slice %arg20[%c1_i32_11, %11] : memref<7x2x!tpu.dma_semaphore, #tpu.memory_space<semaphore_mem>> -> memref<1x1x!tpu.dma_semaphore, #tpu.memory_space<semaphore_mem>>
    %27 = tpu.memref_squeeze %26 : memref<1x1x!tpu.dma_semaphore, #tpu.memory_space<semaphore_mem>> -> memref<!tpu.dma_semaphore, #tpu.memory_space<semaphore_mem>>
    tpu.wait_dma2 semaphore(%27 : memref<!tpu.dma_semaphore, #tpu.memory_space<semaphore_mem>>) src(%23 : memref<24x256xf32, #tpu.memory_space<any>>) dst(%25 : memref<24x256xf32, #tpu.memory_space<vmem>>)
    %c2_i32_16 = arith.constant 2 : i32
    %c0_i32_17 = arith.constant 0 : i32
    %c0_i32_18 = arith.constant 0 : i32
    %28 = tpu.memref_slice %arg4[%c0_i32_17, %c0_i32_18] : memref<80x256xf32, #tpu.memory_space<any>> -> memref<24x256xf32, #tpu.memory_space<any>>
    %c0_i32_19 = arith.constant 0 : i32
    %c0_i32_20 = arith.constant 0 : i32
    %29 = tpu.memref_slice %arg15[%11, %c0_i32_19, %c0_i32_20] : memref<2x24x256xf32, #tpu.memory_space<vmem>> -> memref<1x24x256xf32, #tpu.memory_space<vmem>>
    %30 = tpu.memref_squeeze %29 : memref<1x24x256xf32, #tpu.memory_space<vmem>> -> memref<24x256xf32, #tpu.memory_space<vmem>>
    %31 = tpu.memref_slice %arg20[%c2_i32_16, %11] : memref<7x2x!tpu.dma_semaphore, #tpu.memory_space<semaphore_mem>> -> memref<1x1x!tpu.dma_semaphore, #tpu.memory_space<semaphore_mem>>
    %32 = tpu.memref_squeeze %31 : memref<1x1x!tpu.dma_semaphore, #tpu.memory_space<semaphore_mem>> -> memref<!tpu.dma_semaphore, #tpu.memory_space<semaphore_mem>>
    tpu.wait_dma2 semaphore(%32 : memref<!tpu.dma_semaphore, #tpu.memory_space<semaphore_mem>>) src(%28 : memref<24x256xf32, #tpu.memory_space<any>>) dst(%30 : memref<24x256xf32, #tpu.memory_space<vmem>>)
    %c3_i32_21 = arith.constant 3 : i32
    %c0_i32_22 = arith.constant 0 : i32
    %c0_i32_23 = arith.constant 0 : i32
    %33 = tpu.memref_slice %arg5[%c0_i32_22, %c0_i32_23] : memref<80x256xf32, #tpu.memory_space<any>> -> memref<24x256xf32, #tpu.memory_space<any>>
    %c0_i32_24 = arith.constant 0 : i32
    %c0_i32_25 = arith.constant 0 : i32
    %34 = tpu.memref_slice %arg16[%11, %c0_i32_24, %c0_i32_25] : memref<2x24x256xf32, #tpu.memory_space<vmem>> -> memref<1x24x256xf32, #tpu.memory_space<vmem>>
    %35 = tpu.memref_squeeze %34 : memref<1x24x256xf32, #tpu.memory_space<vmem>> -> memref<24x256xf32, #tpu.memory_space<vmem>>
    %36 = tpu.memref_slice %arg20[%c3_i32_21, %11] : memref<7x2x!tpu.dma_semaphore, #tpu.memory_space<semaphore_mem>> -> memref<1x1x!tpu.dma_semaphore, #tpu.memory_space<semaphore_mem>>
    %37 = tpu.memref_squeeze %36 : memref<1x1x!tpu.dma_semaphore, #tpu.memory_space<semaphore_mem>> -> memref<!tpu.dma_semaphore, #tpu.memory_space<semaphore_mem>>
    tpu.wait_dma2 semaphore(%37 : memref<!tpu.dma_semaphore, #tpu.memory_space<semaphore_mem>>) src(%33 : memref<24x256xf32, #tpu.memory_space<any>>) dst(%35 : memref<24x256xf32, #tpu.memory_space<vmem>>)
    %c4_i32_26 = arith.constant 4 : i32
    %c0_i32_27 = arith.constant 0 : i32
    %c0_i32_28 = arith.constant 0 : i32
    %38 = tpu.memref_slice %arg6[%c0_i32_27, %c0_i32_28] : memref<80x256xf32, #tpu.memory_space<any>> -> memref<24x256xf32, #tpu.memory_space<any>>
    %c0_i32_29 = arith.constant 0 : i32
    %c0_i32_30 = arith.constant 0 : i32
    %39 = tpu.memref_slice %arg17[%11, %c0_i32_29, %c0_i32_30] : memref<2x24x256xf32, #tpu.memory_space<vmem>> -> memref<1x24x256xf32, #tpu.memory_space<vmem>>
    %40 = tpu.memref_squeeze %39 : memref<1x24x256xf32, #tpu.memory_space<vmem>> -> memref<24x256xf32, #tpu.memory_space<vmem>>
    %41 = tpu.memref_slice %arg20[%c4_i32_26, %11] : memref<7x2x!tpu.dma_semaphore, #tpu.memory_space<semaphore_mem>> -> memref<1x1x!tpu.dma_semaphore, #tpu.memory_space<semaphore_mem>>
    %42 = tpu.memref_squeeze %41 : memref<1x1x!tpu.dma_semaphore, #tpu.memory_space<semaphore_mem>> -> memref<!tpu.dma_semaphore, #tpu.memory_space<semaphore_mem>>
    tpu.wait_dma2 semaphore(%42 : memref<!tpu.dma_semaphore, #tpu.memory_space<semaphore_mem>>) src(%38 : memref<24x256xf32, #tpu.memory_space<any>>) dst(%40 : memref<24x256xf32, #tpu.memory_space<vmem>>)
    %c5_i32 = arith.constant 5 : i32
    %c0_i32_31 = arith.constant 0 : i32
    %c0_i32_32 = arith.constant 0 : i32
    %43 = tpu.memref_slice %arg7[%c0_i32_31, %c0_i32_32] : memref<80x256xf32, #tpu.memory_space<any>> -> memref<24x256xf32, #tpu.memory_space<any>>
    %c0_i32_33 = arith.constant 0 : i32
    %c0_i32_34 = arith.constant 0 : i32
    %44 = tpu.memref_slice %arg18[%11, %c0_i32_33, %c0_i32_34] : memref<2x24x256xf32, #tpu.memory_space<vmem>> -> memref<1x24x256xf32, #tpu.memory_space<vmem>>
    %45 = tpu.memref_squeeze %44 : memref<1x24x256xf32, #tpu.memory_space<vmem>> -> memref<24x256xf32, #tpu.memory_space<vmem>>
    %46 = tpu.memref_slice %arg20[%c5_i32, %11] : memref<7x2x!tpu.dma_semaphore, #tpu.memory_space<semaphore_mem>> -> memref<1x1x!tpu.dma_semaphore, #tpu.memory_space<semaphore_mem>>
    %47 = tpu.memref_squeeze %46 : memref<1x1x!tpu.dma_semaphore, #tpu.memory_space<semaphore_mem>> -> memref<!tpu.dma_semaphore, #tpu.memory_space<semaphore_mem>>
    tpu.wait_dma2 semaphore(%47 : memref<!tpu.dma_semaphore, #tpu.memory_space<semaphore_mem>>) src(%43 : memref<24x256xf32, #tpu.memory_space<any>>) dst(%45 : memref<24x256xf32, #tpu.memory_space<vmem>>)
    %c6_i32 = arith.constant 6 : i32
    %c0_i32_35 = arith.constant 0 : i32
    %c0_i32_36 = arith.constant 0 : i32
    %48 = tpu.memref_slice %arg8[%c0_i32_35, %c0_i32_36] : memref<80x256xf32, #tpu.memory_space<any>> -> memref<24x256xf32, #tpu.memory_space<any>>
    %c0_i32_37 = arith.constant 0 : i32
    %c0_i32_38 = arith.constant 0 : i32
    %49 = tpu.memref_slice %arg19[%11, %c0_i32_37, %c0_i32_38] : memref<2x24x256xf32, #tpu.memory_space<vmem>> -> memref<1x24x256xf32, #tpu.memory_space<vmem>>
    %50 = tpu.memref_squeeze %49 : memref<1x24x256xf32, #tpu.memory_space<vmem>> -> memref<24x256xf32, #tpu.memory_space<vmem>>
    %51 = tpu.memref_slice %arg20[%c6_i32, %11] : memref<7x2x!tpu.dma_semaphore, #tpu.memory_space<semaphore_mem>> -> memref<1x1x!tpu.dma_semaphore, #tpu.memory_space<semaphore_mem>>
    %52 = tpu.memref_squeeze %51 : memref<1x1x!tpu.dma_semaphore, #tpu.memory_space<semaphore_mem>> -> memref<!tpu.dma_semaphore, #tpu.memory_space<semaphore_mem>>
    tpu.wait_dma2 semaphore(%52 : memref<!tpu.dma_semaphore, #tpu.memory_space<semaphore_mem>>) src(%48 : memref<24x256xf32, #tpu.memory_space<any>>) dst(%50 : memref<24x256xf32, #tpu.memory_space<vmem>>)
    %53 = arith.index_cast %11 : i32 to index
    %c0 = arith.constant 0 : index
    %c0_39 = arith.constant 0 : index
    %54 = vector.load %arg13[%53, %c0, %c0_39] : memref<2x24x256xf32, #tpu.memory_space<vmem>>, vector<1x24x256xf32>
    %55 = vector.shape_cast %54 : vector<1x24x256xf32> to vector<24x256xf32>
    %56 = arith.index_cast %11 : i32 to index
    %c0_40 = arith.constant 0 : index
    %c0_41 = arith.constant 0 : index
    %57 = vector.load %arg14[%56, %c0_40, %c0_41] : memref<2x24x256xf32, #tpu.memory_space<vmem>>, vector<1x24x256xf32>
    %58 = vector.shape_cast %57 : vector<1x24x256xf32> to vector<24x256xf32>
    %59 = arith.index_cast %11 : i32 to index
    %c0_42 = arith.constant 0 : index
    %c0_43 = arith.constant 0 : index
    %60 = vector.load %arg15[%59, %c0_42, %c0_43] : memref<2x24x256xf32, #tpu.memory_space<vmem>>, vector<1x24x256xf32>
    %61 = vector.shape_cast %60 : vector<1x24x256xf32> to vector<24x256xf32>
    %62 = arith.index_cast %11 : i32 to index
    %c0_44 = arith.constant 0 : index
    %c0_45 = arith.constant 0 : index
    %63 = vector.load %arg16[%62, %c0_44, %c0_45] : memref<2x24x256xf32, #tpu.memory_space<vmem>>, vector<1x24x256xf32>
    %64 = vector.shape_cast %63 : vector<1x24x256xf32> to vector<24x256xf32>
    %65 = arith.index_cast %11 : i32 to index
    %c0_46 = arith.constant 0 : index
    %c0_47 = arith.constant 0 : index
    %66 = vector.load %arg17[%65, %c0_46, %c0_47] : memref<2x24x256xf32, #tpu.memory_space<vmem>>, vector<1x24x256xf32>
    %67 = vector.shape_cast %66 : vector<1x24x256xf32> to vector<24x256xf32>
    %68 = arith.index_cast %11 : i32 to index
    %c0_48 = arith.constant 0 : index
    %c0_49 = arith.constant 0 : index
    %69 = vector.load %arg18[%68, %c0_48, %c0_49] : memref<2x24x256xf32, #tpu.memory_space<vmem>>, vector<1x24x256xf32>
    %70 = vector.shape_cast %69 : vector<1x24x256xf32> to vector<24x256xf32>
    %71 = arith.index_cast %11 : i32 to index
    %c0_50 = arith.constant 0 : index
    %c0_51 = arith.constant 0 : index
    %72 = vector.load %arg19[%71, %c0_50, %c0_51] : memref<2x24x256xf32, #tpu.memory_space<vmem>>, vector<1x24x256xf32>
    %73 = vector.shape_cast %72 : vector<1x24x256xf32> to vector<24x256xf32>
    %74 = tpu.iota {dimensions = array<i32: 0>} : vector<24x256xi32>
    %75 = tpu.iota {dimensions = array<i32: 1>} : vector<24x256xi32>
    %c8_i32 = arith.constant 8 : i32
    %76 = arith.muli %1, %c8_i32 : i32
    %c8_i32_52 = arith.constant 8 : i32
    %77 = arith.subi %76, %c8_i32_52 : i32
    %78 = vector.broadcast %77 : i32 to vector<24x256xi32>
    %79 = arith.addi %74, %78 : vector<24x256xi32>
    %c0_i32_53 = arith.constant 0 : i32
    %80 = vector.broadcast %c0_i32_53 : i32 to vector<24x256xi32>
    %81 = arith.cmpi eq, %79, %80 : vector<24x256xi32>
    %c63_i32 = arith.constant 63 : i32
    %82 = vector.broadcast %c63_i32 : i32 to vector<24x256xi32>
    %83 = arith.cmpi eq, %79, %82 : vector<24x256xi32>
    %c0_i32_54 = arith.constant 0 : i32
    %84 = vector.broadcast %c0_i32_54 : i32 to vector<24x256xi32>
    %85 = arith.cmpi eq, %75, %84 : vector<24x256xi32>
    %c255_i32 = arith.constant 255 : i32
    %86 = vector.broadcast %c255_i32 : i32 to vector<24x256xi32>
    %87 = arith.cmpi eq, %75, %86 : vector<24x256xi32>
    %c1_i32_55 = arith.constant 1 : i32
    %88 = tpu.dynamic_rotate %55 by %c1_i32_55 dim 1 : vector<24x256xf32>, i32 -> vector<24x256xf32>
    %c255_i32_56 = arith.constant 255 : i32
    %89 = tpu.dynamic_rotate %55 by %c255_i32_56 dim 1 : vector<24x256xf32>, i32 -> vector<24x256xf32>
    %cst = arith.constant 0.000000e+00 : f32
    %90 = vector.broadcast %cst : f32 to vector<24x256xf32>
    %91 = arith.select %85, %90, %88 : vector<24x256xi1>, vector<24x256xf32>
    %cst_57 = arith.constant 0.000000e+00 : f32
    %92 = vector.broadcast %cst_57 : f32 to vector<24x256xf32>
    %93 = arith.select %87, %92, %89 : vector<24x256xi1>, vector<24x256xf32>
    %94 = arith.addf %91, %55 : vector<24x256xf32>
    %95 = arith.addf %94, %93 : vector<24x256xf32>
    %96 = arith.subf %91, %93 : vector<24x256xf32>
    %97 = arith.addf %91, %93 : vector<24x256xf32>
    %cst_58 = arith.constant 0.0833333358 : f32
    %98 = vector.broadcast %cst_58 : f32 to vector<24x256xf32>
    %99 = arith.mulf %98, %97 : vector<24x256xf32>
    %cst_59 = arith.constant 0.333333343 : f32
    %100 = vector.broadcast %cst_59 : f32 to vector<24x256xf32>
    %101 = arith.mulf %100, %55 : vector<24x256xf32>
    %102 = arith.addf %99, %101 : vector<24x256xf32>
    %c1_i32_60 = arith.constant 1 : i32
    %103 = tpu.dynamic_rotate %95 by %c1_i32_60 dim 0 : vector<24x256xf32>, i32 -> vector<24x256xf32>
    %c23_i32 = arith.constant 23 : i32
    %104 = tpu.dynamic_rotate %95 by %c23_i32 dim 0 : vector<24x256xf32>, i32 -> vector<24x256xf32>
    %105 = arith.select %81, %95, %103 : vector<24x256xi1>, vector<24x256xf32>
    %106 = arith.select %83, %95, %104 : vector<24x256xi1>, vector<24x256xf32>
    %c1_i32_61 = arith.constant 1 : i32
    %107 = tpu.dynamic_rotate %96 by %c1_i32_61 dim 0 : vector<24x256xf32>, i32 -> vector<24x256xf32>
    %c23_i32_62 = arith.constant 23 : i32
    %108 = tpu.dynamic_rotate %96 by %c23_i32_62 dim 0 : vector<24x256xf32>, i32 -> vector<24x256xf32>
    %109 = arith.select %81, %96, %107 : vector<24x256xi1>, vector<24x256xf32>
    %110 = arith.select %83, %96, %108 : vector<24x256xi1>, vector<24x256xf32>
    %c1_i32_63 = arith.constant 1 : i32
    %111 = tpu.dynamic_rotate %102 by %c1_i32_63 dim 0 : vector<24x256xf32>, i32 -> vector<24x256xf32>
    %c23_i32_64 = arith.constant 23 : i32
    %112 = tpu.dynamic_rotate %102 by %c23_i32_64 dim 0 : vector<24x256xf32>, i32 -> vector<24x256xf32>
    %113 = arith.select %81, %102, %111 : vector<24x256xi1>, vector<24x256xf32>
    %114 = arith.select %83, %102, %112 : vector<24x256xi1>, vector<24x256xf32>
    %115 = arith.addf %105, %95 : vector<24x256xf32>
    %116 = arith.addf %115, %106 : vector<24x256xf32>
    %cst_65 = arith.constant 0.333333343 : f32
    %117 = vector.broadcast %cst_65 : f32 to vector<24x256xf32>
    %118 = arith.mulf %117, %116 : vector<24x256xf32>
    %cst_66 = arith.constant 3.000000e+00 : f32
    %119 = vector.broadcast %cst_66 : f32 to vector<24x256xf32>
    %120 = arith.mulf %119, %55 : vector<24x256xf32>
    %121 = arith.subf %118, %120 : vector<24x256xf32>
    %122 = arith.addf %109, %110 : vector<24x256xf32>
    %cst_67 = arith.constant 0.0833333358 : f32
    %123 = vector.broadcast %cst_67 : f32 to vector<24x256xf32>
    %124 = arith.mulf %123, %122 : vector<24x256xf32>
    %cst_68 = arith.constant 0.333333343 : f32
    %125 = vector.broadcast %cst_68 : f32 to vector<24x256xf32>
    %126 = arith.mulf %125, %96 : vector<24x256xf32>
    %127 = arith.addf %124, %126 : vector<24x256xf32>
    %128 = arith.subf %114, %113 : vector<24x256xf32>
    %c1_i32_69 = arith.constant 1 : i32
    %129 = tpu.dynamic_rotate %58 by %c1_i32_69 dim 1 : vector<24x256xf32>, i32 -> vector<24x256xf32>
    %c255_i32_70 = arith.constant 255 : i32
    %130 = tpu.dynamic_rotate %58 by %c255_i32_70 dim 1 : vector<24x256xf32>, i32 -> vector<24x256xf32>
    %131 = arith.select %85, %58, %129 : vector<24x256xi1>, vector<24x256xf32>
    %132 = arith.select %87, %58, %130 : vector<24x256xi1>, vector<24x256xf32>
    %133 = arith.addf %131, %58 : vector<24x256xf32>
    %134 = arith.addf %133, %132 : vector<24x256xf32>
    %135 = arith.subf %131, %132 : vector<24x256xf32>
    %136 = arith.addf %131, %132 : vector<24x256xf32>
    %cst_71 = arith.constant 0.0833333358 : f32
    %137 = vector.broadcast %cst_71 : f32 to vector<24x256xf32>
    %138 = arith.mulf %137, %136 : vector<24x256xf32>
    %cst_72 = arith.constant 0.333333343 : f32
    %139 = vector.broadcast %cst_72 : f32 to vector<24x256xf32>
    %140 = arith.mulf %139, %58 : vector<24x256xf32>
    %141 = arith.addf %138, %140 : vector<24x256xf32>
    %c1_i32_73 = arith.constant 1 : i32
    %142 = tpu.dynamic_rotate %134 by %c1_i32_73 dim 0 : vector<24x256xf32>, i32 -> vector<24x256xf32>
    %c23_i32_74 = arith.constant 23 : i32
    %143 = tpu.dynamic_rotate %134 by %c23_i32_74 dim 0 : vector<24x256xf32>, i32 -> vector<24x256xf32>
    %cst_75 = arith.constant 0.000000e+00 : f32
    %144 = vector.broadcast %cst_75 : f32 to vector<24x256xf32>
    %145 = arith.select %81, %144, %142 : vector<24x256xi1>, vector<24x256xf32>
    %cst_76 = arith.constant 0.000000e+00 : f32
    %146 = vector.broadcast %cst_76 : f32 to vector<24x256xf32>
    %147 = arith.select %83, %146, %143 : vector<24x256xi1>, vector<24x256xf32>
    %c1_i32_77 = arith.constant 1 : i32
    %148 = tpu.dynamic_rotate %135 by %c1_i32_77 dim 0 : vector<24x256xf32>, i32 -> vector<24x256xf32>
    %c23_i32_78 = arith.constant 23 : i32
    %149 = tpu.dynamic_rotate %135 by %c23_i32_78 dim 0 : vector<24x256xf32>, i32 -> vector<24x256xf32>
    %cst_79 = arith.constant 0.000000e+00 : f32
    %150 = vector.broadcast %cst_79 : f32 to vector<24x256xf32>
    %151 = arith.select %81, %150, %148 : vector<24x256xi1>, vector<24x256xf32>
    %cst_80 = arith.constant 0.000000e+00 : f32
    %152 = vector.broadcast %cst_80 : f32 to vector<24x256xf32>
    %153 = arith.select %83, %152, %149 : vector<24x256xi1>, vector<24x256xf32>
    %c1_i32_81 = arith.constant 1 : i32
    %154 = tpu.dynamic_rotate %141 by %c1_i32_81 dim 0 : vector<24x256xf32>, i32 -> vector<24x256xf32>
    %c23_i32_82 = arith.constant 23 : i32
    %155 = tpu.dynamic_rotate %141 by %c23_i32_82 dim 0 : vector<24x256xf32>, i32 -> vector<24x256xf32>
    %cst_83 = arith.constant 0.000000e+00 : f32
    %156 = vector.broadcast %cst_83 : f32 to vector<24x256xf32>
    %157 = arith.select %81, %156, %154 : vector<24x256xi1>, vector<24x256xf32>
    %cst_84 = arith.constant 0.000000e+00 : f32
    %158 = vector.broadcast %cst_84 : f32 to vector<24x256xf32>
    %159 = arith.select %83, %158, %155 : vector<24x256xi1>, vector<24x256xf32>
    %160 = arith.addf %145, %134 : vector<24x256xf32>
    %161 = arith.addf %160, %147 : vector<24x256xf32>
    %cst_85 = arith.constant 0.333333343 : f32
    %162 = vector.broadcast %cst_85 : f32 to vector<24x256xf32>
    %163 = arith.mulf %162, %161 : vector<24x256xf32>
    %cst_86 = arith.constant 3.000000e+00 : f32
    %164 = vector.broadcast %cst_86 : f32 to vector<24x256xf32>
    %165 = arith.mulf %164, %58 : vector<24x256xf32>
    %166 = arith.subf %163, %165 : vector<24x256xf32>
    %167 = arith.addf %151, %153 : vector<24x256xf32>
    %cst_87 = arith.constant 0.0833333358 : f32
    %168 = vector.broadcast %cst_87 : f32 to vector<24x256xf32>
    %169 = arith.mulf %168, %167 : vector<24x256xf32>
    %cst_88 = arith.constant 0.333333343 : f32
    %170 = vector.broadcast %cst_88 : f32 to vector<24x256xf32>
    %171 = arith.mulf %170, %135 : vector<24x256xf32>
    %172 = arith.addf %169, %171 : vector<24x256xf32>
    %173 = arith.subf %159, %157 : vector<24x256xf32>
    %174 = math.absf %55 : vector<24x256xf32>
    %175 = math.absf %58 : vector<24x256xf32>
    %176 = arith.addf %174, %175 : vector<24x256xf32>
    %cst_89 = arith.constant 5.000000e-01 : f32
    %177 = vector.broadcast %cst_89 : f32 to vector<24x256xf32>
    %178 = arith.mulf %177, %176 : vector<24x256xf32>
    %179 = arith.mulf %178, %121 : vector<24x256xf32>
    %180 = math.absf %179 : vector<24x256xf32>
    %cst_90 = arith.constant 2.500000e-01 : f32
    %181 = vector.broadcast %cst_90 : f32 to vector<24x256xf32>
    %182 = arith.mulf %181, %180 : vector<24x256xf32>
    %183 = math.absf %127 : vector<24x256xf32>
    %184 = math.absf %128 : vector<24x256xf32>
    %185 = arith.addf %183, %184 : vector<24x256xf32>
    %cst_91 = arith.constant 5.000000e-01 : f32
    %186 = vector.broadcast %cst_91 : f32 to vector<24x256xf32>
    %187 = arith.mulf %186, %185 : vector<24x256xf32>
    %cst_92 = arith.constant 1.000000e-03 : f32
    %188 = vector.broadcast %cst_92 : f32 to vector<24x256xf32>
    %189 = arith.addf %188, %187 : vector<24x256xf32>
    %190 = tpu.reciprocal %189 {approx = true} : vector<24x256xf32> -> vector<24x256xf32>
    %191 = arith.mulf %182, %190 : vector<24x256xf32>
    %192 = arith.mulf %178, %166 : vector<24x256xf32>
    %193 = math.absf %192 : vector<24x256xf32>
    %cst_93 = arith.constant 2.500000e-01 : f32
    %194 = vector.broadcast %cst_93 : f32 to vector<24x256xf32>
    %195 = arith.mulf %194, %193 : vector<24x256xf32>
    %196 = math.absf %172 : vector<24x256xf32>
    %197 = math.absf %173 : vector<24x256xf32>
    %198 = arith.addf %196, %197 : vector<24x256xf32>
    %cst_94 = arith.constant 5.000000e-01 : f32
    %199 = vector.broadcast %cst_94 : f32 to vector<24x256xf32>
    %200 = arith.mulf %199, %198 : vector<24x256xf32>
    %cst_95 = arith.constant 1.000000e-03 : f32
    %201 = vector.broadcast %cst_95 : f32 to vector<24x256xf32>
    %202 = arith.addf %201, %200 : vector<24x256xf32>
    %203 = tpu.reciprocal %202 {approx = true} : vector<24x256xf32> -> vector<24x256xf32>
    %204 = arith.mulf %195, %203 : vector<24x256xf32>
    %cst_96 = arith.constant 0.00999999977 : f32
    %205 = vector.broadcast %cst_96 : f32 to vector<24x256xf32>
    %206 = arith.minimumf %191, %205 : vector<24x256xf32>
    %cst_97 = arith.constant 0.00999999977 : f32
    %207 = vector.broadcast %cst_97 : f32 to vector<24x256xf32>
    %208 = arith.minimumf %204, %207 : vector<24x256xf32>
    %209 = arith.mulf %191, %121 : vector<24x256xf32>
    %210 = arith.mulf %55, %206 : vector<24x256xf32>
    %c1_i32_98 = arith.constant 1 : i32
    %211 = tpu.dynamic_rotate %210 by %c1_i32_98 dim 1 : vector<24x256xf32>, i32 -> vector<24x256xf32>
    %c255_i32_99 = arith.constant 255 : i32
    %212 = tpu.dynamic_rotate %210 by %c255_i32_99 dim 1 : vector<24x256xf32>, i32 -> vector<24x256xf32>
    %cst_100 = arith.constant 0.000000e+00 : f32
    %213 = vector.broadcast %cst_100 : f32 to vector<24x256xf32>
    %214 = arith.select %85, %213, %211 : vector<24x256xi1>, vector<24x256xf32>
    %cst_101 = arith.constant 0.000000e+00 : f32
    %215 = vector.broadcast %cst_101 : f32 to vector<24x256xf32>
    %216 = arith.select %87, %215, %212 : vector<24x256xi1>, vector<24x256xf32>
    %217 = arith.addf %214, %210 : vector<24x256xf32>
    %218 = arith.addf %217, %216 : vector<24x256xf32>
    %c1_i32_102 = arith.constant 1 : i32
    %219 = tpu.dynamic_rotate %218 by %c1_i32_102 dim 0 : vector<24x256xf32>, i32 -> vector<24x256xf32>
    %c23_i32_103 = arith.constant 23 : i32
    %220 = tpu.dynamic_rotate %218 by %c23_i32_103 dim 0 : vector<24x256xf32>, i32 -> vector<24x256xf32>
    %cst_104 = arith.constant 0.000000e+00 : f32
    %221 = vector.broadcast %cst_104 : f32 to vector<24x256xf32>
    %222 = arith.select %81, %221, %219 : vector<24x256xi1>, vector<24x256xf32>
    %cst_105 = arith.constant 0.000000e+00 : f32
    %223 = vector.broadcast %cst_105 : f32 to vector<24x256xf32>
    %224 = arith.select %83, %223, %220 : vector<24x256xi1>, vector<24x256xf32>
    %225 = arith.addf %222, %218 : vector<24x256xf32>
    %226 = arith.addf %225, %224 : vector<24x256xf32>
    %cst_106 = arith.constant 0.333333343 : f32
    %227 = vector.broadcast %cst_106 : f32 to vector<24x256xf32>
    %228 = arith.mulf %227, %226 : vector<24x256xf32>
    %cst_107 = arith.constant 3.000000e+00 : f32
    %229 = vector.broadcast %cst_107 : f32 to vector<24x256xf32>
    %230 = arith.mulf %229, %210 : vector<24x256xf32>
    %231 = arith.subf %228, %230 : vector<24x256xf32>
    %232 = arith.addf %209, %231 : vector<24x256xf32>
    %c1_i32_108 = arith.constant 1 : i32
    %233 = tpu.dynamic_rotate %206 by %c1_i32_108 dim 1 : vector<24x256xf32>, i32 -> vector<24x256xf32>
    %c255_i32_109 = arith.constant 255 : i32
    %234 = tpu.dynamic_rotate %206 by %c255_i32_109 dim 1 : vector<24x256xf32>, i32 -> vector<24x256xf32>
    %cst_110 = arith.constant 0.000000e+00 : f32
    %235 = vector.broadcast %cst_110 : f32 to vector<24x256xf32>
    %236 = arith.select %85, %235, %233 : vector<24x256xi1>, vector<24x256xf32>
    %cst_111 = arith.constant 0.000000e+00 : f32
    %237 = vector.broadcast %cst_111 : f32 to vector<24x256xf32>
    %238 = arith.select %87, %237, %234 : vector<24x256xi1>, vector<24x256xf32>
    %239 = arith.addf %236, %206 : vector<24x256xf32>
    %240 = arith.addf %239, %238 : vector<24x256xf32>
    %c1_i32_112 = arith.constant 1 : i32
    %241 = tpu.dynamic_rotate %240 by %c1_i32_112 dim 0 : vector<24x256xf32>, i32 -> vector<24x256xf32>
    %c23_i32_113 = arith.constant 23 : i32
    %242 = tpu.dynamic_rotate %240 by %c23_i32_113 dim 0 : vector<24x256xf32>, i32 -> vector<24x256xf32>
    %cst_114 = arith.constant 0.000000e+00 : f32
    %243 = vector.broadcast %cst_114 : f32 to vector<24x256xf32>
    %244 = arith.select %81, %243, %241 : vector<24x256xi1>, vector<24x256xf32>
    %cst_115 = arith.constant 0.000000e+00 : f32
    %245 = vector.broadcast %cst_115 : f32 to vector<24x256xf32>
    %246 = arith.select %83, %245, %242 : vector<24x256xi1>, vector<24x256xf32>
    %247 = arith.addf %244, %240 : vector<24x256xf32>
    %248 = arith.addf %247, %246 : vector<24x256xf32>
    %cst_116 = arith.constant 0.333333343 : f32
    %249 = vector.broadcast %cst_116 : f32 to vector<24x256xf32>
    %250 = arith.mulf %249, %248 : vector<24x256xf32>
    %cst_117 = arith.constant 3.000000e+00 : f32
    %251 = vector.broadcast %cst_117 : f32 to vector<24x256xf32>
    %252 = arith.mulf %251, %206 : vector<24x256xf32>
    %253 = arith.subf %250, %252 : vector<24x256xf32>
    %254 = arith.mulf %55, %253 : vector<24x256xf32>
    %255 = arith.subf %232, %254 : vector<24x256xf32>
    %cst_118 = arith.constant 5.000000e-01 : f32
    %256 = vector.broadcast %cst_118 : f32 to vector<24x256xf32>
    %257 = arith.mulf %256, %255 : vector<24x256xf32>
    %258 = arith.mulf %204, %166 : vector<24x256xf32>
    %259 = arith.mulf %58, %208 : vector<24x256xf32>
    %c1_i32_119 = arith.constant 1 : i32
    %260 = tpu.dynamic_rotate %259 by %c1_i32_119 dim 1 : vector<24x256xf32>, i32 -> vector<24x256xf32>
    %c255_i32_120 = arith.constant 255 : i32
    %261 = tpu.dynamic_rotate %259 by %c255_i32_120 dim 1 : vector<24x256xf32>, i32 -> vector<24x256xf32>
    %cst_121 = arith.constant 0.000000e+00 : f32
    %262 = vector.broadcast %cst_121 : f32 to vector<24x256xf32>
    %263 = arith.select %85, %262, %260 : vector<24x256xi1>, vector<24x256xf32>
    %cst_122 = arith.constant 0.000000e+00 : f32
    %264 = vector.broadcast %cst_122 : f32 to vector<24x256xf32>
    %265 = arith.select %87, %264, %261 : vector<24x256xi1>, vector<24x256xf32>
    %266 = arith.addf %263, %259 : vector<24x256xf32>
    %267 = arith.addf %266, %265 : vector<24x256xf32>
    %c1_i32_123 = arith.constant 1 : i32
    %268 = tpu.dynamic_rotate %267 by %c1_i32_123 dim 0 : vector<24x256xf32>, i32 -> vector<24x256xf32>
    %c23_i32_124 = arith.constant 23 : i32
    %269 = tpu.dynamic_rotate %267 by %c23_i32_124 dim 0 : vector<24x256xf32>, i32 -> vector<24x256xf32>
    %cst_125 = arith.constant 0.000000e+00 : f32
    %270 = vector.broadcast %cst_125 : f32 to vector<24x256xf32>
    %271 = arith.select %81, %270, %268 : vector<24x256xi1>, vector<24x256xf32>
    %cst_126 = arith.constant 0.000000e+00 : f32
    %272 = vector.broadcast %cst_126 : f32 to vector<24x256xf32>
    %273 = arith.select %83, %272, %269 : vector<24x256xi1>, vector<24x256xf32>
    %274 = arith.addf %271, %267 : vector<24x256xf32>
    %275 = arith.addf %274, %273 : vector<24x256xf32>
    %cst_127 = arith.constant 0.333333343 : f32
    %276 = vector.broadcast %cst_127 : f32 to vector<24x256xf32>
    %277 = arith.mulf %276, %275 : vector<24x256xf32>
    %cst_128 = arith.constant 3.000000e+00 : f32
    %278 = vector.broadcast %cst_128 : f32 to vector<24x256xf32>
    %279 = arith.mulf %278, %259 : vector<24x256xf32>
    %280 = arith.subf %277, %279 : vector<24x256xf32>
    %281 = arith.addf %258, %280 : vector<24x256xf32>
    %c1_i32_129 = arith.constant 1 : i32
    %282 = tpu.dynamic_rotate %208 by %c1_i32_129 dim 1 : vector<24x256xf32>, i32 -> vector<24x256xf32>
    %c255_i32_130 = arith.constant 255 : i32
    %283 = tpu.dynamic_rotate %208 by %c255_i32_130 dim 1 : vector<24x256xf32>, i32 -> vector<24x256xf32>
    %cst_131 = arith.constant 0.000000e+00 : f32
    %284 = vector.broadcast %cst_131 : f32 to vector<24x256xf32>
    %285 = arith.select %85, %284, %282 : vector<24x256xi1>, vector<24x256xf32>
    %cst_132 = arith.constant 0.000000e+00 : f32
    %286 = vector.broadcast %cst_132 : f32 to vector<24x256xf32>
    %287 = arith.select %87, %286, %283 : vector<24x256xi1>, vector<24x256xf32>
    %288 = arith.addf %285, %208 : vector<24x256xf32>
    %289 = arith.addf %288, %287 : vector<24x256xf32>
    %c1_i32_133 = arith.constant 1 : i32
    %290 = tpu.dynamic_rotate %289 by %c1_i32_133 dim 0 : vector<24x256xf32>, i32 -> vector<24x256xf32>
    %c23_i32_134 = arith.constant 23 : i32
    %291 = tpu.dynamic_rotate %289 by %c23_i32_134 dim 0 : vector<24x256xf32>, i32 -> vector<24x256xf32>
    %cst_135 = arith.constant 0.000000e+00 : f32
    %292 = vector.broadcast %cst_135 : f32 to vector<24x256xf32>
    %293 = arith.select %81, %292, %290 : vector<24x256xi1>, vector<24x256xf32>
    %cst_136 = arith.constant 0.000000e+00 : f32
    %294 = vector.broadcast %cst_136 : f32 to vector<24x256xf32>
    %295 = arith.select %83, %294, %291 : vector<24x256xi1>, vector<24x256xf32>
    %296 = arith.addf %293, %289 : vector<24x256xf32>
    %297 = arith.addf %296, %295 : vector<24x256xf32>
    %cst_137 = arith.constant 0.333333343 : f32
    %298 = vector.broadcast %cst_137 : f32 to vector<24x256xf32>
    %299 = arith.mulf %298, %297 : vector<24x256xf32>
    %cst_138 = arith.constant 3.000000e+00 : f32
    %300 = vector.broadcast %cst_138 : f32 to vector<24x256xf32>
    %301 = arith.mulf %300, %208 : vector<24x256xf32>
    %302 = arith.subf %299, %301 : vector<24x256xf32>
    %303 = arith.mulf %58, %302 : vector<24x256xf32>
    %304 = arith.subf %281, %303 : vector<24x256xf32>
    %cst_139 = arith.constant 5.000000e-01 : f32
    %305 = vector.broadcast %cst_139 : f32 to vector<24x256xf32>
    %306 = arith.mulf %305, %304 : vector<24x256xf32>
    %307 = arith.mulf %55, %127 : vector<24x256xf32>
    %308 = arith.subf %257, %307 : vector<24x256xf32>
    %309 = arith.mulf %58, %128 : vector<24x256xf32>
    %310 = arith.subf %308, %309 : vector<24x256xf32>
    %cst_140 = arith.constant 2.500000e-01 : f32
    %311 = vector.broadcast %cst_140 : f32 to vector<24x256xf32>
    %312 = arith.mulf %310, %311 : vector<24x256xf32>
    %313 = arith.addf %312, %55 : vector<24x256xf32>
    %314 = arith.mulf %313, %172 : vector<24x256xf32>
    %315 = arith.subf %306, %314 : vector<24x256xf32>
    %316 = arith.mulf %58, %173 : vector<24x256xf32>
    %317 = arith.subf %315, %316 : vector<24x256xf32>
    %cst_141 = arith.constant 2.500000e-01 : f32
    %318 = vector.broadcast %cst_141 : f32 to vector<24x256xf32>
    %319 = arith.mulf %317, %318 : vector<24x256xf32>
    %320 = arith.addf %319, %58 : vector<24x256xf32>
    %c1_i32_142 = arith.constant 1 : i32
    %321 = tpu.dynamic_rotate %64 by %c1_i32_142 dim 1 : vector<24x256xf32>, i32 -> vector<24x256xf32>
    %c255_i32_143 = arith.constant 255 : i32
    %322 = tpu.dynamic_rotate %64 by %c255_i32_143 dim 1 : vector<24x256xf32>, i32 -> vector<24x256xf32>
    %cst_144 = arith.constant 0.000000e+00 : f32
    %323 = vector.broadcast %cst_144 : f32 to vector<24x256xf32>
    %324 = arith.select %85, %323, %321 : vector<24x256xi1>, vector<24x256xf32>
    %cst_145 = arith.constant 0.000000e+00 : f32
    %325 = vector.broadcast %cst_145 : f32 to vector<24x256xf32>
    %326 = arith.select %87, %325, %322 : vector<24x256xi1>, vector<24x256xf32>
    %327 = arith.subf %324, %326 : vector<24x256xf32>
    %328 = arith.addf %324, %326 : vector<24x256xf32>
    %cst_146 = arith.constant 0.0833333358 : f32
    %329 = vector.broadcast %cst_146 : f32 to vector<24x256xf32>
    %330 = arith.mulf %329, %328 : vector<24x256xf32>
    %cst_147 = arith.constant 0.333333343 : f32
    %331 = vector.broadcast %cst_147 : f32 to vector<24x256xf32>
    %332 = arith.mulf %331, %64 : vector<24x256xf32>
    %333 = arith.addf %330, %332 : vector<24x256xf32>
    %c1_i32_148 = arith.constant 1 : i32
    %334 = tpu.dynamic_rotate %327 by %c1_i32_148 dim 0 : vector<24x256xf32>, i32 -> vector<24x256xf32>
    %c23_i32_149 = arith.constant 23 : i32
    %335 = tpu.dynamic_rotate %327 by %c23_i32_149 dim 0 : vector<24x256xf32>, i32 -> vector<24x256xf32>
    %cst_150 = arith.constant 0.000000e+00 : f32
    %336 = vector.broadcast %cst_150 : f32 to vector<24x256xf32>
    %337 = arith.select %81, %336, %334 : vector<24x256xi1>, vector<24x256xf32>
    %cst_151 = arith.constant 0.000000e+00 : f32
    %338 = vector.broadcast %cst_151 : f32 to vector<24x256xf32>
    %339 = arith.select %83, %338, %335 : vector<24x256xi1>, vector<24x256xf32>
    %c1_i32_152 = arith.constant 1 : i32
    %340 = tpu.dynamic_rotate %333 by %c1_i32_152 dim 0 : vector<24x256xf32>, i32 -> vector<24x256xf32>
    %c23_i32_153 = arith.constant 23 : i32
    %341 = tpu.dynamic_rotate %333 by %c23_i32_153 dim 0 : vector<24x256xf32>, i32 -> vector<24x256xf32>
    %cst_154 = arith.constant 0.000000e+00 : f32
    %342 = vector.broadcast %cst_154 : f32 to vector<24x256xf32>
    %343 = arith.select %81, %342, %340 : vector<24x256xi1>, vector<24x256xf32>
    %cst_155 = arith.constant 0.000000e+00 : f32
    %344 = vector.broadcast %cst_155 : f32 to vector<24x256xf32>
    %345 = arith.select %83, %344, %341 : vector<24x256xi1>, vector<24x256xf32>
    %346 = arith.addf %337, %339 : vector<24x256xf32>
    %cst_156 = arith.constant 0.0833333358 : f32
    %347 = vector.broadcast %cst_156 : f32 to vector<24x256xf32>
    %348 = arith.mulf %347, %346 : vector<24x256xf32>
    %cst_157 = arith.constant 0.333333343 : f32
    %349 = vector.broadcast %cst_157 : f32 to vector<24x256xf32>
    %350 = arith.mulf %349, %327 : vector<24x256xf32>
    %351 = arith.addf %348, %350 : vector<24x256xf32>
    %352 = arith.subf %345, %343 : vector<24x256xf32>
    %cst_158 = arith.constant 5.000000e-01 : f32
    %353 = vector.broadcast %cst_158 : f32 to vector<24x256xf32>
    %354 = arith.mulf %351, %353 : vector<24x256xf32>
    %355 = arith.subf %313, %354 : vector<24x256xf32>
    %cst_159 = arith.constant 5.000000e-01 : f32
    %356 = vector.broadcast %cst_159 : f32 to vector<24x256xf32>
    %357 = arith.mulf %352, %356 : vector<24x256xf32>
    %358 = arith.subf %320, %357 : vector<24x256xf32>
    %359 = arith.addf %61, %64 : vector<24x256xf32>
    %c1_i32_160 = arith.constant 1 : i32
    %360 = tpu.dynamic_rotate %359 by %c1_i32_160 dim 1 : vector<24x256xf32>, i32 -> vector<24x256xf32>
    %c255_i32_161 = arith.constant 255 : i32
    %361 = tpu.dynamic_rotate %359 by %c255_i32_161 dim 1 : vector<24x256xf32>, i32 -> vector<24x256xf32>
    %cst_162 = arith.constant 0.000000e+00 : f32
    %362 = vector.broadcast %cst_162 : f32 to vector<24x256xf32>
    %363 = arith.select %85, %362, %360 : vector<24x256xi1>, vector<24x256xf32>
    %cst_163 = arith.constant 0.000000e+00 : f32
    %364 = vector.broadcast %cst_163 : f32 to vector<24x256xf32>
    %365 = arith.select %87, %364, %361 : vector<24x256xi1>, vector<24x256xf32>
    %366 = arith.addf %363, %359 : vector<24x256xf32>
    %367 = arith.addf %366, %365 : vector<24x256xf32>
    %c1_i32_164 = arith.constant 1 : i32
    %368 = tpu.dynamic_rotate %367 by %c1_i32_164 dim 0 : vector<24x256xf32>, i32 -> vector<24x256xf32>
    %c23_i32_165 = arith.constant 23 : i32
    %369 = tpu.dynamic_rotate %367 by %c23_i32_165 dim 0 : vector<24x256xf32>, i32 -> vector<24x256xf32>
    %cst_166 = arith.constant 0.000000e+00 : f32
    %370 = vector.broadcast %cst_166 : f32 to vector<24x256xf32>
    %371 = arith.select %81, %370, %368 : vector<24x256xi1>, vector<24x256xf32>
    %cst_167 = arith.constant 0.000000e+00 : f32
    %372 = vector.broadcast %cst_167 : f32 to vector<24x256xf32>
    %373 = arith.select %83, %372, %369 : vector<24x256xi1>, vector<24x256xf32>
    %374 = arith.addf %371, %367 : vector<24x256xf32>
    %375 = arith.addf %374, %373 : vector<24x256xf32>
    %cst_168 = arith.constant 0.111111112 : f32
    %376 = vector.broadcast %cst_168 : f32 to vector<24x256xf32>
    %377 = arith.mulf %376, %375 : vector<24x256xf32>
    %cst_169 = arith.constant 0.00999999977 : f32
    %378 = vector.broadcast %cst_169 : f32 to vector<24x256xf32>
    %379 = arith.mulf %377, %378 : vector<24x256xf32>
    %cst_170 = arith.constant 9.900000e-01 : f32
    %380 = vector.broadcast %cst_170 : f32 to vector<24x256xf32>
    %381 = arith.mulf %359, %380 : vector<24x256xf32>
    %382 = arith.addf %379, %381 : vector<24x256xf32>
    %cst_171 = arith.constant 1.000000e-03 : f32
    %383 = vector.broadcast %cst_171 : f32 to vector<24x256xf32>
    %384 = arith.maximumf %383, %382 : vector<24x256xf32>
    %385 = math.log %384 : vector<24x256xf32>
    %cst_172 = arith.constant -1.33333337 : f32
    %386 = vector.broadcast %cst_172 : f32 to vector<24x256xf32>
    %387 = arith.mulf %386, %385 : vector<24x256xf32>
    %388 = math.exp %387 : vector<24x256xf32>
    %389 = arith.mulf %355, %355 : vector<24x256xf32>
    %390 = arith.mulf %358, %358 : vector<24x256xf32>
    %391 = arith.addf %389, %390 : vector<24x256xf32>
    %392 = math.sqrt %391 : vector<24x256xf32>
    %cst_173 = arith.constant 3.025000e-03 : f32
    %393 = vector.broadcast %cst_173 : f32 to vector<24x256xf32>
    %394 = arith.mulf %392, %393 : vector<24x256xf32>
    %395 = arith.mulf %394, %388 : vector<24x256xf32>
    %cst_174 = arith.constant 4.905000e+00 : f32
    %396 = vector.broadcast %cst_174 : f32 to vector<24x256xf32>
    %397 = arith.mulf %395, %396 : vector<24x256xf32>
    %cst_175 = arith.constant 1.000000e+00 : f32
    %398 = vector.broadcast %cst_175 : f32 to vector<24x256xf32>
    %399 = arith.addf %398, %397 : vector<24x256xf32>
    %cst_176 = arith.constant 1.000000e+00 : f32
    %400 = vector.broadcast %cst_176 : f32 to vector<24x256xf32>
    %401 = arith.divf %400, %399 : vector<24x256xf32>
    %402 = arith.mulf %355, %401 : vector<24x256xf32>
    %403 = arith.mulf %358, %401 : vector<24x256xf32>
    %cst_177 = arith.constant 1.000000e-03 : f32
    %404 = vector.broadcast %cst_177 : f32 to vector<24x256xf32>
    %405 = arith.maximumf %404, %359 : vector<24x256xf32>
    %cst_178 = arith.constant 1.000000e-03 : f32
    %406 = vector.broadcast %cst_178 : f32 to vector<24x256xf32>
    %407 = arith.maximumf %406, %359 : vector<24x256xf32>
    %cst_179 = arith.constant 1.000000e+00 : f32
    %408 = vector.broadcast %cst_179 : f32 to vector<24x256xf32>
    %409 = arith.divf %408, %407 : vector<24x256xf32>
    %c1_i32_180 = arith.constant 1 : i32
    %410 = tpu.dynamic_rotate %405 by %c1_i32_180 dim 1 : vector<24x256xf32>, i32 -> vector<24x256xf32>
    %c255_i32_181 = arith.constant 255 : i32
    %411 = tpu.dynamic_rotate %405 by %c255_i32_181 dim 1 : vector<24x256xf32>, i32 -> vector<24x256xf32>
    %cst_182 = arith.constant 0.000000e+00 : f32
    %412 = vector.broadcast %cst_182 : f32 to vector<24x256xf32>
    %413 = arith.select %85, %412, %410 : vector<24x256xi1>, vector<24x256xf32>
    %cst_183 = arith.constant 0.000000e+00 : f32
    %414 = vector.broadcast %cst_183 : f32 to vector<24x256xf32>
    %415 = arith.select %87, %414, %411 : vector<24x256xi1>, vector<24x256xf32>
    %416 = arith.addf %413, %405 : vector<24x256xf32>
    %417 = arith.addf %416, %415 : vector<24x256xf32>
    %418 = arith.subf %413, %415 : vector<24x256xf32>
    %419 = arith.addf %413, %415 : vector<24x256xf32>
    %cst_184 = arith.constant 0.0833333358 : f32
    %420 = vector.broadcast %cst_184 : f32 to vector<24x256xf32>
    %421 = arith.mulf %420, %419 : vector<24x256xf32>
    %cst_185 = arith.constant 0.333333343 : f32
    %422 = vector.broadcast %cst_185 : f32 to vector<24x256xf32>
    %423 = arith.mulf %422, %405 : vector<24x256xf32>
    %424 = arith.addf %421, %423 : vector<24x256xf32>
    %c1_i32_186 = arith.constant 1 : i32
    %425 = tpu.dynamic_rotate %417 by %c1_i32_186 dim 0 : vector<24x256xf32>, i32 -> vector<24x256xf32>
    %c23_i32_187 = arith.constant 23 : i32
    %426 = tpu.dynamic_rotate %417 by %c23_i32_187 dim 0 : vector<24x256xf32>, i32 -> vector<24x256xf32>
    %cst_188 = arith.constant 0.000000e+00 : f32
    %427 = vector.broadcast %cst_188 : f32 to vector<24x256xf32>
    %428 = arith.select %81, %427, %425 : vector<24x256xi1>, vector<24x256xf32>
    %cst_189 = arith.constant 0.000000e+00 : f32
    %429 = vector.broadcast %cst_189 : f32 to vector<24x256xf32>
    %430 = arith.select %83, %429, %426 : vector<24x256xi1>, vector<24x256xf32>
    %c1_i32_190 = arith.constant 1 : i32
    %431 = tpu.dynamic_rotate %418 by %c1_i32_190 dim 0 : vector<24x256xf32>, i32 -> vector<24x256xf32>
    %c23_i32_191 = arith.constant 23 : i32
    %432 = tpu.dynamic_rotate %418 by %c23_i32_191 dim 0 : vector<24x256xf32>, i32 -> vector<24x256xf32>
    %cst_192 = arith.constant 0.000000e+00 : f32
    %433 = vector.broadcast %cst_192 : f32 to vector<24x256xf32>
    %434 = arith.select %81, %433, %431 : vector<24x256xi1>, vector<24x256xf32>
    %cst_193 = arith.constant 0.000000e+00 : f32
    %435 = vector.broadcast %cst_193 : f32 to vector<24x256xf32>
    %436 = arith.select %83, %435, %432 : vector<24x256xi1>, vector<24x256xf32>
    %c1_i32_194 = arith.constant 1 : i32
    %437 = tpu.dynamic_rotate %424 by %c1_i32_194 dim 0 : vector<24x256xf32>, i32 -> vector<24x256xf32>
    %c23_i32_195 = arith.constant 23 : i32
    %438 = tpu.dynamic_rotate %424 by %c23_i32_195 dim 0 : vector<24x256xf32>, i32 -> vector<24x256xf32>
    %cst_196 = arith.constant 0.000000e+00 : f32
    %439 = vector.broadcast %cst_196 : f32 to vector<24x256xf32>
    %440 = arith.select %81, %439, %437 : vector<24x256xi1>, vector<24x256xf32>
    %cst_197 = arith.constant 0.000000e+00 : f32
    %441 = vector.broadcast %cst_197 : f32 to vector<24x256xf32>
    %442 = arith.select %83, %441, %438 : vector<24x256xi1>, vector<24x256xf32>
    %443 = arith.addf %428, %417 : vector<24x256xf32>
    %444 = arith.addf %443, %430 : vector<24x256xf32>
    %cst_198 = arith.constant 0.333333343 : f32
    %445 = vector.broadcast %cst_198 : f32 to vector<24x256xf32>
    %446 = arith.mulf %445, %444 : vector<24x256xf32>
    %cst_199 = arith.constant 3.000000e+00 : f32
    %447 = vector.broadcast %cst_199 : f32 to vector<24x256xf32>
    %448 = arith.mulf %447, %405 : vector<24x256xf32>
    %449 = arith.subf %446, %448 : vector<24x256xf32>
    %450 = arith.addf %434, %436 : vector<24x256xf32>
    %cst_200 = arith.constant 0.0833333358 : f32
    %451 = vector.broadcast %cst_200 : f32 to vector<24x256xf32>
    %452 = arith.mulf %451, %450 : vector<24x256xf32>
    %cst_201 = arith.constant 0.333333343 : f32
    %453 = vector.broadcast %cst_201 : f32 to vector<24x256xf32>
    %454 = arith.mulf %453, %418 : vector<24x256xf32>
    %455 = arith.addf %452, %454 : vector<24x256xf32>
    %456 = arith.subf %442, %440 : vector<24x256xf32>
    %457 = math.absf %402 : vector<24x256xf32>
    %458 = math.absf %403 : vector<24x256xf32>
    %459 = arith.addf %457, %458 : vector<24x256xf32>
    %cst_202 = arith.constant 5.000000e-01 : f32
    %460 = vector.broadcast %cst_202 : f32 to vector<24x256xf32>
    %461 = arith.mulf %460, %459 : vector<24x256xf32>
    %462 = arith.mulf %461, %449 : vector<24x256xf32>
    %463 = math.absf %462 : vector<24x256xf32>
    %cst_203 = arith.constant 2.500000e-01 : f32
    %464 = vector.broadcast %cst_203 : f32 to vector<24x256xf32>
    %465 = arith.mulf %464, %463 : vector<24x256xf32>
    %466 = math.absf %455 : vector<24x256xf32>
    %467 = math.absf %456 : vector<24x256xf32>
    %468 = arith.addf %466, %467 : vector<24x256xf32>
    %cst_204 = arith.constant 5.000000e-01 : f32
    %469 = vector.broadcast %cst_204 : f32 to vector<24x256xf32>
    %470 = arith.mulf %469, %468 : vector<24x256xf32>
    %cst_205 = arith.constant 1.000000e-03 : f32
    %471 = vector.broadcast %cst_205 : f32 to vector<24x256xf32>
    %472 = arith.addf %471, %470 : vector<24x256xf32>
    %473 = tpu.reciprocal %472 {approx = true} : vector<24x256xf32> -> vector<24x256xf32>
    %474 = arith.mulf %465, %473 : vector<24x256xf32>
    %cst_206 = arith.constant 0.00999999977 : f32
    %475 = vector.broadcast %cst_206 : f32 to vector<24x256xf32>
    %476 = arith.minimumf %474, %475 : vector<24x256xf32>
    %477 = arith.mulf %474, %449 : vector<24x256xf32>
    %478 = arith.mulf %405, %476 : vector<24x256xf32>
    %c1_i32_207 = arith.constant 1 : i32
    %479 = tpu.dynamic_rotate %478 by %c1_i32_207 dim 1 : vector<24x256xf32>, i32 -> vector<24x256xf32>
    %c255_i32_208 = arith.constant 255 : i32
    %480 = tpu.dynamic_rotate %478 by %c255_i32_208 dim 1 : vector<24x256xf32>, i32 -> vector<24x256xf32>
    %cst_209 = arith.constant 0.000000e+00 : f32
    %481 = vector.broadcast %cst_209 : f32 to vector<24x256xf32>
    %482 = arith.select %85, %481, %479 : vector<24x256xi1>, vector<24x256xf32>
    %cst_210 = arith.constant 0.000000e+00 : f32
    %483 = vector.broadcast %cst_210 : f32 to vector<24x256xf32>
    %484 = arith.select %87, %483, %480 : vector<24x256xi1>, vector<24x256xf32>
    %485 = arith.addf %482, %478 : vector<24x256xf32>
    %486 = arith.addf %485, %484 : vector<24x256xf32>
    %c1_i32_211 = arith.constant 1 : i32
    %487 = tpu.dynamic_rotate %486 by %c1_i32_211 dim 0 : vector<24x256xf32>, i32 -> vector<24x256xf32>
    %c23_i32_212 = arith.constant 23 : i32
    %488 = tpu.dynamic_rotate %486 by %c23_i32_212 dim 0 : vector<24x256xf32>, i32 -> vector<24x256xf32>
    %cst_213 = arith.constant 0.000000e+00 : f32
    %489 = vector.broadcast %cst_213 : f32 to vector<24x256xf32>
    %490 = arith.select %81, %489, %487 : vector<24x256xi1>, vector<24x256xf32>
    %cst_214 = arith.constant 0.000000e+00 : f32
    %491 = vector.broadcast %cst_214 : f32 to vector<24x256xf32>
    %492 = arith.select %83, %491, %488 : vector<24x256xi1>, vector<24x256xf32>
    %493 = arith.addf %490, %486 : vector<24x256xf32>
    %494 = arith.addf %493, %492 : vector<24x256xf32>
    %cst_215 = arith.constant 0.333333343 : f32
    %495 = vector.broadcast %cst_215 : f32 to vector<24x256xf32>
    %496 = arith.mulf %495, %494 : vector<24x256xf32>
    %cst_216 = arith.constant 3.000000e+00 : f32
    %497 = vector.broadcast %cst_216 : f32 to vector<24x256xf32>
    %498 = arith.mulf %497, %478 : vector<24x256xf32>
    %499 = arith.subf %496, %498 : vector<24x256xf32>
    %500 = arith.addf %477, %499 : vector<24x256xf32>
    %c1_i32_217 = arith.constant 1 : i32
    %501 = tpu.dynamic_rotate %476 by %c1_i32_217 dim 1 : vector<24x256xf32>, i32 -> vector<24x256xf32>
    %c255_i32_218 = arith.constant 255 : i32
    %502 = tpu.dynamic_rotate %476 by %c255_i32_218 dim 1 : vector<24x256xf32>, i32 -> vector<24x256xf32>
    %cst_219 = arith.constant 0.000000e+00 : f32
    %503 = vector.broadcast %cst_219 : f32 to vector<24x256xf32>
    %504 = arith.select %85, %503, %501 : vector<24x256xi1>, vector<24x256xf32>
    %cst_220 = arith.constant 0.000000e+00 : f32
    %505 = vector.broadcast %cst_220 : f32 to vector<24x256xf32>
    %506 = arith.select %87, %505, %502 : vector<24x256xi1>, vector<24x256xf32>
    %507 = arith.addf %504, %476 : vector<24x256xf32>
    %508 = arith.addf %507, %506 : vector<24x256xf32>
    %c1_i32_221 = arith.constant 1 : i32
    %509 = tpu.dynamic_rotate %508 by %c1_i32_221 dim 0 : vector<24x256xf32>, i32 -> vector<24x256xf32>
    %c23_i32_222 = arith.constant 23 : i32
    %510 = tpu.dynamic_rotate %508 by %c23_i32_222 dim 0 : vector<24x256xf32>, i32 -> vector<24x256xf32>
    %cst_223 = arith.constant 0.000000e+00 : f32
    %511 = vector.broadcast %cst_223 : f32 to vector<24x256xf32>
    %512 = arith.select %81, %511, %509 : vector<24x256xi1>, vector<24x256xf32>
    %cst_224 = arith.constant 0.000000e+00 : f32
    %513 = vector.broadcast %cst_224 : f32 to vector<24x256xf32>
    %514 = arith.select %83, %513, %510 : vector<24x256xi1>, vector<24x256xf32>
    %515 = arith.addf %512, %508 : vector<24x256xf32>
    %516 = arith.addf %515, %514 : vector<24x256xf32>
    %cst_225 = arith.constant 0.333333343 : f32
    %517 = vector.broadcast %cst_225 : f32 to vector<24x256xf32>
    %518 = arith.mulf %517, %516 : vector<24x256xf32>
    %cst_226 = arith.constant 3.000000e+00 : f32
    %519 = vector.broadcast %cst_226 : f32 to vector<24x256xf32>
    %520 = arith.mulf %519, %476 : vector<24x256xf32>
    %521 = arith.subf %518, %520 : vector<24x256xf32>
    %522 = arith.mulf %405, %521 : vector<24x256xf32>
    %523 = arith.subf %500, %522 : vector<24x256xf32>
    %cst_227 = arith.constant 5.000000e-01 : f32
    %524 = vector.broadcast %cst_227 : f32 to vector<24x256xf32>
    %525 = arith.mulf %524, %523 : vector<24x256xf32>
    %c1_i32_228 = arith.constant 1 : i32
    %526 = tpu.dynamic_rotate %402 by %c1_i32_228 dim 1 : vector<24x256xf32>, i32 -> vector<24x256xf32>
    %c255_i32_229 = arith.constant 255 : i32
    %527 = tpu.dynamic_rotate %402 by %c255_i32_229 dim 1 : vector<24x256xf32>, i32 -> vector<24x256xf32>
    %cst_230 = arith.constant 0.000000e+00 : f32
    %528 = vector.broadcast %cst_230 : f32 to vector<24x256xf32>
    %529 = arith.select %85, %528, %526 : vector<24x256xi1>, vector<24x256xf32>
    %cst_231 = arith.constant 0.000000e+00 : f32
    %530 = vector.broadcast %cst_231 : f32 to vector<24x256xf32>
    %531 = arith.select %87, %530, %527 : vector<24x256xi1>, vector<24x256xf32>
    %532 = arith.subf %529, %531 : vector<24x256xf32>
    %c1_i32_232 = arith.constant 1 : i32
    %533 = tpu.dynamic_rotate %532 by %c1_i32_232 dim 0 : vector<24x256xf32>, i32 -> vector<24x256xf32>
    %c23_i32_233 = arith.constant 23 : i32
    %534 = tpu.dynamic_rotate %532 by %c23_i32_233 dim 0 : vector<24x256xf32>, i32 -> vector<24x256xf32>
    %535 = arith.select %81, %532, %533 : vector<24x256xi1>, vector<24x256xf32>
    %536 = arith.select %83, %532, %534 : vector<24x256xi1>, vector<24x256xf32>
    %537 = arith.addf %535, %536 : vector<24x256xf32>
    %cst_234 = arith.constant 0.0833333358 : f32
    %538 = vector.broadcast %cst_234 : f32 to vector<24x256xf32>
    %539 = arith.mulf %538, %537 : vector<24x256xf32>
    %cst_235 = arith.constant 0.333333343 : f32
    %540 = vector.broadcast %cst_235 : f32 to vector<24x256xf32>
    %541 = arith.mulf %540, %532 : vector<24x256xf32>
    %542 = arith.addf %539, %541 : vector<24x256xf32>
    %c1_i32_236 = arith.constant 1 : i32
    %543 = tpu.dynamic_rotate %403 by %c1_i32_236 dim 1 : vector<24x256xf32>, i32 -> vector<24x256xf32>
    %c255_i32_237 = arith.constant 255 : i32
    %544 = tpu.dynamic_rotate %403 by %c255_i32_237 dim 1 : vector<24x256xf32>, i32 -> vector<24x256xf32>
    %545 = arith.select %85, %403, %543 : vector<24x256xi1>, vector<24x256xf32>
    %546 = arith.select %87, %403, %544 : vector<24x256xi1>, vector<24x256xf32>
    %547 = arith.addf %545, %546 : vector<24x256xf32>
    %cst_238 = arith.constant 0.0833333358 : f32
    %548 = vector.broadcast %cst_238 : f32 to vector<24x256xf32>
    %549 = arith.mulf %548, %547 : vector<24x256xf32>
    %cst_239 = arith.constant 0.333333343 : f32
    %550 = vector.broadcast %cst_239 : f32 to vector<24x256xf32>
    %551 = arith.mulf %550, %403 : vector<24x256xf32>
    %552 = arith.addf %549, %551 : vector<24x256xf32>
    %c1_i32_240 = arith.constant 1 : i32
    %553 = tpu.dynamic_rotate %552 by %c1_i32_240 dim 0 : vector<24x256xf32>, i32 -> vector<24x256xf32>
    %c23_i32_241 = arith.constant 23 : i32
    %554 = tpu.dynamic_rotate %552 by %c23_i32_241 dim 0 : vector<24x256xf32>, i32 -> vector<24x256xf32>
    %cst_242 = arith.constant 0.000000e+00 : f32
    %555 = vector.broadcast %cst_242 : f32 to vector<24x256xf32>
    %556 = arith.select %81, %555, %553 : vector<24x256xi1>, vector<24x256xf32>
    %cst_243 = arith.constant 0.000000e+00 : f32
    %557 = vector.broadcast %cst_243 : f32 to vector<24x256xf32>
    %558 = arith.select %83, %557, %554 : vector<24x256xi1>, vector<24x256xf32>
    %559 = arith.subf %558, %556 : vector<24x256xf32>
    %cst_244 = arith.constant 0.000000e+00 : f32
    %560 = vector.broadcast %cst_244 : f32 to vector<24x256xf32>
    %561 = arith.subf %560, %455 : vector<24x256xf32>
    %562 = arith.mulf %561, %402 : vector<24x256xf32>
    %563 = arith.mulf %456, %403 : vector<24x256xf32>
    %564 = arith.subf %562, %563 : vector<24x256xf32>
    %565 = arith.addf %542, %559 : vector<24x256xf32>
    %566 = arith.mulf %405, %565 : vector<24x256xf32>
    %567 = arith.subf %564, %566 : vector<24x256xf32>
    %568 = arith.addf %567, %525 : vector<24x256xf32>
    %c1_i32_245 = arith.constant 1 : i32
    %569 = tpu.dynamic_rotate %70 by %c1_i32_245 dim 1 : vector<24x256xf32>, i32 -> vector<24x256xf32>
    %c255_i32_246 = arith.constant 255 : i32
    %570 = tpu.dynamic_rotate %70 by %c255_i32_246 dim 1 : vector<24x256xf32>, i32 -> vector<24x256xf32>
    %cst_247 = arith.constant 0.000000e+00 : f32
    %571 = vector.broadcast %cst_247 : f32 to vector<24x256xf32>
    %572 = arith.select %85, %571, %569 : vector<24x256xi1>, vector<24x256xf32>
    %cst_248 = arith.constant 0.000000e+00 : f32
    %573 = vector.broadcast %cst_248 : f32 to vector<24x256xf32>
    %574 = arith.select %87, %573, %570 : vector<24x256xi1>, vector<24x256xf32>
    %575 = arith.addf %572, %70 : vector<24x256xf32>
    %576 = arith.addf %575, %574 : vector<24x256xf32>
    %c1_i32_249 = arith.constant 1 : i32
    %577 = tpu.dynamic_rotate %576 by %c1_i32_249 dim 0 : vector<24x256xf32>, i32 -> vector<24x256xf32>
    %c23_i32_250 = arith.constant 23 : i32
    %578 = tpu.dynamic_rotate %576 by %c23_i32_250 dim 0 : vector<24x256xf32>, i32 -> vector<24x256xf32>
    %cst_251 = arith.constant 0.000000e+00 : f32
    %579 = vector.broadcast %cst_251 : f32 to vector<24x256xf32>
    %580 = arith.select %81, %579, %577 : vector<24x256xi1>, vector<24x256xf32>
    %cst_252 = arith.constant 0.000000e+00 : f32
    %581 = vector.broadcast %cst_252 : f32 to vector<24x256xf32>
    %582 = arith.select %83, %581, %578 : vector<24x256xi1>, vector<24x256xf32>
    %583 = arith.addf %580, %576 : vector<24x256xf32>
    %584 = arith.addf %583, %582 : vector<24x256xf32>
    %cst_253 = arith.constant 0.111111112 : f32
    %585 = vector.broadcast %cst_253 : f32 to vector<24x256xf32>
    %586 = arith.mulf %585, %584 : vector<24x256xf32>
    %cst_254 = arith.constant 2.000000e+00 : f32
    %587 = vector.broadcast %cst_254 : f32 to vector<24x256xf32>
    %588 = arith.mulf %586, %587 : vector<24x256xf32>
    %589 = arith.subf %568, %588 : vector<24x256xf32>
    %590 = arith.addf %589, %73 : vector<24x256xf32>
    %cst_255 = arith.constant 0.815494418 : f32
    %591 = vector.broadcast %cst_255 : f32 to vector<24x256xf32>
    %592 = arith.mulf %591, %590 : vector<24x256xf32>
    %593 = arith.mulf %592, %409 : vector<24x256xf32>
    %cst_256 = arith.constant 1.63098884 : f32
    %594 = vector.broadcast %cst_256 : f32 to vector<24x256xf32>
    %595 = arith.mulf %594, %409 : vector<24x256xf32>
    %cst_257 = arith.constant 2.66666675 : f32
    %596 = vector.broadcast %cst_257 : f32 to vector<24x256xf32>
    %597 = arith.addf %596, %595 : vector<24x256xf32>
    %cst_258 = arith.constant 1.000000e+00 : f32
    %598 = vector.broadcast %cst_258 : f32 to vector<24x256xf32>
    %599 = arith.divf %598, %597 : vector<24x256xf32>
    %600 = arith.mulf %593, %599 : vector<24x256xf32>
    %601 = arith.mulf %595, %67 : vector<24x256xf32>
    %c1_i32_259 = arith.constant 1 : i32
    %602 = tpu.dynamic_rotate %67 by %c1_i32_259 dim 1 : vector<24x256xf32>, i32 -> vector<24x256xf32>
    %c255_i32_260 = arith.constant 255 : i32
    %603 = tpu.dynamic_rotate %67 by %c255_i32_260 dim 1 : vector<24x256xf32>, i32 -> vector<24x256xf32>
    %cst_261 = arith.constant 0.000000e+00 : f32
    %604 = vector.broadcast %cst_261 : f32 to vector<24x256xf32>
    %605 = arith.select %85, %604, %602 : vector<24x256xi1>, vector<24x256xf32>
    %cst_262 = arith.constant 0.000000e+00 : f32
    %606 = vector.broadcast %cst_262 : f32 to vector<24x256xf32>
    %607 = arith.select %87, %606, %603 : vector<24x256xi1>, vector<24x256xf32>
    %608 = arith.addf %605, %67 : vector<24x256xf32>
    %609 = arith.addf %608, %607 : vector<24x256xf32>
    %c1_i32_263 = arith.constant 1 : i32
    %610 = tpu.dynamic_rotate %609 by %c1_i32_263 dim 0 : vector<24x256xf32>, i32 -> vector<24x256xf32>
    %c23_i32_264 = arith.constant 23 : i32
    %611 = tpu.dynamic_rotate %609 by %c23_i32_264 dim 0 : vector<24x256xf32>, i32 -> vector<24x256xf32>
    %cst_265 = arith.constant 0.000000e+00 : f32
    %612 = vector.broadcast %cst_265 : f32 to vector<24x256xf32>
    %613 = arith.select %81, %612, %610 : vector<24x256xi1>, vector<24x256xf32>
    %cst_266 = arith.constant 0.000000e+00 : f32
    %614 = vector.broadcast %cst_266 : f32 to vector<24x256xf32>
    %615 = arith.select %83, %614, %611 : vector<24x256xi1>, vector<24x256xf32>
    %616 = arith.addf %613, %609 : vector<24x256xf32>
    %617 = arith.addf %616, %615 : vector<24x256xf32>
    %cst_267 = arith.constant 0.333333343 : f32
    %618 = vector.broadcast %cst_267 : f32 to vector<24x256xf32>
    %619 = arith.mulf %618, %617 : vector<24x256xf32>
    %cst_268 = arith.constant 3.000000e+00 : f32
    %620 = vector.broadcast %cst_268 : f32 to vector<24x256xf32>
    %621 = arith.mulf %620, %67 : vector<24x256xf32>
    %622 = arith.subf %619, %621 : vector<24x256xf32>
    %623 = arith.subf %601, %622 : vector<24x256xf32>
    %624 = arith.mulf %623, %599 : vector<24x256xf32>
    %625 = arith.subf %67, %624 : vector<24x256xf32>
    %626 = arith.addf %625, %600 : vector<24x256xf32>
    %627 = arith.mulf %595, %626 : vector<24x256xf32>
    %c1_i32_269 = arith.constant 1 : i32
    %628 = tpu.dynamic_rotate %626 by %c1_i32_269 dim 1 : vector<24x256xf32>, i32 -> vector<24x256xf32>
    %c255_i32_270 = arith.constant 255 : i32
    %629 = tpu.dynamic_rotate %626 by %c255_i32_270 dim 1 : vector<24x256xf32>, i32 -> vector<24x256xf32>
    %cst_271 = arith.constant 0.000000e+00 : f32
    %630 = vector.broadcast %cst_271 : f32 to vector<24x256xf32>
    %631 = arith.select %85, %630, %628 : vector<24x256xi1>, vector<24x256xf32>
    %cst_272 = arith.constant 0.000000e+00 : f32
    %632 = vector.broadcast %cst_272 : f32 to vector<24x256xf32>
    %633 = arith.select %87, %632, %629 : vector<24x256xi1>, vector<24x256xf32>
    %634 = arith.addf %631, %626 : vector<24x256xf32>
    %635 = arith.addf %634, %633 : vector<24x256xf32>
    %c1_i32_273 = arith.constant 1 : i32
    %636 = tpu.dynamic_rotate %635 by %c1_i32_273 dim 0 : vector<24x256xf32>, i32 -> vector<24x256xf32>
    %c23_i32_274 = arith.constant 23 : i32
    %637 = tpu.dynamic_rotate %635 by %c23_i32_274 dim 0 : vector<24x256xf32>, i32 -> vector<24x256xf32>
    %cst_275 = arith.constant 0.000000e+00 : f32
    %638 = vector.broadcast %cst_275 : f32 to vector<24x256xf32>
    %639 = arith.select %81, %638, %636 : vector<24x256xi1>, vector<24x256xf32>
    %cst_276 = arith.constant 0.000000e+00 : f32
    %640 = vector.broadcast %cst_276 : f32 to vector<24x256xf32>
    %641 = arith.select %83, %640, %637 : vector<24x256xi1>, vector<24x256xf32>
    %642 = arith.addf %639, %635 : vector<24x256xf32>
    %643 = arith.addf %642, %641 : vector<24x256xf32>
    %cst_277 = arith.constant 0.333333343 : f32
    %644 = vector.broadcast %cst_277 : f32 to vector<24x256xf32>
    %645 = arith.mulf %644, %643 : vector<24x256xf32>
    %cst_278 = arith.constant 3.000000e+00 : f32
    %646 = vector.broadcast %cst_278 : f32 to vector<24x256xf32>
    %647 = arith.mulf %646, %626 : vector<24x256xf32>
    %648 = arith.subf %645, %647 : vector<24x256xf32>
    %649 = arith.subf %627, %648 : vector<24x256xf32>
    %650 = arith.mulf %649, %599 : vector<24x256xf32>
    %651 = arith.subf %626, %650 : vector<24x256xf32>
    %652 = arith.addf %651, %600 : vector<24x256xf32>
    %653 = arith.addf %64, %652 : vector<24x256xf32>
    %c1_i32_279 = arith.constant 1 : i32
    %654 = tpu.dynamic_rotate %652 by %c1_i32_279 dim 1 : vector<24x256xf32>, i32 -> vector<24x256xf32>
    %c255_i32_280 = arith.constant 255 : i32
    %655 = tpu.dynamic_rotate %652 by %c255_i32_280 dim 1 : vector<24x256xf32>, i32 -> vector<24x256xf32>
    %cst_281 = arith.constant 0.000000e+00 : f32
    %656 = vector.broadcast %cst_281 : f32 to vector<24x256xf32>
    %657 = arith.select %85, %656, %654 : vector<24x256xi1>, vector<24x256xf32>
    %cst_282 = arith.constant 0.000000e+00 : f32
    %658 = vector.broadcast %cst_282 : f32 to vector<24x256xf32>
    %659 = arith.select %87, %658, %655 : vector<24x256xi1>, vector<24x256xf32>
    %660 = arith.subf %657, %659 : vector<24x256xf32>
    %661 = arith.addf %657, %659 : vector<24x256xf32>
    %cst_283 = arith.constant 0.0833333358 : f32
    %662 = vector.broadcast %cst_283 : f32 to vector<24x256xf32>
    %663 = arith.mulf %662, %661 : vector<24x256xf32>
    %cst_284 = arith.constant 0.333333343 : f32
    %664 = vector.broadcast %cst_284 : f32 to vector<24x256xf32>
    %665 = arith.mulf %664, %652 : vector<24x256xf32>
    %666 = arith.addf %663, %665 : vector<24x256xf32>
    %c1_i32_285 = arith.constant 1 : i32
    %667 = tpu.dynamic_rotate %660 by %c1_i32_285 dim 0 : vector<24x256xf32>, i32 -> vector<24x256xf32>
    %c23_i32_286 = arith.constant 23 : i32
    %668 = tpu.dynamic_rotate %660 by %c23_i32_286 dim 0 : vector<24x256xf32>, i32 -> vector<24x256xf32>
    %cst_287 = arith.constant 0.000000e+00 : f32
    %669 = vector.broadcast %cst_287 : f32 to vector<24x256xf32>
    %670 = arith.select %81, %669, %667 : vector<24x256xi1>, vector<24x256xf32>
    %cst_288 = arith.constant 0.000000e+00 : f32
    %671 = vector.broadcast %cst_288 : f32 to vector<24x256xf32>
    %672 = arith.select %83, %671, %668 : vector<24x256xi1>, vector<24x256xf32>
    %c1_i32_289 = arith.constant 1 : i32
    %673 = tpu.dynamic_rotate %666 by %c1_i32_289 dim 0 : vector<24x256xf32>, i32 -> vector<24x256xf32>
    %c23_i32_290 = arith.constant 23 : i32
    %674 = tpu.dynamic_rotate %666 by %c23_i32_290 dim 0 : vector<24x256xf32>, i32 -> vector<24x256xf32>
    %cst_291 = arith.constant 0.000000e+00 : f32
    %675 = vector.broadcast %cst_291 : f32 to vector<24x256xf32>
    %676 = arith.select %81, %675, %673 : vector<24x256xi1>, vector<24x256xf32>
    %cst_292 = arith.constant 0.000000e+00 : f32
    %677 = vector.broadcast %cst_292 : f32 to vector<24x256xf32>
    %678 = arith.select %83, %677, %674 : vector<24x256xi1>, vector<24x256xf32>
    %679 = arith.addf %670, %672 : vector<24x256xf32>
    %cst_293 = arith.constant 0.0833333358 : f32
    %680 = vector.broadcast %cst_293 : f32 to vector<24x256xf32>
    %681 = arith.mulf %680, %679 : vector<24x256xf32>
    %cst_294 = arith.constant 0.333333343 : f32
    %682 = vector.broadcast %cst_294 : f32 to vector<24x256xf32>
    %683 = arith.mulf %682, %660 : vector<24x256xf32>
    %684 = arith.addf %681, %683 : vector<24x256xf32>
    %685 = arith.subf %678, %676 : vector<24x256xf32>
    %cst_295 = arith.constant 4.905000e+00 : f32
    %686 = vector.broadcast %cst_295 : f32 to vector<24x256xf32>
    %687 = arith.mulf %684, %686 : vector<24x256xf32>
    %688 = arith.subf %402, %687 : vector<24x256xf32>
    %cst_296 = arith.constant 4.905000e+00 : f32
    %689 = vector.broadcast %cst_296 : f32 to vector<24x256xf32>
    %690 = arith.mulf %685, %689 : vector<24x256xf32>
    %691 = arith.subf %403, %690 : vector<24x256xf32>
    %692 = vector.extract_strided_slice %688 {offsets = [8, 0], sizes = [8, 256], strides = [1, 1]} : vector<24x256xf32> to vector<8x256xf32>
    %c0_297 = arith.constant 0 : index
    %c0_298 = arith.constant 0 : index
    %693 = vector.load %arg9[%c0_297, %c0_298] : memref<8x256xf32, #tpu.memory_space<vmem>>, vector<8x256xf32>
    tpu.vector_store %arg9[%c0_297, %c0_298], %692 {strides = array<i32>} : memref<8x256xf32, #tpu.memory_space<vmem>>, vector<8x256xf32>,
    %694 = vector.extract_strided_slice %691 {offsets = [8, 0], sizes = [8, 256], strides = [1, 1]} : vector<24x256xf32> to vector<8x256xf32>
    %c0_299 = arith.constant 0 : index
    %c0_300 = arith.constant 0 : index
    %695 = vector.load %arg10[%c0_299, %c0_300] : memref<8x256xf32, #tpu.memory_space<vmem>>, vector<8x256xf32>
    tpu.vector_store %arg10[%c0_299, %c0_300], %694 {strides = array<i32>} : memref<8x256xf32, #tpu.memory_space<vmem>>, vector<8x256xf32>,
    %696 = vector.extract_strided_slice %653 {offsets = [8, 0], sizes = [8, 256], strides = [1, 1]} : vector<24x256xf32> to vector<8x256xf32>
    %c0_301 = arith.constant 0 : index
    %c0_302 = arith.constant 0 : index
    %697 = vector.load %arg11[%c0_301, %c0_302] : memref<8x256xf32, #tpu.memory_space<vmem>>, vector<8x256xf32>
    tpu.vector_store %arg11[%c0_301, %c0_302], %696 {strides = array<i32>} : memref<8x256xf32, #tpu.memory_space<vmem>>, vector<8x256xf32>,
    %698 = vector.extract_strided_slice %652 {offsets = [8, 0], sizes = [8, 256], strides = [1, 1]} : vector<24x256xf32> to vector<8x256xf32>
    %c0_303 = arith.constant 0 : index
    %c0_304 = arith.constant 0 : index
    %699 = vector.load %arg12[%c0_303, %c0_304] : memref<8x256xf32, #tpu.memory_space<vmem>>, vector<8x256xf32>
    tpu.vector_store %arg12[%c0_303, %c0_304], %698 {strides = array<i32>} : memref<8x256xf32, #tpu.memory_space<vmem>>, vector<8x256xf32>,
    return
  }
  func.func @transform_7(%arg0: i32, %arg1: i32) -> (i32, i32) {
    %c4_i32 = arith.constant 4 : i32
    %0 = arith.muli %arg0, %c4_i32 : i32
    %1 = arith.addi %0, %arg1 : i32
    %c0_i32 = arith.constant 0 : i32
    %c0_i32_0 = arith.constant 0 : i32
    return %1, %c0_i32 : i32, i32
  }
  func.func @transform_8(%arg0: i32, %arg1: i32) -> (i32, i32) {
    %c4_i32 = arith.constant 4 : i32
    %0 = arith.muli %arg0, %c4_i32 : i32
    %1 = arith.addi %0, %arg1 : i32
    %c0_i32 = arith.constant 0 : i32
    %c0_i32_0 = arith.constant 0 : i32
    return %1, %c0_i32 : i32, i32
  }
  func.func @transform_9(%arg0: i32, %arg1: i32) -> (i32, i32) {
    %c4_i32 = arith.constant 4 : i32
    %0 = arith.muli %arg0, %c4_i32 : i32
    %1 = arith.addi %0, %arg1 : i32
    %c0_i32 = arith.constant 0 : i32
    %c0_i32_0 = arith.constant 0 : i32
    return %1, %c0_i32 : i32, i32
  }
  func.func @transform_10(%arg0: i32, %arg1: i32) -> (i32, i32) {
    %c4_i32 = arith.constant 4 : i32
    %0 = arith.muli %arg0, %c4_i32 : i32
    %1 = arith.addi %0, %arg1 : i32
    %c0_i32 = arith.constant 0 : i32
    %c0_i32_0 = arith.constant 0 : i32
    return %1, %c0_i32 : i32, i32
  }
}

</mosaic_0001>

<llo_original>
// kernel: tpu_custom_call.1
$region0: #{tpu_custom_call.1}
  #allocation0 [shape = 'u32[]', space=smem, size = 0x4, offset = 0x4, fixed_abs, tag = 'smem constant byte address 0x4 - core index']
  #allocation1 [shape = 'u32[144,128]{1,0:T(1,128)}', space=vmem, size = 0x12000, scoped, tag = 'internal scratch']
  #allocation2 [shape = 'f32[2,24,256]{2,1,0:T(8,128)}', space=vmem, size = 0xc000, scoped, tag = 'scratch operand']
  #allocation3 [shape = 'f32[2,24,256]{2,1,0:T(8,128)}', space=vmem, size = 0xc000, scoped, tag = 'scratch operand']
  #allocation4 [shape = 'f32[2,24,256]{2,1,0:T(8,128)}', space=vmem, size = 0xc000, scoped, tag = 'scratch operand']
  #allocation5 [shape = 'f32[2,24,256]{2,1,0:T(8,128)}', space=vmem, size = 0xc000, scoped, tag = 'scratch operand']
  #allocation6 [shape = 'f32[2,24,256]{2,1,0:T(8,128)}', space=vmem, size = 0xc000, scoped, tag = 'scratch operand']
  #allocation7 [shape = 'f32[2,24,256]{2,1,0:T(8,128)}', space=vmem, size = 0xc000, scoped, tag = 'scratch operand']
  #allocation8 [shape = 'f32[2,24,256]{2,1,0:T(8,128)}', space=vmem, size = 0xc000, scoped, tag = 'scratch operand']
  #allocation9 [shape = 's32[14]{0}', space=sflag, size = 0x38, scoped, tag = 'scratch operand']
  #allocation17 [shape = 's32[]', space=sflag, size = 0x4, offset = 0, fixed_abs, tag = 'sflag constant byte address 0x0 - dummy sync flag']
  #allocation18 [shape = 's32[]', space=sflag, size = 0x4, offset = 0, fixed_abs, tag = 'sflag constant byte address 0x0 - dummy sync flag']
  #allocation19 [shape = 'u32[]', space=smem, size = 0x4, offset = 0x44, fixed_abs, tag = 'smem constant byte address 0x44 - assertion arg 0']
  #allocation20 [shape = 'u32[]', space=smem, size = 0x4, offset = 0x48, fixed_abs, tag = 'smem constant byte address 0x48 - assertion arg 1']
  #allocation21 [shape = 's32[]', space=sflag, size = 0x4, offset = 0, fixed_abs, tag = 'sflag constant byte address 0x0 - dummy sync flag']
  #allocation22 [shape = 's32[]', space=sflag, size = 0x4, offset = 0, fixed_abs, tag = 'sflag constant byte address 0x0 - dummy sync flag']
  #allocation23 [shape = 's32[]', space=sflag, size = 0x4, offset = 0, fixed_abs, tag = 'sflag constant byte address 0x0 - dummy sync flag']
  #allocation24 [shape = 's32[]', space=sflag, size = 0x4, offset = 0, fixed_abs, tag = 'sflag constant byte address 0x0 - dummy sync flag']
  #allocation25 [shape = 's32[]', space=sflag, size = 0x4, offset = 0, fixed_abs, tag = 'sflag constant byte address 0x0 - dummy sync flag']
  #allocation26 [shape = 's32[]', space=sflag, size = 0x4, offset = 0, fixed_abs, tag = 'sflag constant byte address 0x0 - dummy sync flag']
  #allocation27 [shape = 's32[]', space=sflag, size = 0x4, offset = 0, fixed_abs, tag = 'sflag constant byte address 0x0 - dummy sync flag']
  #allocation28 [shape = 's32[]', space=sflag, size = 0x4, offset = 0, fixed_abs, tag = 'sflag constant byte address 0x0 - dummy sync flag']
  #allocation29 [shape = 's32[]', space=sflag, size = 0x4, offset = 0, fixed_abs, tag = 'sflag constant byte address 0x0 - dummy sync flag']
  #allocation30 [shape = 's32[]', space=sflag, size = 0x4, offset = 0, fixed_abs, tag = 'sflag constant byte address 0x0 - dummy sync flag']
  #allocation31 [shape = 's32[]', space=sflag, size = 0x4, offset = 0, fixed_abs, tag = 'sflag constant byte address 0x0 - dummy sync flag']
  #allocation32 [shape = 's32[]', space=sflag, size = 0x4, offset = 0, fixed_abs, tag = 'sflag constant byte address 0x0 - dummy sync flag']
  #allocation33 [shape = 's32[]', space=sflag, size = 0x4, offset = 0, fixed_abs, tag = 'sflag constant byte address 0x0 - dummy sync flag']
  #allocation34 [shape = 's32[]', space=sflag, size = 0x4, offset = 0, fixed_abs, tag = 'sflag constant byte address 0x0 - dummy sync flag']
  #allocation35 [shape = 's32[]', space=sflag, size = 0x4, offset = 0, fixed_abs, tag = 'sflag constant byte address 0x0 - dummy sync flag']
  #allocation36 [shape = 's32[]', space=sflag, size = 0x4, offset = 0, fixed_abs, tag = 'sflag constant byte address 0x0 - dummy sync flag']
  #allocation37 [shape = 's32[]', space=sflag, size = 0x4, offset = 0, fixed_abs, tag = 'sflag constant byte address 0x0 - dummy sync flag']
  #allocation38 [shape = 's32[]', space=sflag, size = 0x4, offset = 0, fixed_abs, tag = 'sflag constant byte address 0x0 - dummy sync flag']
  #allocation39 [shape = 's32[]', space=sflag, size = 0x4, offset = 0, fixed_abs, tag = 'sflag constant byte address 0x0 - dummy sync flag']
  #allocation40 [shape = 's32[]', space=sflag, size = 0x4, offset = 0, fixed_abs, tag = 'sflag constant byte address 0x0 - dummy sync flag']
  #allocation41 [shape = 's32[]', space=sflag, size = 0x4, offset = 0, fixed_abs, tag = 'sflag constant byte address 0x0 - dummy sync flag']
  #allocation42 [shape = 's32[]', space=sflag, size = 0x4, offset = 0, fixed_abs, tag = 'sflag constant byte address 0x0 - dummy sync flag']
  #allocation43 [shape = 's32[]', space=sflag, size = 0x4, offset = 0, fixed_abs, tag = 'sflag constant byte address 0x0 - dummy sync flag']
  #allocation44 [shape = 's32[]', space=sflag, size = 0x4, offset = 0, fixed_abs, tag = 'sflag constant byte address 0x0 - dummy sync flag']
  #allocation45 [shape = 's32[]', space=sflag, size = 0x4, offset = 0, fixed_abs, tag = 'sflag constant byte address 0x0 - dummy sync flag']
  #allocation46 [shape = 's32[]', space=sflag, size = 0x4, offset = 0, fixed_abs, tag = 'sflag constant byte address 0x0 - dummy sync flag']
  %s0 = inlined_call_operand.hbm [shape: f32[80,256], index: 0, kind: input, shape index: {}]
  %s1 = inlined_call_operand.hbm [shape: f32[80,256], index: 1, kind: input, shape index: {}]
  %s2 = inlined_call_operand.hbm [shape: f32[80,256], index: 2, kind: input, shape index: {}]
  %s3 = inlined_call_operand.hbm [shape: f32[80,256], index: 3, kind: input, shape index: {}]
  %s4 = inlined_call_operand.hbm [shape: f32[80,256], index: 4, kind: input, shape index: {}]
  %s5 = inlined_call_operand.hbm [shape: f32[80,256], index: 5, kind: input, shape index: {}]
  %s6 = inlined_call_operand.hbm [shape: f32[80,256], index: 6, kind: input, shape index: {}]
  %s7 = inlined_call_operand.hbm [shape: f32[64,256], index: 7, kind: output, shape index: {0}]
  %s8 = inlined_call_operand.hbm [shape: f32[64,256], index: 8, kind: output, shape index: {1}]
  %s9 = inlined_call_operand.hbm [shape: f32[64,256], index: 9, kind: output, shape index: {2}]
  %s10 = inlined_call_operand.hbm [shape: f32[64,256], index: 10, kind: output, shape index: {3}]
  %11 = xla_tuple %s7, %s8, %s9, %s10
  %s12 = sld [smem:[#allocation0]]
  $region113: #{tpu_custom_call.1} parent=0
    _
  %s14 = ssub.s32 1, %s12
  %s15 = scalar_select 0, %s14, %s12
  $region1: #{tpu_custom_call.1} parent=0
    #allocation10 [shape = 'u8[16384]{0}', space=vmem, size = 0x4000, scoped, tag = 'output window, operand 0']
    #allocation11 [shape = 's32[2]{0}', space=sflag, size = 0x8, scoped, tag = 'scoped memory for tpu_custom_call.1']
    #allocation12 [shape = 'u8[16384]{0}', space=vmem, size = 0x4000, scoped, tag = 'output window, operand 1']
    #allocation13 [shape = 's32[2]{0}', space=sflag, size = 0x8, scoped, tag = 'scoped memory for tpu_custom_call.1']
    #allocation14 [shape = 'u8[16384]{0}', space=vmem, size = 0x4000, scoped, tag = 'output window, operand 2']
    #allocation15 [shape = 'u8[16384]{0}', space=vmem, size = 0x4000, scoped, tag = 'output window, operand 3']
    #allocation16 [shape = 's32[2]{0}', space=sflag, size = 0x8, scoped, tag = 'scoped memory for tpu_custom_call.1']
    %16 = vsyncpa [#allocation11], 0
    %s17 = scalar_lea.sflag [#allocation11], 1
    %18 = vsyncpa %s17, 0
    %19 = vsyncpa [#allocation13], 0
    %s20 = scalar_lea.sflag [#allocation13], 1
    %21 = vsyncpa %s20, 0
    %22 = vsyncpa [#allocation16], 0
    %s23 = scalar_lea.sflag [#allocation16], 1
    %24 = vsyncpa %s23, 0
    loop: start=0, step=1, limit=9
    $region2: #{tpu_custom_call.1} parent=1 // loop_pre_header
      _
    $region3: #{tpu_custom_call.1} parent=1 // loop_header
      %s26 = sphi 0, %s30
      %p27 = scmp.ge.s32.totalorder %s26, 9
      %s32 = sphi 0, %s42
      %s33 = sphi 0, %s38
      %s34 = sphi 0, %s32
      %s35 = sphi 0, %s33
      %s49 = sphi 0, %s51
      %s52 = sphi 0, %s49
      %s62 = sphi 0, %s52
      %s72 = sphi 0, %s74
      %s75 = sphi 0, %s72
      %s85 = sphi 0, %s75
      %s95 = sphi 0, %s97
      %s98 = sphi 0, %s95
      %s108 = sphi 0, %s98
      %s118 = sphi 0, %s120
      %s121 = sphi 0, %s118
      %s131 = sphi 0, %s121
    $region4: #{tpu_custom_call.1} parent=1 // loop_header_branch
      %29 = sbr.rel (%p27) target = $region8
    $region5: #{tpu_custom_call.1} parent=1 // loop_body
      %s31 = ssub.s32 %s26, 1
      %s36 = sadd.s32 1, %s33
      %p37 = scmp.ge.s32.totalorder %s36, 4
      %s38 = scalar_select %p37, 0, %s36
      %s39 = sadd.s32 1, %s32
      %s40 = scalar_select %p37, %s39, %s32
      %p41 = scmp.ge.s32.totalorder %s40, 2
      %s42 = scalar_select %p41, 0, %s40
      %s43 = smul.u32 %s32, 4
      %s44 = sadd.s32 %s43, %s33
      %s45 = smul.u32 %s42, 4
      %s46 = sadd.s32 %s45, %s38
      %s47 = ssub.s32 %s44, %s46
      %p48 = scmp.eq.s32.totalorder %s47, 0
      %s50 = sadd.s32 %s49, 1
      %s51 = scalar_select %p48, %s49, %s50
      %p53 = pneg %p48
      %p54 = scmp.eq.s32.totalorder %s26, 7
      %p55 = por %p53, %p54
      %p56 = scmp.ne.s32.totalorder %s49, %s52
      %p57 = scmp.eq.s32.totalorder %s26, 0
      %p58 = por %p56, %p57
      %p59 = scmp.ne.s32.totalorder %s49, %s52
      %p60 = scmp.eq.s32.totalorder %s31, 7
      %p61 = por %p59, %p60
      %p63 = scmp.ne.s32.totalorder %s52, %s62
      %p64 = scmp.eq.s32.totalorder %s31, 0
      %p65 = por %p63, %p64
      %s66 = smul.u32 %s32, 4
      %s67 = sadd.s32 %s66, %s33
      %s68 = smul.u32 %s42, 4
      %s69 = sadd.s32 %s68, %s38
      %s70 = ssub.s32 %s67, %s69
      %p71 = scmp.eq.s32.totalorder %s70, 0
      %s73 = sadd.s32 %s72, 1
      %s74 = scalar_select %p71, %s72, %s73
      %p76 = pneg %p71
      %p77 = scmp.eq.s32.totalorder %s26, 7
      %p78 = por %p76, %p77
      %p79 = scmp.ne.s32.totalorder %s72, %s75
      %p80 = scmp.eq.s32.totalorder %s26, 0
      %p81 = por %p79, %p80
      %p82 = scmp.ne.s32.totalorder %s72, %s75
      %p83 = scmp.eq.s32.totalorder %s31, 7
      %p84 = por %p82, %p83
      %p86 = scmp.ne.s32.totalorder %s75, %s85
      %p87 = scmp.eq.s32.totalorder %s31, 0
      %p88 = por %p86, %p87
      %s89 = smul.u32 %s32, 4
      %s90 = sadd.s32 %s89, %s33
      %s91 = smul.u32 %s42, 4
      %s92 = sadd.s32 %s91, %s38
      %s93 = ssub.s32 %s90, %s92
      %p94 = scmp.eq.s32.totalorder %s93, 0
      %s96 = sadd.s32 %s95, 1
      %s97 = scalar_select %p94, %s95, %s96
      %p99 = pneg %p94
      %p100 = scmp.eq.s32.totalorder %s26, 7
      %p101 = por %p99, %p100
      %p102 = scmp.ne.s32.totalorder %s95, %s98
      %p103 = scmp.eq.s32.totalorder %s26, 0
      %p104 = por %p102, %p103
      %p105 = scmp.ne.s32.totalorder %s95, %s98
      %p106 = scmp.eq.s32.totalorder %s31, 7
      %p107 = por %p105, %p106
      %p109 = scmp.ne.s32.totalorder %s98, %s108
      %p110 = scmp.eq.s32.totalorder %s31, 0
      %p111 = por %p109, %p110
      %s112 = smul.u32 %s32, 4
      %s113 = sadd.s32 %s112, %s33
      %s114 = smul.u32 %s42, 4
      %s115 = sadd.s32 %s114, %s38
      %s116 = ssub.s32 %s113, %s115
      %p117 = scmp.eq.s32.totalorder %s116, 0
      %s119 = sadd.s32 %s118, 1
      %s120 = scalar_select %p117, %s118, %s119
      %p122 = pneg %p117
      %p123 = scmp.eq.s32.totalorder %s26, 7
      %p124 = por %p122, %p123
      %p125 = scmp.ne.s32.totalorder %s118, %s121
      %p126 = scmp.eq.s32.totalorder %s26, 0
      %p127 = por %p125, %p126
      %p128 = scmp.ne.s32.totalorder %s118, %s121
      %p129 = scmp.eq.s32.totalorder %s31, 7
      %p130 = por %p128, %p129
      %p132 = scmp.ne.s32.totalorder %s121, %s131
      %p133 = scmp.eq.s32.totalorder %s31, 0
      %p134 = por %p132, %p133
      %p135 = scmp.lt.s32.totalorder %s26, 8
      // Predicated region
      $region9: #{tpu_custom_call.1} parent=5 // pred_check
        %p136 = pneg %p135
      $region10: #{tpu_custom_call.1} parent=5 // pred_check_branch
        %138 = sbr.rel (%p136) target = $region12
      $region11: #{tpu_custom_call.1} parent=5 // pred_region
        %p139 = pneg %p58
        %p140 = pneg %p55
        %s141 = sand.u32 %s49, 1
        %s142 = scalar_lea.sflag [#allocation11], %s141
        %s143 = sand.u32 %s49, 1
        %s144 = smul.addr %s143, 16
        %s145 = scalar_lea.vmem [#allocation10], %s144
        %p146 = pneg %p81
        %p147 = pneg %p78
        %s148 = sand.u32 %s26, 1
        %s149 = scalar_lea.sflag [#allocation13], %s148
        %s150 = sand.u32 %s72, 1
        %s151 = smul.addr %s150, 16
        %s152 = scalar_lea.vmem [#allocation12], %s151
        %p153 = pneg %p104
        %p154 = pneg %p101
        %s155 = sand.u32 %s26, 1
        %s156 = scalar_lea.sflag [#allocation13], %s155
        %s157 = sand.u32 %s95, 1
        %s158 = smul.addr %s157, 16
        %s159 = scalar_lea.vmem [#allocation14], %s158
        %p160 = pneg %p127
        %p161 = pneg %p124
        %s162 = sand.u32 %s118, 1
        %s163 = scalar_lea.sflag [#allocation16], %s162
        %s164 = sand.u32 %s118, 1
        %s165 = smul.addr %s164, 16
        %s166 = scalar_lea.vmem [#allocation15], %s165
        %s167 = smul.u32 %s32, 4
        %s168 = sadd.s32 %s167, %s33
        %s169 = smul.u32 %s32, 4
        %s170 = sadd.s32 %s169, %s33
        %s171 = smul.u32 %s32, 4
        %s172 = sadd.s32 %s171, %s33
        %s173 = smul.u32 %s32, 4
        %s174 = sadd.s32 %s173, %s33
        %s175 = smul.u32 %s32, 4
        %s176 = sadd.s32 %s175, %s33
        %p177 = scmp.lt.s32.totalorder %s33, 0
        %s178 = ssub.s32 0, %s33
        %s179 = scalar_select %p177, %s178, %s33
        %s180 = sand.u32 %s179, 1
        %s181 = ssub.s32 0, %s180
        %s182 = scalar_select %p177, %s181, %s180
        %p183 = scmp.ne.s32.totalorder %s182, 0
        %p184 = scmp.lt.s32.totalorder %s182, 0
        %p185 = pnand %p184, %p183
        %p186 = pneg %p185
        %s187 = sadd.s32 %s182, 2
        %s188 = scalar_select %p186, %s187, %s182
        %p189 = scmp.eq.s32.totalorder %s33, 0
        // Predicated region
        $region13: #{tpu_custom_call.1} parent=11 // pred_check
          %p190 = pneg %p189
        $region14: #{tpu_custom_call.1} parent=11 // pred_check_branch
          %192 = sbr.rel (%p190) target = $region16
        $region15: #{tpu_custom_call.1} parent=11 // pred_region
          %s193 = smul.u32 %s176, 8
          %s194 = sshra.s32 %s193, 3
          %s195 = sand.u32 %s193, 7
          %s196 = smul.u32 %s194, 2
          %s197 = smul.addr %s196, 128
          %s198 = scalar_lea.hbm %s0, %s197
          %s199 = smul.u32 %s188, 6
          %s200 = smul.addr %s199, 8
          %s201 = scalar_lea.vmem [#allocation2], %s200
          %s202 = scalar_lea.sflag [#allocation9], %s188
          // Predicated region
          $region17: #{tpu_custom_call.1} parent=15 // pred_check
            _
          $region18: #{tpu_custom_call.1} parent=15 // pred_check_branch
            %204 = sbr.rel target = $region20
          $region19: #{tpu_custom_call.1} parent=15 // pred_region
            %205 = sst [smem:[#allocation19]] [#allocation18]
            %206 = sst [smem:[#allocation20]] [#allocation17]
          $region20: #{tpu_custom_call.1} parent=15 // pred_fallthru
            _
          %208 = shalt.err (0)
          %s210 = sshll.u32 %s201, 4
          %s211 = int_to_ptr.vmem [resolvable:$true] %s210
          %213 = dma.hbm_to_vmem [thread:$0]  %s198, 768, %s211, %s202
          %s214 = smul.addr %s196, 128
          %s215 = scalar_lea.hbm %s1, %s214
          %s216 = smul.addr %s199, 8
          %s217 = scalar_lea.vmem [#allocation3], %s216
          %s218 = sadd.s32 %s188, 2
          %s219 = scalar_lea.sflag [#allocation9], %s218
          // Predicated region
          $region21: #{tpu_custom_call.1} parent=15 // pred_check
            _
          $region22: #{tpu_custom_call.1} parent=15 // pred_check_branch
            %221 = sbr.rel target = $region24
          $region23: #{tpu_custom_call.1} parent=15 // pred_region
            %222 = sst [smem:[#allocation19]] [#allocation22]
            %223 = sst [smem:[#allocation20]] [#allocation21]
          $region24: #{tpu_custom_call.1} parent=15 // pred_fallthru
            _
          %225 = shalt.err (0)
          %s227 = sshll.u32 %s217, 4
          %s228 = int_to_ptr.vmem [resolvable:$true] %s227
          %230 = dma.hbm_to_vmem [thread:$0]  %s215, 768, %s228, %s219
          %s231 = smul.addr %s196, 128
          %s232 = scalar_lea.hbm %s2, %s231
          %s233 = smul.addr %s199, 8
          %s234 = scalar_lea.vmem [#allocation4], %s233
          %s235 = sadd.s32 %s188, 4
          %s236 = scalar_lea.sflag [#allocation9], %s235
          // Predicated region
          $region25: #{tpu_custom_call.1} parent=15 // pred_check
            _
          $region26: #{tpu_custom_call.1} parent=15 // pred_check_branch
            %238 = sbr.rel target = $region28
          $region27: #{tpu_custom_call.1} parent=15 // pred_region
            %239 = sst [smem:[#allocation19]] [#allocation24]
            %240 = sst [smem:[#allocation20]] [#allocation23]
          $region28: #{tpu_custom_call.1} parent=15 // pred_fallthru
            _
          %242 = shalt.err (0)
          %s244 = sshll.u32 %s234, 4
          %s245 = int_to_ptr.vmem [resolvable:$true] %s244
          %247 = dma.hbm_to_vmem [thread:$0]  %s232, 768, %s245, %s236
          %s248 = smul.addr %s196, 128
          %s249 = scalar_lea.hbm %s3, %s248
          %s250 = smul.addr %s199, 8
          %s251 = scalar_lea.vmem [#allocation5], %s250
          %s252 = sadd.s32 %s188, 6
          %s253 = scalar_lea.sflag [#allocation9], %s252
          // Predicated region
          $region29: #{tpu_custom_call.1} parent=15 // pred_check
            _
          $region30: #{tpu_custom_call.1} parent=15 // pred_check_branch
            %255 = sbr.rel target = $region32
          $region31: #{tpu_custom_call.1} parent=15 // pred_region
            %256 = sst [smem:[#allocation19]] [#allocation26]
            %257 = sst [smem:[#allocation20]] [#allocation25]
          $region32: #{tpu_custom_call.1} parent=15 // pred_fallthru
            _
          %259 = shalt.err (0)
          %s261 = sshll.u32 %s251, 4
          %s262 = int_to_ptr.vmem [resolvable:$true] %s261
          %264 = dma.hbm_to_vmem [thread:$0]  %s249, 768, %s262, %s253
          %s265 = smul.addr %s196, 128
          %s266 = scalar_lea.hbm %s4, %s265
          %s267 = smul.addr %s199, 8
          %s268 = scalar_lea.vmem [#allocation6], %s267
          %s269 = sadd.s32 %s188, 8
          %s270 = scalar_lea.sflag [#allocation9], %s269
          // Predicated region
          $region33: #{tpu_custom_call.1} parent=15 // pred_check
            _
          $region34: #{tpu_custom_call.1} parent=15 // pred_check_branch
            %272 = sbr.rel target = $region36
          $region35: #{tpu_custom_call.1} parent=15 // pred_region
            %273 = sst [smem:[#allocation19]] [#allocation28]
            %274 = sst [smem:[#allocation20]] [#allocation27]
          $region36: #{tpu_custom_call.1} parent=15 // pred_fallthru
            _
          %276 = shalt.err (0)
          %s278 = sshll.u32 %s268, 4
          %s279 = int_to_ptr.vmem [resolvable:$true] %s278
          %281 = dma.hbm_to_vmem [thread:$0]  %s266, 768, %s279, %s270
          %s282 = smul.addr %s196, 128
          %s283 = scalar_lea.hbm %s5, %s282
          %s284 = smul.addr %s199, 8
          %s285 = scalar_lea.vmem [#allocation7], %s284
          %s286 = sadd.s32 %s188, 10
          %s287 = scalar_lea.sflag [#allocation9], %s286
          // Predicated region
          $region37: #{tpu_custom_call.1} parent=15 // pred_check
            _
          $region38: #{tpu_custom_call.1} parent=15 // pred_check_branch
            %289 = sbr.rel target = $region40
          $region39: #{tpu_custom_call.1} parent=15 // pred_region
            %290 = sst [smem:[#allocation19]] [#allocation30]
            %291 = sst [smem:[#allocation20]] [#allocation29]
          $region40: #{tpu_custom_call.1} parent=15 // pred_fallthru
            _
          %293 = shalt.err (0)
          %s295 = sshll.u32 %s285, 4
          %s296 = int_to_ptr.vmem [resolvable:$true] %s295
          %298 = dma.hbm_to_vmem [thread:$0]  %s283, 768, %s296, %s287
          %s299 = smul.addr %s196, 128
          %s300 = scalar_lea.hbm %s6, %s299
          %s301 = smul.addr %s199, 8
          %s302 = scalar_lea.vmem [#allocation8], %s301
          %s303 = sadd.s32 %s188, 12
          %s304 = scalar_lea.sflag [#allocation9], %s303
          // Predicated region
          $region41: #{tpu_custom_call.1} parent=15 // pred_check
            _
          $region42: #{tpu_custom_call.1} parent=15 // pred_check_branch
            %306 = sbr.rel target = $region44
          $region43: #{tpu_custom_call.1} parent=15 // pred_region
            %307 = sst [smem:[#allocation19]] [#allocation32]
            %308 = sst [smem:[#allocation20]] [#allocation31]
          $region44: #{tpu_custom_call.1} parent=15 // pred_fallthru
            _
          %310 = shalt.err (0)
          %s312 = sshll.u32 %s302, 4
          %s313 = int_to_ptr.vmem [resolvable:$true] %s312
          %315 = dma.hbm_to_vmem [thread:$0]  %s300, 768, %s313, %s304
        $region16: #{tpu_custom_call.1} parent=11 // pred_fallthru
          _
        %p316 = scmp.lt.s32.totalorder %s33, 3
        // Predicated region
        $region45: #{tpu_custom_call.1} parent=11 // pred_check
          %p317 = pneg %p316
        $region46: #{tpu_custom_call.1} parent=11 // pred_check_branch
          %319 = sbr.rel (%p317) target = $region48
        $region47: #{tpu_custom_call.1} parent=11 // pred_region
          %s320 = sadd.s32 %s176, 1
          %s321 = ssub.s32 1, %s188
          %s322 = smul.u32 %s320, 8
          %s323 = sshra.s32 %s322, 3
          %s324 = sand.u32 %s322, 7
          %s325 = smul.u32 %s323, 2
          %s326 = smul.addr %s325, 128
          %s327 = scalar_lea.hbm %s0, %s326
          %s328 = smul.u32 %s321, 6
          %s329 = smul.addr %s328, 8
          %s330 = scalar_lea.vmem [#allocation2], %s329
          %s331 = scalar_lea.sflag [#allocation9], %s321
          // Predicated region
          $region49: #{tpu_custom_call.1} parent=47 // pred_check
            _
          $region50: #{tpu_custom_call.1} parent=47 // pred_check_branch
            %333 = sbr.rel target = $region52
          $region51: #{tpu_custom_call.1} parent=47 // pred_region
            %334 = sst [smem:[#allocation19]] [#allocation34]
            %335 = sst [smem:[#allocation20]] [#allocation33]
          $region52: #{tpu_custom_call.1} parent=47 // pred_fallthru
            _
          %337 = shalt.err (0)
          %s339 = sshll.u32 %s330, 4
          %s340 = int_to_ptr.vmem [resolvable:$true] %s339
          %342 = dma.hbm_to_vmem [thread:$0]  %s327, 768, %s340, %s331
          %s343 = smul.addr %s325, 128
          %s344 = scalar_lea.hbm %s1, %s343
          %s345 = smul.addr %s328, 8
          %s346 = scalar_lea.vmem [#allocation3], %s345
          %s347 = sadd.s32 %s321, 2
          %s348 = scalar_lea.sflag [#allocation9], %s347
          // Predicated region
          $region53: #{tpu_custom_call.1} parent=47 // pred_check
            _
          $region54: #{tpu_custom_call.1} parent=47 // pred_check_branch
            %350 = sbr.rel target = $region56
          $region55: #{tpu_custom_call.1} parent=47 // pred_region
            %351 = sst [smem:[#allocation19]] [#allocation36]
            %352 = sst [smem:[#allocation20]] [#allocation35]
          $region56: #{tpu_custom_call.1} parent=47 // pred_fallthru
            _
          %354 = shalt.err (0)
          %s356 = sshll.u32 %s346, 4
          %s357 = int_to_ptr.vmem [resolvable:$true] %s356
          %359 = dma.hbm_to_vmem [thread:$0]  %s344, 768, %s357, %s348
          %s360 = smul.addr %s325, 128
          %s361 = scalar_lea.hbm %s2, %s360
          %s362 = smul.addr %s328, 8
          %s363 = scalar_lea.vmem [#allocation4], %s362
          %s364 = sadd.s32 %s321, 4
          %s365 = scalar_lea.sflag [#allocation9], %s364
          // Predicated region
          $region57: #{tpu_custom_call.1} parent=47 // pred_check
            _
          $region58: #{tpu_custom_call.1} parent=47 // pred_check_branch
            %367 = sbr.rel target = $region60
          $region59: #{tpu_custom_call.1} parent=47 // pred_region
            %368 = sst [smem:[#allocation19]] [#allocation38]
            %369 = sst [smem:[#allocation20]] [#allocation37]
          $region60: #{tpu_custom_call.1} parent=47 // pred_fallthru
            _
          %371 = shalt.err (0)
          %s373 = sshll.u32 %s363, 4
          %s374 = int_to_ptr.vmem [resolvable:$true] %s373
          %376 = dma.hbm_to_vmem [thread:$0]  %s361, 768, %s374, %s365
          %s377 = smul.addr %s325, 128
          %s378 = scalar_lea.hbm %s3, %s377
          %s379 = smul.addr %s328, 8
          %s380 = scalar_lea.vmem [#allocation5], %s379
          %s381 = sadd.s32 %s321, 6
          %s382 = scalar_lea.sflag [#allocation9], %s381
          // Predicated region
          $region61: #{tpu_custom_call.1} parent=47 // pred_check
            _
          $region62: #{tpu_custom_call.1} parent=47 // pred_check_branch
            %384 = sbr.rel target = $region64
          $region63: #{tpu_custom_call.1} parent=47 // pred_region
            %385 = sst [smem:[#allocation19]] [#allocation40]
            %386 = sst [smem:[#allocation20]] [#allocation39]
          $region64: #{tpu_custom_call.1} parent=47 // pred_fallthru
            _
          %388 = shalt.err (0)
          %s390 = sshll.u32 %s380, 4
          %s391 = int_to_ptr.vmem [resolvable:$true] %s390
          %393 = dma.hbm_to_vmem [thread:$0]  %s378, 768, %s391, %s382
          %s394 = smul.addr %s325, 128
          %s395 = scalar_lea.hbm %s4, %s394
          %s396 = smul.addr %s328, 8
          %s397 = scalar_lea.vmem [#allocation6], %s396
          %s398 = sadd.s32 %s321, 8
          %s399 = scalar_lea.sflag [#allocation9], %s398
          // Predicated region
          $region65: #{tpu_custom_call.1} parent=47 // pred_check
            _
          $region66: #{tpu_custom_call.1} parent=47 // pred_check_branch
            %401 = sbr.rel target = $region68
          $region67: #{tpu_custom_call.1} parent=47 // pred_region
            %402 = sst [smem:[#allocation19]] [#allocation42]
            %403 = sst [smem:[#allocation20]] [#allocation41]
          $region68: #{tpu_custom_call.1} parent=47 // pred_fallthru
            _
          %405 = shalt.err (0)
          %s407 = sshll.u32 %s397, 4
          %s408 = int_to_ptr.vmem [resolvable:$true] %s407
          %410 = dma.hbm_to_vmem [thread:$0]  %s395, 768, %s408, %s399
          %s411 = smul.addr %s325, 128
          %s412 = scalar_lea.hbm %s5, %s411
          %s413 = smul.addr %s328, 8
          %s414 = scalar_lea.vmem [#allocation7], %s413
          %s415 = sadd.s32 %s321, 10
          %s416 = scalar_lea.sflag [#allocation9], %s415
          // Predicated region
          $region69: #{tpu_custom_call.1} parent=47 // pred_check
            _
          $region70: #{tpu_custom_call.1} parent=47 // pred_check_branch
            %418 = sbr.rel target = $region72
          $region71: #{tpu_custom_call.1} parent=47 // pred_region
            %419 = sst [smem:[#allocation19]] [#allocation44]
            %420 = sst [smem:[#allocation20]] [#allocation43]
          $region72: #{tpu_custom_call.1} parent=47 // pred_fallthru
            _
          %422 = shalt.err (0)
          %s424 = sshll.u32 %s414, 4
          %s425 = int_to_ptr.vmem [resolvable:$true] %s424
          %427 = dma.hbm_to_vmem [thread:$0]  %s412, 768, %s425, %s416
          %s428 = smul.addr %s325, 128
          %s429 = scalar_lea.hbm %s6, %s428
          %s430 = smul.addr %s328, 8
          %s431 = scalar_lea.vmem [#allocation8], %s430
          %s432 = sadd.s32 %s321, 12
          %s433 = scalar_lea.sflag [#allocation9], %s432
          // Predicated region
          $region73: #{tpu_custom_call.1} parent=47 // pred_check
            _
          $region74: #{tpu_custom_call.1} parent=47 // pred_check_branch
            %435 = sbr.rel target = $region76
          $region75: #{tpu_custom_call.1} parent=47 // pred_region
            %436 = sst [smem:[#allocation19]] [#allocation46]
            %437 = sst [smem:[#allocation20]] [#allocation45]
          $region76: #{tpu_custom_call.1} parent=47 // pred_fallthru
            _
          %439 = shalt.err (0)
          %s441 = sshll.u32 %s431, 4
          %s442 = int_to_ptr.vmem [resolvable:$true] %s441
          %444 = dma.hbm_to_vmem [thread:$0]  %s429, 768, %s442, %s433
        $region48: #{tpu_custom_call.1} parent=11 // pred_fallthru
          _
        %s445 = smul.u32 %s188, 6
        %s446 = smul.addr %s445, 8
        %s447 = scalar_lea.vmem [#allocation2], %s446
        %s448 = scalar_lea.sflag [#allocation9], %s188
        %s449 = smul.u32 8, 3
        %s450 = smul.u32 %s449, 2
        %s451 = sshll.u32 %s450, 4
        %452 = dma.done %s448, %s451
        %s453 = smul.addr %s445, 8
        %s454 = scalar_lea.vmem [#allocation3], %s453
        %s455 = sadd.s32 %s188, 2
        %s456 = scalar_lea.sflag [#allocation9], %s455
        %s457 = sshll.u32 %s450, 4
        %458 = dma.done %s456, %s457
        %s459 = smul.addr %s445, 8
        %s460 = scalar_lea.vmem [#allocation4], %s459
        %s461 = sadd.s32 %s188, 4
        %s462 = scalar_lea.sflag [#allocation9], %s461
        %s463 = sshll.u32 %s450, 4
        %464 = dma.done %s462, %s463
        %s465 = smul.addr %s445, 8
        %s466 = scalar_lea.vmem [#allocation5], %s465
        %s467 = sadd.s32 %s188, 6
        %s468 = scalar_lea.sflag [#allocation9], %s467
        %s469 = sshll.u32 %s450, 4
        %470 = dma.done %s468, %s469
        %s471 = smul.addr %s445, 8
        %s472 = scalar_lea.vmem [#allocation6], %s471
        %s473 = sadd.s32 %s188, 8
        %s474 = scalar_lea.sflag [#allocation9], %s473
        %s475 = sshll.u32 %s450, 4
        %476 = dma.done %s474, %s475
        %s477 = smul.addr %s445, 8
        %s478 = scalar_lea.vmem [#allocation7], %s477
        %s479 = sadd.s32 %s188, 10
        %s480 = scalar_lea.sflag [#allocation9], %s479
        %s481 = sshll.u32 %s450, 4
        %482 = dma.done %s480, %s481
        %s483 = smul.addr %s445, 8
        %s484 = scalar_lea.vmem [#allocation8], %s483
        %s485 = sadd.s32 %s188, 12
        %s486 = scalar_lea.sflag [#allocation9], %s485
        %s487 = sshll.u32 %s450, 4
        %488 = dma.done %s486, %s487
        %v489 = vld [vmem:[%s447] sm:$0xff]
        %v490 = vld [vmem:[%s447 + $0x8] sm:$0xff]
        %v491 = vld [vmem:[%s447 + $0x10] sm:$0xff]
        %v492 = vld [vmem:[%s447 + $0x18] sm:$0xff]
        %v493 = vld [vmem:[%s447 + $0x20] sm:$0xff]
        %v494 = vld [vmem:[%s447 + $0x28] sm:$0xff]
        %v495 = vld [vmem:[%s454] sm:$0xff]
        %v496 = vld [vmem:[%s454 + $0x8] sm:$0xff]
        %v497 = vld [vmem:[%s454 + $0x10] sm:$0xff]
        %v498 = vld [vmem:[%s454 + $0x18] sm:$0xff]
        %v499 = vld [vmem:[%s454 + $0x20] sm:$0xff]
        %v500 = vld [vmem:[%s454 + $0x28] sm:$0xff]
        %v501 = vld [vmem:[%s460] sm:$0xff]
        %v502 = vld [vmem:[%s460 + $0x8] sm:$0xff]
        %v503 = vld [vmem:[%s460 + $0x10] sm:$0xff]
        %v504 = vld [vmem:[%s460 + $0x18] sm:$0xff]
        %v505 = vld [vmem:[%s460 + $0x20] sm:$0xff]
        %v506 = vld [vmem:[%s460 + $0x28] sm:$0xff]
        %v507 = vld [vmem:[%s466] sm:$0xff]
        %v508 = vld [vmem:[%s466 + $0x8] sm:$0xff]
        %v509 = vld [vmem:[%s466 + $0x10] sm:$0xff]
        %v510 = vld [vmem:[%s466 + $0x18] sm:$0xff]
        %v511 = vld [vmem:[%s466 + $0x20] sm:$0xff]
        %v512 = vld [vmem:[%s466 + $0x28] sm:$0xff]
        %v513 = vld [vmem:[%s472] sm:$0xff]
        %v514 = vld [vmem:[%s472 + $0x8] sm:$0xff]
        %v515 = vld [vmem:[%s472 + $0x10] sm:$0xff]
        %v516 = vld [vmem:[%s472 + $0x18] sm:$0xff]
        %v517 = vld [vmem:[%s472 + $0x20] sm:$0xff]
        %v518 = vld [vmem:[%s472 + $0x28] sm:$0xff]
        %v519 = vld [vmem:[%s478] sm:$0xff]
        %v520 = vld [vmem:[%s478 + $0x8] sm:$0xff]
        %v521 = vld [vmem:[%s478 + $0x10] sm:$0xff]
        %v522 = vld [vmem:[%s478 + $0x18] sm:$0xff]
        %v523 = vld [vmem:[%s478 + $0x20] sm:$0xff]
        %v524 = vld [vmem:[%s478 + $0x28] sm:$0xff]
        %v525 = vld [vmem:[%s484] sm:$0xff]
        %v526 = vld [vmem:[%s484 + $0x8] sm:$0xff]
        %v527 = vld [vmem:[%s484 + $0x10] sm:$0xff]
        %v528 = vld [vmem:[%s484 + $0x18] sm:$0xff]
        %v529 = vld [vmem:[%s484 + $0x20] sm:$0xff]
        %v530 = vld [vmem:[%s484 + $0x28] sm:$0xff]
        %v531 = vlaneseq
        %v532 = vshrl.u32 %v531, 7
        %v533 = vadd.s32 %v532, 8
        %v534 = vadd.s32 %v532, 16
        %v535 = vlaneseq
        %v536 = vand.u32 %v535, 127
        %v537 = vadd.s32 %v536, 128
        %s538 = smul.u32 %s176, 8
        %s539 = ssub.s32 %s538, 8
        %v540 = vstv %s539
        %v541 = vadd.s32 %v532, %v540
        %v542 = vadd.s32 %v533, %v540
        %v543 = vadd.s32 %v534, %v540
        %vm544 = vcmp.eq.s32.totalorder %v541, 0
        %vm545 = vcmp.eq.s32.totalorder %v542, 0
        %vm546 = vcmp.eq.s32.totalorder %v543, 0
        %vm547 = vcmp.eq.s32.totalorder %v541, 63
        %vm548 = vcmp.eq.s32.totalorder %v542, 63
        %vm549 = vcmp.eq.s32.totalorder %v543, 63
        %vm550 = vcmp.eq.s32.totalorder %v536, 0
        %vm551 = vcmp.eq.s32.totalorder %v537, 0
        %vm552 = vcmp.eq.s32.totalorder %v536, 255
        %vm553 = vcmp.eq.s32.totalorder %v537, 255
        %554 = vrot.lane.b32.xlu0 %v489, 1
        %v555 = vpop.permute.xlu0 %554
        %556 = vrot.lane.b32.xlu0 %v491, 1
        %v557 = vpop.permute.xlu0 %556
        %558 = vrot.lane.b32.xlu0 %v493, 1
        %v559 = vpop.permute.xlu0 %558
        %560 = vrot.lane.b32.xlu0 %v490, 1
        %v561 = vpop.permute.xlu0 %560
        %562 = vrot.lane.b32.xlu0 %v492, 1
        %v563 = vpop.permute.xlu0 %562
        %564 = vrot.lane.b32.xlu0 %v494, 1
        %v565 = vpop.permute.xlu0 %564
        %vm566 = vcmp.lt.s32.totalorder %v536, 1
        %v567 = vsel %vm566, %v555, %v561
        %v568 = vsel %vm566, %v557, %v563
        %v569 = vsel %vm566, %v559, %v565
        %v570 = vsel %vm566, %v561, %v555
        %v571 = vsel %vm566, %v563, %v557
        %v572 = vsel %vm566, %v565, %v559
        %573 = vrot.lane.b32.xlu0 %v489, 127
        %v574 = vpop.permute.xlu0 %573
        %575 = vrot.lane.b32.xlu0 %v491, 127
        %v576 = vpop.permute.xlu0 %575
        %577 = vrot.lane.b32.xlu0 %v493, 127
        %v578 = vpop.permute.xlu0 %577
        %579 = vrot.lane.b32.xlu0 %v490, 127
        %v580 = vpop.permute.xlu0 %579
        %581 = vrot.lane.b32.xlu0 %v492, 127
        %v582 = vpop.permute.xlu0 %581
        %583 = vrot.lane.b32.xlu0 %v494, 127
        %v584 = vpop.permute.xlu0 %583
        %vm585 = vcmp.lt.s32.totalorder %v536, 127
        %v586 = vsel %vm585, %v574, %v580
        %v587 = vsel %vm585, %v576, %v582
        %v588 = vsel %vm585, %v578, %v584
        %v589 = vsel %vm585, %v580, %v574
        %v590 = vsel %vm585, %v582, %v576
        %v591 = vsel %vm585, %v584, %v578
        %v592 = vsel %vm550, 0.0, %v570
        %v593 = vsel %vm551, 0.0, %v567
        %v594 = vsel %vm550, 0.0, %v571
        %v595 = vsel %vm551, 0.0, %v568
        %v596 = vsel %vm550, 0.0, %v572
        %v597 = vsel %vm551, 0.0, %v569
        %v598 = vsel %vm552, 0.0, %v586
        %v599 = vsel %vm553, 0.0, %v589
        %v600 = vsel %vm552, 0.0, %v587
        %v601 = vsel %vm553, 0.0, %v590
        %v602 = vsel %vm552, 0.0, %v588
        %v603 = vsel %vm553, 0.0, %v591
        %v604 = vadd.f32 %v592, %v489
        %v605 = vadd.f32 %v593, %v490
        %v606 = vadd.f32 %v594, %v491
        %v607 = vadd.f32 %v595, %v492
        %v608 = vadd.f32 %v596, %v493
        %v609 = vadd.f32 %v597, %v494
        %v610 = vadd.f32 %v604, %v598
        %v611 = vadd.f32 %v605, %v599
        %v612 = vadd.f32 %v606, %v600
        %v613 = vadd.f32 %v607, %v601
        %v614 = vadd.f32 %v608, %v602
        %v615 = vadd.f32 %v609, %v603
        %v616 = vsub.f32 %v592, %v598
        %v617 = vsub.f32 %v593, %v599
        %v618 = vsub.f32 %v594, %v600
        %v619 = vsub.f32 %v595, %v601
        %v620 = vsub.f32 %v596, %v602
        %v621 = vsub.f32 %v597, %v603
        %v622 = vadd.f32 %v592, %v598
        %v623 = vadd.f32 %v593, %v599
        %v624 = vadd.f32 %v594, %v600
        %v625 = vadd.f32 %v595, %v601
        %v626 = vadd.f32 %v596, %v602
        %v627 = vadd.f32 %v597, %v603
        %v628 = vmul.f32 %v622, 0.083333336
        %v629 = vmul.f32 %v623, 0.083333336
        %v630 = vmul.f32 %v624, 0.083333336
        %v631 = vmul.f32 %v625, 0.083333336
        %v632 = vmul.f32 %v626, 0.083333336
        %v633 = vmul.f32 %v627, 0.083333336
        %v634 = vmul.f32 %v489, 0.33333334
        %v635 = vmul.f32 %v490, 0.33333334
        %v636 = vmul.f32 %v491, 0.33333334
        %v637 = vmul.f32 %v492, 0.33333334
        %v638 = vmul.f32 %v493, 0.33333334
        %v639 = vmul.f32 %v494, 0.33333334
        %v640 = vadd.f32 %v628, %v634
        %v641 = vadd.f32 %v629, %v635
        %v642 = vadd.f32 %v630, %v636
        %v643 = vadd.f32 %v631, %v637
        %v644 = vadd.f32 %v632, %v638
        %v645 = vadd.f32 %v633, %v639
        %v646 = vrot.slane %v610, 7
        %v647 = vrot.slane %v611, 7
        %v648 = vrot.slane %v612, 7
        %v649 = vrot.slane %v613, 7
        %v650 = vrot.slane %v614, 7
        %v651 = vrot.slane %v615, 7
        %vm652 = vcmp.lt.s32.totalorder %v532, 1
        %v653 = vsel %vm652, %v648, %v650
        %v654 = vsel %vm652, %v649, %v651
        %v655 = vsel %vm652, %v646, %v648
        %v656 = vsel %vm652, %v647, %v649
        %v657 = vsel %vm652, %v650, %v646
        %v658 = vsel %vm652, %v651, %v647
        %v659 = vrot.slane %v610, 1
        %v660 = vrot.slane %v611, 1
        %v661 = vrot.slane %v612, 1
        %v662 = vrot.slane %v613, 1
        %v663 = vrot.slane %v614, 1
        %v664 = vrot.slane %v615, 1
        %vm665 = vcmp.lt.s32.totalorder %v532, 7
        %v666 = vsel %vm665, %v661, %v663
        %v667 = vsel %vm665, %v662, %v664
        %v668 = vsel %vm665, %v659, %v661
        %v669 = vsel %vm665, %v660, %v662
        %v670 = vsel %vm665, %v663, %v659
        %v671 = vsel %vm665, %v664, %v660
        %v672 = vsel %vm544, %v610, %v657
        %v673 = vsel %vm544, %v611, %v658
        %v674 = vsel %vm545, %v612, %v655
        %v675 = vsel %vm545, %v613, %v656
        %v676 = vsel %vm546, %v614, %v653
        %v677 = vsel %vm546, %v615, %v654
        %v678 = vsel %vm547, %v610, %v668
        %v679 = vsel %vm547, %v611, %v669
        %v680 = vsel %vm548, %v612, %v666
        %v681 = vsel %vm548, %v613, %v667
        %v682 = vsel %vm549, %v614, %v670
        %v683 = vsel %vm549, %v615, %v671
        %v684 = vrot.slane %v616, 7
        %v685 = vrot.slane %v617, 7
        %v686 = vrot.slane %v618, 7
        %v687 = vrot.slane %v619, 7
        %v688 = vrot.slane %v620, 7
        %v689 = vrot.slane %v621, 7
        %v690 = vsel %vm652, %v686, %v688
        %v691 = vsel %vm652, %v687, %v689
        %v692 = vsel %vm652, %v684, %v686
        %v693 = vsel %vm652, %v685, %v687
        %v694 = vsel %vm652, %v688, %v684
        %v695 = vsel %vm652, %v689, %v685
        %v696 = vrot.slane %v616, 1
        %v697 = vrot.slane %v617, 1
        %v698 = vrot.slane %v618, 1
        %v699 = vrot.slane %v619, 1
        %v700 = vrot.slane %v620, 1
        %v701 = vrot.slane %v621, 1
        %v702 = vsel %vm665, %v698, %v700
        %v703 = vsel %vm665, %v699, %v701
        %v704 = vsel %vm665, %v696, %v698
        %v705 = vsel %vm665, %v697, %v699
        %v706 = vsel %vm665, %v700, %v696
        %v707 = vsel %vm665, %v701, %v697
        %v708 = vsel %vm544, %v616, %v694
        %v709 = vsel %vm544, %v617, %v695
        %v710 = vsel %vm545, %v618, %v692
        %v711 = vsel %vm545, %v619, %v693
        %v712 = vsel %vm546, %v620, %v690
        %v713 = vsel %vm546, %v621, %v691
        %v714 = vsel %vm547, %v616, %v704
        %v715 = vsel %vm547, %v617, %v705
        %v716 = vsel %vm548, %v618, %v702
        %v717 = vsel %vm548, %v619, %v703
        %v718 = vsel %vm549, %v620, %v706
        %v719 = vsel %vm549, %v621, %v707
        %v720 = vrot.slane %v640, 7
        %v721 = vrot.slane %v641, 7
        %v722 = vrot.slane %v642, 7
        %v723 = vrot.slane %v643, 7
        %v724 = vrot.slane %v644, 7
        %v725 = vrot.slane %v645, 7
        %v726 = vsel %vm652, %v722, %v724
        %v727 = vsel %vm652, %v723, %v725
        %v728 = vsel %vm652, %v720, %v722
        %v729 = vsel %vm652, %v721, %v723
        %v730 = vsel %vm652, %v724, %v720
        %v731 = vsel %vm652, %v725, %v721
        %v732 = vrot.slane %v640, 1
        %v733 = vrot.slane %v641, 1
        %v734 = vrot.slane %v642, 1
        %v735 = vrot.slane %v643, 1
        %v736 = vrot.slane %v644, 1
        %v737 = vrot.slane %v645, 1
        %v738 = vsel %vm665, %v734, %v736
        %v739 = vsel %vm665, %v735, %v737
        %v740 = vsel %vm665, %v732, %v734
        %v741 = vsel %vm665, %v733, %v735
        %v742 = vsel %vm665, %v736, %v732
        %v743 = vsel %vm665, %v737, %v733
        %v744 = vsel %vm544, %v640, %v730
        %v745 = vsel %vm544, %v641, %v731
        %v746 = vsel %vm545, %v642, %v728
        %v747 = vsel %vm545, %v643, %v729
        %v748 = vsel %vm546, %v644, %v726
        %v749 = vsel %vm546, %v645, %v727
        %v750 = vsel %vm547, %v640, %v740
        %v751 = vsel %vm547, %v641, %v741
        %v752 = vsel %vm548, %v642, %v738
        %v753 = vsel %vm548, %v643, %v739
        %v754 = vsel %vm549, %v644, %v742
        %v755 = vsel %vm549, %v645, %v743
        %v756 = vadd.f32 %v672, %v610
        %v757 = vadd.f32 %v673, %v611
        %v758 = vadd.f32 %v674, %v612
        %v759 = vadd.f32 %v675, %v613
        %v760 = vadd.f32 %v676, %v614
        %v761 = vadd.f32 %v677, %v615
        %v762 = vadd.f32 %v756, %v678
        %v763 = vadd.f32 %v757, %v679
        %v764 = vadd.f32 %v758, %v680
        %v765 = vadd.f32 %v759, %v681
        %v766 = vadd.f32 %v760, %v682
        %v767 = vadd.f32 %v761, %v683
        %v768 = vmul.f32 %v762, 0.33333334
        %v769 = vmul.f32 %v763, 0.33333334
        %v770 = vmul.f32 %v764, 0.33333334
        %v771 = vmul.f32 %v765, 0.33333334
        %v772 = vmul.f32 %v766, 0.33333334
        %v773 = vmul.f32 %v767, 0.33333334
        %v774 = vmul.f32 %v489, 3.0
        %v775 = vmul.f32 %v490, 3.0
        %v776 = vmul.f32 %v491, 3.0
        %v777 = vmul.f32 %v492, 3.0
        %v778 = vmul.f32 %v493, 3.0
        %v779 = vmul.f32 %v494, 3.0
        %v780 = vsub.f32 %v768, %v774
        %v781 = vsub.f32 %v769, %v775
        %v782 = vsub.f32 %v770, %v776
        %v783 = vsub.f32 %v771, %v777
        %v784 = vsub.f32 %v772, %v778
        %v785 = vsub.f32 %v773, %v779
        %v786 = vadd.f32 %v708, %v714
        %v787 = vadd.f32 %v709, %v715
        %v788 = vadd.f32 %v710, %v716
        %v789 = vadd.f32 %v711, %v717
        %v790 = vadd.f32 %v712, %v718
        %v791 = vadd.f32 %v713, %v719
        %v792 = vmul.f32 %v786, 0.083333336
        %v793 = vmul.f32 %v787, 0.083333336
        %v794 = vmul.f32 %v788, 0.083333336
        %v795 = vmul.f32 %v789, 0.083333336
        %v796 = vmul.f32 %v790, 0.083333336
        %v797 = vmul.f32 %v791, 0.083333336
        %v798 = vmul.f32 %v616, 0.33333334
        %v799 = vmul.f32 %v617, 0.33333334
        %v800 = vmul.f32 %v618, 0.33333334
        %v801 = vmul.f32 %v619, 0.33333334
        %v802 = vmul.f32 %v620, 0.33333334
        %v803 = vmul.f32 %v621, 0.33333334
        %v804 = vadd.f32 %v792, %v798
        %v805 = vadd.f32 %v793, %v799
        %v806 = vadd.f32 %v794, %v800
        %v807 = vadd.f32 %v795, %v801
        %v808 = vadd.f32 %v796, %v802
        %v809 = vadd.f32 %v797, %v803
        %v810 = vsub.f32 %v750, %v744
        %v811 = vsub.f32 %v751, %v745
        %v812 = vsub.f32 %v752, %v746
        %v813 = vsub.f32 %v753, %v747
        %v814 = vsub.f32 %v754, %v748
        %v815 = vsub.f32 %v755, %v749
        %816 = vrot.lane.b32.xlu0 %v495, 1
        %v817 = vpop.permute.xlu0 %816
        %818 = vrot.lane.b32.xlu0 %v497, 1
        %v819 = vpop.permute.xlu0 %818
        %820 = vrot.lane.b32.xlu0 %v499, 1
        %v821 = vpop.permute.xlu0 %820
        %822 = vrot.lane.b32.xlu0 %v496, 1
        %v823 = vpop.permute.xlu0 %822
        %824 = vrot.lane.b32.xlu0 %v498, 1
        %v825 = vpop.permute.xlu0 %824
        %826 = vrot.lane.b32.xlu0 %v500, 1
        %v827 = vpop.permute.xlu0 %826
        %v828 = vsel %vm566, %v817, %v823
        %v829 = vsel %vm566, %v819, %v825
        %v830 = vsel %vm566, %v821, %v827
        %v831 = vsel %vm566, %v823, %v817
        %v832 = vsel %vm566, %v825, %v819
        %v833 = vsel %vm566, %v827, %v821
        %834 = vrot.lane.b32.xlu0 %v495, 127
        %v835 = vpop.permute.xlu0 %834
        %836 = vrot.lane.b32.xlu0 %v497, 127
        %v837 = vpop.permute.xlu0 %836
        %838 = vrot.lane.b32.xlu0 %v499, 127
        %v839 = vpop.permute.xlu0 %838
        %840 = vrot.lane.b32.xlu0 %v496, 127
        %v841 = vpop.permute.xlu0 %840
        %842 = vrot.lane.b32.xlu0 %v498, 127
        %v843 = vpop.permute.xlu0 %842
        %844 = vrot.lane.b32.xlu0 %v500, 127
        %v845 = vpop.permute.xlu0 %844
        %v846 = vsel %vm585, %v835, %v841
        %v847 = vsel %vm585, %v837, %v843
        %v848 = vsel %vm585, %v839, %v845
        %v849 = vsel %vm585, %v841, %v835
        %v850 = vsel %vm585, %v843, %v837
        %v851 = vsel %vm585, %v845, %v839
        %v852 = vsel %vm550, %v495, %v831
        %v853 = vsel %vm551, %v496, %v828
        %v854 = vsel %vm550, %v497, %v832
        %v855 = vsel %vm551, %v498, %v829
        %v856 = vsel %vm550, %v499, %v833
        %v857 = vsel %vm551, %v500, %v830
        %v858 = vsel %vm552, %v495, %v846
        %v859 = vsel %vm553, %v496, %v849
        %v860 = vsel %vm552, %v497, %v847
        %v861 = vsel %vm553, %v498, %v850
        %v862 = vsel %vm552, %v499, %v848
        %v863 = vsel %vm553, %v500, %v851
        %v864 = vadd.f32 %v852, %v495
        %v865 = vadd.f32 %v853, %v496
        %v866 = vadd.f32 %v854, %v497
        %v867 = vadd.f32 %v855, %v498
        %v868 = vadd.f32 %v856, %v499
        %v869 = vadd.f32 %v857, %v500
        %v870 = vadd.f32 %v864, %v858
        %v871 = vadd.f32 %v865, %v859
        %v872 = vadd.f32 %v866, %v860
        %v873 = vadd.f32 %v867, %v861
        %v874 = vadd.f32 %v868, %v862
        %v875 = vadd.f32 %v869, %v863
        %v876 = vsub.f32 %v852, %v858
        %v877 = vsub.f32 %v853, %v859
        %v878 = vsub.f32 %v854, %v860
        %v879 = vsub.f32 %v855, %v861
        %v880 = vsub.f32 %v856, %v862
        %v881 = vsub.f32 %v857, %v863
        %v882 = vadd.f32 %v852, %v858
        %v883 = vadd.f32 %v853, %v859
        %v884 = vadd.f32 %v854, %v860
        %v885 = vadd.f32 %v855, %v861
        %v886 = vadd.f32 %v856, %v862
        %v887 = vadd.f32 %v857, %v863
        %v888 = vmul.f32 %v882, 0.083333336
        %v889 = vmul.f32 %v883, 0.083333336
        %v890 = vmul.f32 %v884, 0.083333336
        %v891 = vmul.f32 %v885, 0.083333336
        %v892 = vmul.f32 %v886, 0.083333336
        %v893 = vmul.f32 %v887, 0.083333336
        %v894 = vmul.f32 %v495, 0.33333334
        %v895 = vmul.f32 %v496, 0.33333334
        %v896 = vmul.f32 %v497, 0.33333334
        %v897 = vmul.f32 %v498, 0.33333334
        %v898 = vmul.f32 %v499, 0.33333334
        %v899 = vmul.f32 %v500, 0.33333334
        %v900 = vadd.f32 %v888, %v894
        %v901 = vadd.f32 %v889, %v895
        %v902 = vadd.f32 %v890, %v896
        %v903 = vadd.f32 %v891, %v897
        %v904 = vadd.f32 %v892, %v898
        %v905 = vadd.f32 %v893, %v899
        %v906 = vrot.slane %v870, 7
        %v907 = vrot.slane %v871, 7
        %v908 = vrot.slane %v872, 7
        %v909 = vrot.slane %v873, 7
        %v910 = vrot.slane %v874, 7
        %v911 = vrot.slane %v875, 7
        %v912 = vsel %vm652, %v908, %v910
        %v913 = vsel %vm652, %v909, %v911
        %v914 = vsel %vm652, %v906, %v908
        %v915 = vsel %vm652, %v907, %v909
        %v916 = vsel %vm652, %v910, %v906
        %v917 = vsel %vm652, %v911, %v907
        %v918 = vrot.slane %v870, 1
        %v919 = vrot.slane %v871, 1
        %v920 = vrot.slane %v872, 1
        %v921 = vrot.slane %v873, 1
        %v922 = vrot.slane %v874, 1
        %v923 = vrot.slane %v875, 1
        %v924 = vsel %vm665, %v920, %v922
        %v925 = vsel %vm665, %v921, %v923
        %v926 = vsel %vm665, %v918, %v920
        %v927 = vsel %vm665, %v919, %v921
        %v928 = vsel %vm665, %v922, %v918
        %v929 = vsel %vm665, %v923, %v919
        %v930 = vsel %vm544, 0.0, %v916
        %v931 = vsel %vm544, 0.0, %v917
        %v932 = vsel %vm545, 0.0, %v914
        %v933 = vsel %vm545, 0.0, %v915
        %v934 = vsel %vm546, 0.0, %v912
        %v935 = vsel %vm546, 0.0, %v913
        %v936 = vsel %vm547, 0.0, %v926
        %v937 = vsel %vm547, 0.0, %v927
        %v938 = vsel %vm548, 0.0, %v924
        %v939 = vsel %vm548, 0.0, %v925
        %v940 = vsel %vm549, 0.0, %v928
        %v941 = vsel %vm549, 0.0, %v929
        %v942 = vrot.slane %v876, 7
        %v943 = vrot.slane %v877, 7
        %v944 = vrot.slane %v878, 7
        %v945 = vrot.slane %v879, 7
        %v946 = vrot.slane %v880, 7
        %v947 = vrot.slane %v881, 7
        %v948 = vsel %vm652, %v944, %v946
        %v949 = vsel %vm652, %v945, %v947
        %v950 = vsel %vm652, %v942, %v944
        %v951 = vsel %vm652, %v943, %v945
        %v952 = vsel %vm652, %v946, %v942
        %v953 = vsel %vm652, %v947, %v943
        %v954 = vrot.slane %v876, 1
        %v955 = vrot.slane %v877, 1
        %v956 = vrot.slane %v878, 1
        %v957 = vrot.slane %v879, 1
        %v958 = vrot.slane %v880, 1
        %v959 = vrot.slane %v881, 1
        %v960 = vsel %vm665, %v956, %v958
        %v961 = vsel %vm665, %v957, %v959
        %v962 = vsel %vm665, %v954, %v956
        %v963 = vsel %vm665, %v955, %v957
        %v964 = vsel %vm665, %v958, %v954
        %v965 = vsel %vm665, %v959, %v955
        %v966 = vsel %vm544, 0.0, %v952
        %v967 = vsel %vm544, 0.0, %v953
        %v968 = vsel %vm545, 0.0, %v950
        %v969 = vsel %vm545, 0.0, %v951
        %v970 = vsel %vm546, 0.0, %v948
        %v971 = vsel %vm546, 0.0, %v949
        %v972 = vsel %vm547, 0.0, %v962
        %v973 = vsel %vm547, 0.0, %v963
        %v974 = vsel %vm548, 0.0, %v960
        %v975 = vsel %vm548, 0.0, %v961
        %v976 = vsel %vm549, 0.0, %v964
        %v977 = vsel %vm549, 0.0, %v965
        %v978 = vrot.slane %v900, 7
        %v979 = vrot.slane %v901, 7
        %v980 = vrot.slane %v902, 7
        %v981 = vrot.slane %v903, 7
        %v982 = vrot.slane %v904, 7
        %v983 = vrot.slane %v905, 7
        %v984 = vsel %vm652, %v980, %v982
        %v985 = vsel %vm652, %v981, %v983
        %v986 = vsel %vm652, %v978, %v980
        %v987 = vsel %vm652, %v979, %v981
        %v988 = vsel %vm652, %v982, %v978
        %v989 = vsel %vm652, %v983, %v979
        %v990 = vrot.slane %v900, 1
        %v991 = vrot.slane %v901, 1
        %v992 = vrot.slane %v902, 1
        %v993 = vrot.slane %v903, 1
        %v994 = vrot.slane %v904, 1
        %v995 = vrot.slane %v905, 1
        %v996 = vsel %vm665, %v992, %v994
        %v997 = vsel %vm665, %v993, %v995
        %v998 = vsel %vm665, %v990, %v992
        %v999 = vsel %vm665, %v991, %v993
        %v1000 = vsel %vm665, %v994, %v990
        %v1001 = vsel %vm665, %v995, %v991
        %v1002 = vsel %vm544, 0.0, %v988
        %v1003 = vsel %vm544, 0.0, %v989
        %v1004 = vsel %vm545, 0.0, %v986
        %v1005 = vsel %vm545, 0.0, %v987
        %v1006 = vsel %vm546, 0.0, %v984
        %v1007 = vsel %vm546, 0.0, %v985
        %v1008 = vsel %vm547, 0.0, %v998
        %v1009 = vsel %vm547, 0.0, %v999
        %v1010 = vsel %vm548, 0.0, %v996
        %v1011 = vsel %vm548, 0.0, %v997
        %v1012 = vsel %vm549, 0.0, %v1000
        %v1013 = vsel %vm549, 0.0, %v1001
        %v1014 = vadd.f32 %v930, %v870
        %v1015 = vadd.f32 %v931, %v871
        %v1016 = vadd.f32 %v932, %v872
        %v1017 = vadd.f32 %v933, %v873
        %v1018 = vadd.f32 %v934, %v874
        %v1019 = vadd.f32 %v935, %v875
        %v1020 = vadd.f32 %v1014, %v936
        %v1021 = vadd.f32 %v1015, %v937
        %v1022 = vadd.f32 %v1016, %v938
        %v1023 = vadd.f32 %v1017, %v939
        %v1024 = vadd.f32 %v1018, %v940
        %v1025 = vadd.f32 %v1019, %v941
        %v1026 = vmul.f32 %v1020, 0.33333334
        %v1027 = vmul.f32 %v1021, 0.33333334
        %v1028 = vmul.f32 %v1022, 0.33333334
        %v1029 = vmul.f32 %v1023, 0.33333334
        %v1030 = vmul.f32 %v1024, 0.33333334
        %v1031 = vmul.f32 %v1025, 0.33333334
        %v1032 = vmul.f32 %v495, 3.0
        %v1033 = vmul.f32 %v496, 3.0
        %v1034 = vmul.f32 %v497, 3.0
        %v1035 = vmul.f32 %v498, 3.0
        %v1036 = vmul.f32 %v499, 3.0
        %v1037 = vmul.f32 %v500, 3.0
        %v1038 = vsub.f32 %v1026, %v1032
        %v1039 = vsub.f32 %v1027, %v1033
        %v1040 = vsub.f32 %v1028, %v1034
        %v1041 = vsub.f32 %v1029, %v1035
        %v1042 = vsub.f32 %v1030, %v1036
        %v1043 = vsub.f32 %v1031, %v1037
        %v1044 = vadd.f32 %v966, %v972
        %v1045 = vadd.f32 %v967, %v973
        %v1046 = vadd.f32 %v968, %v974
        %v1047 = vadd.f32 %v969, %v975
        %v1048 = vadd.f32 %v970, %v976
        %v1049 = vadd.f32 %v971, %v977
        %v1050 = vmul.f32 %v1044, 0.083333336
        %v1051 = vmul.f32 %v1045, 0.083333336
        %v1052 = vmul.f32 %v1046, 0.083333336
        %v1053 = vmul.f32 %v1047, 0.083333336
        %v1054 = vmul.f32 %v1048, 0.083333336
        %v1055 = vmul.f32 %v1049, 0.083333336
        %v1056 = vmul.f32 %v876, 0.33333334
        %v1057 = vmul.f32 %v877, 0.33333334
        %v1058 = vmul.f32 %v878, 0.33333334
        %v1059 = vmul.f32 %v879, 0.33333334
        %v1060 = vmul.f32 %v880, 0.33333334
        %v1061 = vmul.f32 %v881, 0.33333334
        %v1062 = vadd.f32 %v1050, %v1056
        %v1063 = vadd.f32 %v1051, %v1057
        %v1064 = vadd.f32 %v1052, %v1058
        %v1065 = vadd.f32 %v1053, %v1059
        %v1066 = vadd.f32 %v1054, %v1060
        %v1067 = vadd.f32 %v1055, %v1061
        %v1068 = vsub.f32 %v1008, %v1002
        %v1069 = vsub.f32 %v1009, %v1003
        %v1070 = vsub.f32 %v1010, %v1004
        %v1071 = vsub.f32 %v1011, %v1005
        %v1072 = vsub.f32 %v1012, %v1006
        %v1073 = vsub.f32 %v1013, %v1007
        %v1074 = vand.u32 2147483647, %v489
        %v1075 = vand.u32 2147483647, %v490
        %v1076 = vand.u32 2147483647, %v491
        %v1077 = vand.u32 2147483647, %v492
        %v1078 = vand.u32 2147483647, %v493
        %v1079 = vand.u32 2147483647, %v494
        %v1080 = vand.u32 2147483647, %v495
        %v1081 = vand.u32 2147483647, %v496
        %v1082 = vand.u32 2147483647, %v497
        %v1083 = vand.u32 2147483647, %v498
        %v1084 = vand.u32 2147483647, %v499
        %v1085 = vand.u32 2147483647, %v500
        %v1086 = vadd.f32 %v1074, %v1080
        %v1087 = vadd.f32 %v1075, %v1081
        %v1088 = vadd.f32 %v1076, %v1082
        %v1089 = vadd.f32 %v1077, %v1083
        %v1090 = vadd.f32 %v1078, %v1084
        %v1091 = vadd.f32 %v1079, %v1085
        %v1092 = vmul.f32 %v1086, 0.5
        %v1093 = vmul.f32 %v1087, 0.5
        %v1094 = vmul.f32 %v1088, 0.5
        %v1095 = vmul.f32 %v1089, 0.5
        %v1096 = vmul.f32 %v1090, 0.5
        %v1097 = vmul.f32 %v1091, 0.5
        %v1098 = vmul.f32 %v1092, %v780
        %v1099 = vmul.f32 %v1093, %v781
        %v1100 = vmul.f32 %v1094, %v782
        %v1101 = vmul.f32 %v1095, %v783
        %v1102 = vmul.f32 %v1096, %v784
        %v1103 = vmul.f32 %v1097, %v785
        %v1104 = vand.u32 2147483647, %v1098
        %v1105 = vand.u32 2147483647, %v1099
        %v1106 = vand.u32 2147483647, %v1100
        %v1107 = vand.u32 2147483647, %v1101
        %v1108 = vand.u32 2147483647, %v1102
        %v1109 = vand.u32 2147483647, %v1103
        %v1110 = vmul.f32 %v1104, 0.25
        %v1111 = vmul.f32 %v1105, 0.25
        %v1112 = vmul.f32 %v1106, 0.25
        %v1113 = vmul.f32 %v1107, 0.25
        %v1114 = vmul.f32 %v1108, 0.25
        %v1115 = vmul.f32 %v1109, 0.25
        %v1116 = vand.u32 2147483647, %v804
        %v1117 = vand.u32 2147483647, %v805
        %v1118 = vand.u32 2147483647, %v806
        %v1119 = vand.u32 2147483647, %v807
        %v1120 = vand.u32 2147483647, %v808
        %v1121 = vand.u32 2147483647, %v809
        %v1122 = vand.u32 2147483647, %v810
        %v1123 = vand.u32 2147483647, %v811
        %v1124 = vand.u32 2147483647, %v812
        %v1125 = vand.u32 2147483647, %v813
        %v1126 = vand.u32 2147483647, %v814
        %v1127 = vand.u32 2147483647, %v815
        %v1128 = vadd.f32 %v1116, %v1122
        %v1129 = vadd.f32 %v1117, %v1123
        %v1130 = vadd.f32 %v1118, %v1124
        %v1131 = vadd.f32 %v1119, %v1125
        %v1132 = vadd.f32 %v1120, %v1126
        %v1133 = vadd.f32 %v1121, %v1127
        %v1134 = vmul.f32 %v1128, 0.5
        %v1135 = vmul.f32 %v1129, 0.5
        %v1136 = vmul.f32 %v1130, 0.5
        %v1137 = vmul.f32 %v1131, 0.5
        %v1138 = vmul.f32 %v1132, 0.5
        %v1139 = vmul.f32 %v1133, 0.5
        %v1140 = vadd.f32 %v1134, 0.001
        %v1141 = vadd.f32 %v1135, 0.001
        %v1142 = vadd.f32 %v1136, 0.001
        %v1143 = vadd.f32 %v1137, 0.001
        %v1144 = vadd.f32 %v1138, 0.001
        %v1145 = vadd.f32 %v1139, 0.001
        %v1146 = vrcp.pop %v1140
        %v1147 = vrcp.pop %v1141
        %v1148 = vrcp.pop %v1142
        %v1149 = vrcp.pop %v1143
        %v1150 = vrcp.pop %v1144
        %v1151 = vrcp.pop %v1145
        %v1152 = vmul.f32 %v1110, %v1146
        %v1153 = vmul.f32 %v1111, %v1147
        %v1154 = vmul.f32 %v1112, %v1148
        %v1155 = vmul.f32 %v1113, %v1149
        %v1156 = vmul.f32 %v1114, %v1150
        %v1157 = vmul.f32 %v1115, %v1151
        %v1158 = vmul.f32 %v1092, %v1038
        %v1159 = vmul.f32 %v1093, %v1039
        %v1160 = vmul.f32 %v1094, %v1040
        %v1161 = vmul.f32 %v1095, %v1041
        %v1162 = vmul.f32 %v1096, %v1042
        %v1163 = vmul.f32 %v1097, %v1043
        %v1164 = vand.u32 2147483647, %v1158
        %v1165 = vand.u32 2147483647, %v1159
        %v1166 = vand.u32 2147483647, %v1160
        %v1167 = vand.u32 2147483647, %v1161
        %v1168 = vand.u32 2147483647, %v1162
        %v1169 = vand.u32 2147483647, %v1163
        %v1170 = vmul.f32 %v1164, 0.25
        %v1171 = vmul.f32 %v1165, 0.25
        %v1172 = vmul.f32 %v1166, 0.25
        %v1173 = vmul.f32 %v1167, 0.25
        %v1174 = vmul.f32 %v1168, 0.25
        %v1175 = vmul.f32 %v1169, 0.25
        %v1176 = vand.u32 2147483647, %v1062
        %v1177 = vand.u32 2147483647, %v1063
        %v1178 = vand.u32 2147483647, %v1064
        %v1179 = vand.u32 2147483647, %v1065
        %v1180 = vand.u32 2147483647, %v1066
        %v1181 = vand.u32 2147483647, %v1067
        %v1182 = vand.u32 2147483647, %v1068
        %v1183 = vand.u32 2147483647, %v1069
        %v1184 = vand.u32 2147483647, %v1070
        %v1185 = vand.u32 2147483647, %v1071
        %v1186 = vand.u32 2147483647, %v1072
        %v1187 = vand.u32 2147483647, %v1073
        %v1188 = vadd.f32 %v1176, %v1182
        %v1189 = vadd.f32 %v1177, %v1183
        %v1190 = vadd.f32 %v1178, %v1184
        %v1191 = vadd.f32 %v1179, %v1185
        %v1192 = vadd.f32 %v1180, %v1186
        %v1193 = vadd.f32 %v1181, %v1187
        %v1194 = vmul.f32 %v1188, 0.5
        %v1195 = vmul.f32 %v1189, 0.5
        %v1196 = vmul.f32 %v1190, 0.5
        %v1197 = vmul.f32 %v1191, 0.5
        %v1198 = vmul.f32 %v1192, 0.5
        %v1199 = vmul.f32 %v1193, 0.5
        %v1200 = vadd.f32 %v1194, 0.001
        %v1201 = vadd.f32 %v1195, 0.001
        %v1202 = vadd.f32 %v1196, 0.001
        %v1203 = vadd.f32 %v1197, 0.001
        %v1204 = vadd.f32 %v1198, 0.001
        %v1205 = vadd.f32 %v1199, 0.001
        %v1206 = vrcp.pop %v1200
        %v1207 = vrcp.pop %v1201
        %v1208 = vrcp.pop %v1202
        %v1209 = vrcp.pop %v1203
        %v1210 = vrcp.pop %v1204
        %v1211 = vrcp.pop %v1205
        %v1212 = vmul.f32 %v1170, %v1206
        %v1213 = vmul.f32 %v1171, %v1207
        %v1214 = vmul.f32 %v1172, %v1208
        %v1215 = vmul.f32 %v1173, %v1209
        %v1216 = vmul.f32 %v1174, %v1210
        %v1217 = vmul.f32 %v1175, %v1211
        %v1218 = vmin.f32 %v1152, 0.01
        %v1219 = vmin.f32 %v1153, 0.01
        %v1220 = vmin.f32 %v1154, 0.01
        %v1221 = vmin.f32 %v1155, 0.01
        %v1222 = vmin.f32 %v1156, 0.01
        %v1223 = vmin.f32 %v1157, 0.01
        %v1224 = vmin.f32 %v1212, 0.01
        %v1225 = vmin.f32 %v1213, 0.01
        %v1226 = vmin.f32 %v1214, 0.01
        %v1227 = vmin.f32 %v1215, 0.01
        %v1228 = vmin.f32 %v1216, 0.01
        %v1229 = vmin.f32 %v1217, 0.01
        %v1230 = vmul.f32 %v1152, %v780
        %v1231 = vmul.f32 %v1153, %v781
        %v1232 = vmul.f32 %v1154, %v782
        %v1233 = vmul.f32 %v1155, %v783
        %v1234 = vmul.f32 %v1156, %v784
        %v1235 = vmul.f32 %v1157, %v785
        %v1236 = vmul.f32 %v489, %v1218
        %v1237 = vmul.f32 %v490, %v1219
        %v1238 = vmul.f32 %v491, %v1220
        %v1239 = vmul.f32 %v492, %v1221
        %v1240 = vmul.f32 %v493, %v1222
        %v1241 = vmul.f32 %v494, %v1223
        %1242 = vrot.lane.b32.xlu0 %v1236, 1
        %v1243 = vpop.permute.xlu0 %1242
        %1244 = vrot.lane.b32.xlu0 %v1238, 1
        %v1245 = vpop.permute.xlu0 %1244
        %1246 = vrot.lane.b32.xlu0 %v1240, 1
        %v1247 = vpop.permute.xlu0 %1246
        %1248 = vrot.lane.b32.xlu0 %v1237, 1
        %v1249 = vpop.permute.xlu0 %1248
        %1250 = vrot.lane.b32.xlu0 %v1239, 1
        %v1251 = vpop.permute.xlu0 %1250
        %1252 = vrot.lane.b32.xlu0 %v1241, 1
        %v1253 = vpop.permute.xlu0 %1252
        %v1254 = vsel %vm566, %v1243, %v1249
        %v1255 = vsel %vm566, %v1245, %v1251
        %v1256 = vsel %vm566, %v1247, %v1253
        %v1257 = vsel %vm566, %v1249, %v1243
        %v1258 = vsel %vm566, %v1251, %v1245
        %v1259 = vsel %vm566, %v1253, %v1247
        %1260 = vrot.lane.b32.xlu0 %v1236, 127
        %v1261 = vpop.permute.xlu0 %1260
        %1262 = vrot.lane.b32.xlu0 %v1238, 127
        %v1263 = vpop.permute.xlu0 %1262
        %1264 = vrot.lane.b32.xlu0 %v1240, 127
        %v1265 = vpop.permute.xlu0 %1264
        %1266 = vrot.lane.b32.xlu0 %v1237, 127
        %v1267 = vpop.permute.xlu0 %1266
        %1268 = vrot.lane.b32.xlu0 %v1239, 127
        %v1269 = vpop.permute.xlu0 %1268
        %1270 = vrot.lane.b32.xlu0 %v1241, 127
        %v1271 = vpop.permute.xlu0 %1270
        %v1272 = vsel %vm585, %v1261, %v1267
        %v1273 = vsel %vm585, %v1263, %v1269
        %v1274 = vsel %vm585, %v1265, %v1271
        %v1275 = vsel %vm585, %v1267, %v1261
        %v1276 = vsel %vm585, %v1269, %v1263
        %v1277 = vsel %vm585, %v1271, %v1265
        %v1278 = vsel %vm550, 0.0, %v1257
        %v1279 = vsel %vm551, 0.0, %v1254
        %v1280 = vsel %vm550, 0.0, %v1258
        %v1281 = vsel %vm551, 0.0, %v1255
        %v1282 = vsel %vm550, 0.0, %v1259
        %v1283 = vsel %vm551, 0.0, %v1256
        %v1284 = vsel %vm552, 0.0, %v1272
        %v1285 = vsel %vm553, 0.0, %v1275
        %v1286 = vsel %vm552, 0.0, %v1273
        %v1287 = vsel %vm553, 0.0, %v1276
        %v1288 = vsel %vm552, 0.0, %v1274
        %v1289 = vsel %vm553, 0.0, %v1277
        %v1290 = vadd.f32 %v1278, %v1236
        %v1291 = vadd.f32 %v1279, %v1237
        %v1292 = vadd.f32 %v1280, %v1238
        %v1293 = vadd.f32 %v1281, %v1239
        %v1294 = vadd.f32 %v1282, %v1240
        %v1295 = vadd.f32 %v1283, %v1241
        %v1296 = vadd.f32 %v1290, %v1284
        %v1297 = vadd.f32 %v1291, %v1285
        %v1298 = vadd.f32 %v1292, %v1286
        %v1299 = vadd.f32 %v1293, %v1287
        %v1300 = vadd.f32 %v1294, %v1288
        %v1301 = vadd.f32 %v1295, %v1289
        %v1302 = vrot.slane %v1296, 7
        %v1303 = vrot.slane %v1297, 7
        %v1304 = vrot.slane %v1298, 7
        %v1305 = vrot.slane %v1299, 7
        %v1306 = vrot.slane %v1300, 7
        %v1307 = vrot.slane %v1301, 7
        %v1308 = vsel %vm652, %v1304, %v1306
        %v1309 = vsel %vm652, %v1305, %v1307
        %v1310 = vsel %vm652, %v1302, %v1304
        %v1311 = vsel %vm652, %v1303, %v1305
        %v1312 = vsel %vm652, %v1306, %v1302
        %v1313 = vsel %vm652, %v1307, %v1303
        %v1314 = vrot.slane %v1296, 1
        %v1315 = vrot.slane %v1297, 1
        %v1316 = vrot.slane %v1298, 1
        %v1317 = vrot.slane %v1299, 1
        %v1318 = vrot.slane %v1300, 1
        %v1319 = vrot.slane %v1301, 1
        %v1320 = vsel %vm665, %v1316, %v1318
        %v1321 = vsel %vm665, %v1317, %v1319
        %v1322 = vsel %vm665, %v1314, %v1316
        %v1323 = vsel %vm665, %v1315, %v1317
        %v1324 = vsel %vm665, %v1318, %v1314
        %v1325 = vsel %vm665, %v1319, %v1315
        %v1326 = vsel %vm544, 0.0, %v1312
        %v1327 = vsel %vm544, 0.0, %v1313
        %v1328 = vsel %vm545, 0.0, %v1310
        %v1329 = vsel %vm545, 0.0, %v1311
        %v1330 = vsel %vm546, 0.0, %v1308
        %v1331 = vsel %vm546, 0.0, %v1309
        %v1332 = vsel %vm547, 0.0, %v1322
        %v1333 = vsel %vm547, 0.0, %v1323
        %v1334 = vsel %vm548, 0.0, %v1320
        %v1335 = vsel %vm548, 0.0, %v1321
        %v1336 = vsel %vm549, 0.0, %v1324
        %v1337 = vsel %vm549, 0.0, %v1325
        %v1338 = vadd.f32 %v1326, %v1296
        %v1339 = vadd.f32 %v1327, %v1297
        %v1340 = vadd.f32 %v1328, %v1298
        %v1341 = vadd.f32 %v1329, %v1299
        %v1342 = vadd.f32 %v1330, %v1300
        %v1343 = vadd.f32 %v1331, %v1301
        %v1344 = vadd.f32 %v1338, %v1332
        %v1345 = vadd.f32 %v1339, %v1333
        %v1346 = vadd.f32 %v1340, %v1334
        %v1347 = vadd.f32 %v1341, %v1335
        %v1348 = vadd.f32 %v1342, %v1336
        %v1349 = vadd.f32 %v1343, %v1337
        %v1350 = vmul.f32 %v1344, 0.33333334
        %v1351 = vmul.f32 %v1345, 0.33333334
        %v1352 = vmul.f32 %v1346, 0.33333334
        %v1353 = vmul.f32 %v1347, 0.33333334
        %v1354 = vmul.f32 %v1348, 0.33333334
        %v1355 = vmul.f32 %v1349, 0.33333334
        %v1356 = vmul.f32 %v1236, 3.0
        %v1357 = vmul.f32 %v1237, 3.0
        %v1358 = vmul.f32 %v1238, 3.0
        %v1359 = vmul.f32 %v1239, 3.0
        %v1360 = vmul.f32 %v1240, 3.0
        %v1361 = vmul.f32 %v1241, 3.0
        %v1362 = vsub.f32 %v1350, %v1356
        %v1363 = vsub.f32 %v1351, %v1357
        %v1364 = vsub.f32 %v1352, %v1358
        %v1365 = vsub.f32 %v1353, %v1359
        %v1366 = vsub.f32 %v1354, %v1360
        %v1367 = vsub.f32 %v1355, %v1361
        %v1368 = vadd.f32 %v1230, %v1362
        %v1369 = vadd.f32 %v1231, %v1363
        %v1370 = vadd.f32 %v1232, %v1364
        %v1371 = vadd.f32 %v1233, %v1365
        %v1372 = vadd.f32 %v1234, %v1366
        %v1373 = vadd.f32 %v1235, %v1367
        %1374 = vrot.lane.b32.xlu0 %v1218, 1
        %v1375 = vpop.permute.xlu0 %1374
        %1376 = vrot.lane.b32.xlu0 %v1220, 1
        %v1377 = vpop.permute.xlu0 %1376
        %1378 = vrot.lane.b32.xlu0 %v1222, 1
        %v1379 = vpop.permute.xlu0 %1378
        %1380 = vrot.lane.b32.xlu0 %v1219, 1
        %v1381 = vpop.permute.xlu0 %1380
        %1382 = vrot.lane.b32.xlu0 %v1221, 1
        %v1383 = vpop.permute.xlu0 %1382
        %1384 = vrot.lane.b32.xlu0 %v1223, 1
        %v1385 = vpop.permute.xlu0 %1384
        %v1386 = vsel %vm566, %v1375, %v1381
        %v1387 = vsel %vm566, %v1377, %v1383
        %v1388 = vsel %vm566, %v1379, %v1385
        %v1389 = vsel %vm566, %v1381, %v1375
        %v1390 = vsel %vm566, %v1383, %v1377
        %v1391 = vsel %vm566, %v1385, %v1379
        %1392 = vrot.lane.b32.xlu0 %v1218, 127
        %v1393 = vpop.permute.xlu0 %1392
        %1394 = vrot.lane.b32.xlu0 %v1220, 127
        %v1395 = vpop.permute.xlu0 %1394
        %1396 = vrot.lane.b32.xlu0 %v1222, 127
        %v1397 = vpop.permute.xlu0 %1396
        %1398 = vrot.lane.b32.xlu0 %v1219, 127
        %v1399 = vpop.permute.xlu0 %1398
        %1400 = vrot.lane.b32.xlu0 %v1221, 127
        %v1401 = vpop.permute.xlu0 %1400
        %1402 = vrot.lane.b32.xlu0 %v1223, 127
        %v1403 = vpop.permute.xlu0 %1402
        %v1404 = vsel %vm585, %v1393, %v1399
        %v1405 = vsel %vm585, %v1395, %v1401
        %v1406 = vsel %vm585, %v1397, %v1403
        %v1407 = vsel %vm585, %v1399, %v1393
        %v1408 = vsel %vm585, %v1401, %v1395
        %v1409 = vsel %vm585, %v1403, %v1397
        %v1410 = vsel %vm550, 0.0, %v1389
        %v1411 = vsel %vm551, 0.0, %v1386
        %v1412 = vsel %vm550, 0.0, %v1390
        %v1413 = vsel %vm551, 0.0, %v1387
        %v1414 = vsel %vm550, 0.0, %v1391
        %v1415 = vsel %vm551, 0.0, %v1388
        %v1416 = vsel %vm552, 0.0, %v1404
        %v1417 = vsel %vm553, 0.0, %v1407
        %v1418 = vsel %vm552, 0.0, %v1405
        %v1419 = vsel %vm553, 0.0, %v1408
        %v1420 = vsel %vm552, 0.0, %v1406
        %v1421 = vsel %vm553, 0.0, %v1409
        %v1422 = vadd.f32 %v1410, %v1218
        %v1423 = vadd.f32 %v1411, %v1219
        %v1424 = vadd.f32 %v1412, %v1220
        %v1425 = vadd.f32 %v1413, %v1221
        %v1426 = vadd.f32 %v1414, %v1222
        %v1427 = vadd.f32 %v1415, %v1223
        %v1428 = vadd.f32 %v1422, %v1416
        %v1429 = vadd.f32 %v1423, %v1417
        %v1430 = vadd.f32 %v1424, %v1418
        %v1431 = vadd.f32 %v1425, %v1419
        %v1432 = vadd.f32 %v1426, %v1420
        %v1433 = vadd.f32 %v1427, %v1421
        %v1434 = vrot.slane %v1428, 7
        %v1435 = vrot.slane %v1429, 7
        %v1436 = vrot.slane %v1430, 7
        %v1437 = vrot.slane %v1431, 7
        %v1438 = vrot.slane %v1432, 7
        %v1439 = vrot.slane %v1433, 7
        %v1440 = vsel %vm652, %v1436, %v1438
        %v1441 = vsel %vm652, %v1437, %v1439
        %v1442 = vsel %vm652, %v1434, %v1436
        %v1443 = vsel %vm652, %v1435, %v1437
        %v1444 = vsel %vm652, %v1438, %v1434
        %v1445 = vsel %vm652, %v1439, %v1435
        %v1446 = vrot.slane %v1428, 1
        %v1447 = vrot.slane %v1429, 1
        %v1448 = vrot.slane %v1430, 1
        %v1449 = vrot.slane %v1431, 1
        %v1450 = vrot.slane %v1432, 1
        %v1451 = vrot.slane %v1433, 1
        %v1452 = vsel %vm665, %v1448, %v1450
        %v1453 = vsel %vm665, %v1449, %v1451
        %v1454 = vsel %vm665, %v1446, %v1448
        %v1455 = vsel %vm665, %v1447, %v1449
        %v1456 = vsel %vm665, %v1450, %v1446
        %v1457 = vsel %vm665, %v1451, %v1447
        %v1458 = vsel %vm544, 0.0, %v1444
        %v1459 = vsel %vm544, 0.0, %v1445
        %v1460 = vsel %vm545, 0.0, %v1442
        %v1461 = vsel %vm545, 0.0, %v1443
        %v1462 = vsel %vm546, 0.0, %v1440
        %v1463 = vsel %vm546, 0.0, %v1441
        %v1464 = vsel %vm547, 0.0, %v1454
        %v1465 = vsel %vm547, 0.0, %v1455
        %v1466 = vsel %vm548, 0.0, %v1452
        %v1467 = vsel %vm548, 0.0, %v1453
        %v1468 = vsel %vm549, 0.0, %v1456
        %v1469 = vsel %vm549, 0.0, %v1457
        %v1470 = vadd.f32 %v1458, %v1428
        %v1471 = vadd.f32 %v1459, %v1429
        %v1472 = vadd.f32 %v1460, %v1430
        %v1473 = vadd.f32 %v1461, %v1431
        %v1474 = vadd.f32 %v1462, %v1432
        %v1475 = vadd.f32 %v1463, %v1433
        %v1476 = vadd.f32 %v1470, %v1464
        %v1477 = vadd.f32 %v1471, %v1465
        %v1478 = vadd.f32 %v1472, %v1466
        %v1479 = vadd.f32 %v1473, %v1467
        %v1480 = vadd.f32 %v1474, %v1468
        %v1481 = vadd.f32 %v1475, %v1469
        %v1482 = vmul.f32 %v1476, 0.33333334
        %v1483 = vmul.f32 %v1477, 0.33333334
        %v1484 = vmul.f32 %v1478, 0.33333334
        %v1485 = vmul.f32 %v1479, 0.33333334
        %v1486 = vmul.f32 %v1480, 0.33333334
        %v1487 = vmul.f32 %v1481, 0.33333334
        %v1488 = vmul.f32 %v1218, 3.0
        %v1489 = vmul.f32 %v1219, 3.0
        %v1490 = vmul.f32 %v1220, 3.0
        %v1491 = vmul.f32 %v1221, 3.0
        %v1492 = vmul.f32 %v1222, 3.0
        %v1493 = vmul.f32 %v1223, 3.0
        %v1494 = vsub.f32 %v1482, %v1488
        %v1495 = vsub.f32 %v1483, %v1489
        %v1496 = vsub.f32 %v1484, %v1490
        %v1497 = vsub.f32 %v1485, %v1491
        %v1498 = vsub.f32 %v1486, %v1492
        %v1499 = vsub.f32 %v1487, %v1493
        %v1500 = vmul.f32 %v489, %v1494
        %v1501 = vmul.f32 %v490, %v1495
        %v1502 = vmul.f32 %v491, %v1496
        %v1503 = vmul.f32 %v492, %v1497
        %v1504 = vmul.f32 %v493, %v1498
        %v1505 = vmul.f32 %v494, %v1499
        %v1506 = vsub.f32 %v1368, %v1500
        %v1507 = vsub.f32 %v1369, %v1501
        %v1508 = vsub.f32 %v1370, %v1502
        %v1509 = vsub.f32 %v1371, %v1503
        %v1510 = vsub.f32 %v1372, %v1504
        %v1511 = vsub.f32 %v1373, %v1505
        %v1512 = vmul.f32 %v1506, 0.5
        %v1513 = vmul.f32 %v1507, 0.5
        %v1514 = vmul.f32 %v1508, 0.5
        %v1515 = vmul.f32 %v1509, 0.5
        %v1516 = vmul.f32 %v1510, 0.5
        %v1517 = vmul.f32 %v1511, 0.5
        %v1518 = vmul.f32 %v1212, %v1038
        %v1519 = vmul.f32 %v1213, %v1039
        %v1520 = vmul.f32 %v1214, %v1040
        %v1521 = vmul.f32 %v1215, %v1041
        %v1522 = vmul.f32 %v1216, %v1042
        %v1523 = vmul.f32 %v1217, %v1043
        %v1524 = vmul.f32 %v495, %v1224
        %v1525 = vmul.f32 %v496, %v1225
        %v1526 = vmul.f32 %v497, %v1226
        %v1527 = vmul.f32 %v498, %v1227
        %v1528 = vmul.f32 %v499, %v1228
        %v1529 = vmul.f32 %v500, %v1229
        %1530 = vrot.lane.b32.xlu0 %v1524, 1
        %v1531 = vpop.permute.xlu0 %1530
        %1532 = vrot.lane.b32.xlu0 %v1526, 1
        %v1533 = vpop.permute.xlu0 %1532
        %1534 = vrot.lane.b32.xlu0 %v1528, 1
        %v1535 = vpop.permute.xlu0 %1534
        %1536 = vrot.lane.b32.xlu0 %v1525, 1
        %v1537 = vpop.permute.xlu0 %1536
        %1538 = vrot.lane.b32.xlu0 %v1527, 1
        %v1539 = vpop.permute.xlu0 %1538
        %1540 = vrot.lane.b32.xlu0 %v1529, 1
        %v1541 = vpop.permute.xlu0 %1540
        %v1542 = vsel %vm566, %v1531, %v1537
        %v1543 = vsel %vm566, %v1533, %v1539
        %v1544 = vsel %vm566, %v1535, %v1541
        %v1545 = vsel %vm566, %v1537, %v1531
        %v1546 = vsel %vm566, %v1539, %v1533
        %v1547 = vsel %vm566, %v1541, %v1535
        %1548 = vrot.lane.b32.xlu0 %v1524, 127
        %v1549 = vpop.permute.xlu0 %1548
        %1550 = vrot.lane.b32.xlu0 %v1526, 127
        %v1551 = vpop.permute.xlu0 %1550
        %1552 = vrot.lane.b32.xlu0 %v1528, 127
        %v1553 = vpop.permute.xlu0 %1552
        %1554 = vrot.lane.b32.xlu0 %v1525, 127
        %v1555 = vpop.permute.xlu0 %1554
        %1556 = vrot.lane.b32.xlu0 %v1527, 127
        %v1557 = vpop.permute.xlu0 %1556
        %1558 = vrot.lane.b32.xlu0 %v1529, 127
        %v1559 = vpop.permute.xlu0 %1558
        %v1560 = vsel %vm585, %v1549, %v1555
        %v1561 = vsel %vm585, %v1551, %v1557
        %v1562 = vsel %vm585, %v1553, %v1559
        %v1563 = vsel %vm585, %v1555, %v1549
        %v1564 = vsel %vm585, %v1557, %v1551
        %v1565 = vsel %vm585, %v1559, %v1553
        %v1566 = vsel %vm550, 0.0, %v1545
        %v1567 = vsel %vm551, 0.0, %v1542
        %v1568 = vsel %vm550, 0.0, %v1546
        %v1569 = vsel %vm551, 0.0, %v1543
        %v1570 = vsel %vm550, 0.0, %v1547
        %v1571 = vsel %vm551, 0.0, %v1544
        %v1572 = vsel %vm552, 0.0, %v1560
        %v1573 = vsel %vm553, 0.0, %v1563
        %v1574 = vsel %vm552, 0.0, %v1561
        %v1575 = vsel %vm553, 0.0, %v1564
        %v1576 = vsel %vm552, 0.0, %v1562
        %v1577 = vsel %vm553, 0.0, %v1565
        %v1578 = vadd.f32 %v1566, %v1524
        %v1579 = vadd.f32 %v1567, %v1525
        %v1580 = vadd.f32 %v1568, %v1526
        %v1581 = vadd.f32 %v1569, %v1527
        %v1582 = vadd.f32 %v1570, %v1528
        %v1583 = vadd.f32 %v1571, %v1529
        %v1584 = vadd.f32 %v1578, %v1572
        %v1585 = vadd.f32 %v1579, %v1573
        %v1586 = vadd.f32 %v1580, %v1574
        %v1587 = vadd.f32 %v1581, %v1575
        %v1588 = vadd.f32 %v1582, %v1576
        %v1589 = vadd.f32 %v1583, %v1577
        %v1590 = vrot.slane %v1584, 7
        %v1591 = vrot.slane %v1585, 7
        %v1592 = vrot.slane %v1586, 7
        %v1593 = vrot.slane %v1587, 7
        %v1594 = vrot.slane %v1588, 7
        %v1595 = vrot.slane %v1589, 7
        %v1596 = vsel %vm652, %v1592, %v1594
        %v1597 = vsel %vm652, %v1593, %v1595
        %v1598 = vsel %vm652, %v1590, %v1592
        %v1599 = vsel %vm652, %v1591, %v1593
        %v1600 = vsel %vm652, %v1594, %v1590
        %v1601 = vsel %vm652, %v1595, %v1591
        %v1602 = vrot.slane %v1584, 1
        %v1603 = vrot.slane %v1585, 1
        %v1604 = vrot.slane %v1586, 1
        %v1605 = vrot.slane %v1587, 1
        %v1606 = vrot.slane %v1588, 1
        %v1607 = vrot.slane %v1589, 1
        %v1608 = vsel %vm665, %v1604, %v1606
        %v1609 = vsel %vm665, %v1605, %v1607
        %v1610 = vsel %vm665, %v1602, %v1604
        %v1611 = vsel %vm665, %v1603, %v1605
        %v1612 = vsel %vm665, %v1606, %v1602
        %v1613 = vsel %vm665, %v1607, %v1603
        %v1614 = vsel %vm544, 0.0, %v1600
        %v1615 = vsel %vm544, 0.0, %v1601
        %v1616 = vsel %vm545, 0.0, %v1598
        %v1617 = vsel %vm545, 0.0, %v1599
        %v1618 = vsel %vm546, 0.0, %v1596
        %v1619 = vsel %vm546, 0.0, %v1597
        %v1620 = vsel %vm547, 0.0, %v1610
        %v1621 = vsel %vm547, 0.0, %v1611
        %v1622 = vsel %vm548, 0.0, %v1608
        %v1623 = vsel %vm548, 0.0, %v1609
        %v1624 = vsel %vm549, 0.0, %v1612
        %v1625 = vsel %vm549, 0.0, %v1613
        %v1626 = vadd.f32 %v1614, %v1584
        %v1627 = vadd.f32 %v1615, %v1585
        %v1628 = vadd.f32 %v1616, %v1586
        %v1629 = vadd.f32 %v1617, %v1587
        %v1630 = vadd.f32 %v1618, %v1588
        %v1631 = vadd.f32 %v1619, %v1589
        %v1632 = vadd.f32 %v1626, %v1620
        %v1633 = vadd.f32 %v1627, %v1621
        %v1634 = vadd.f32 %v1628, %v1622
        %v1635 = vadd.f32 %v1629, %v1623
        %v1636 = vadd.f32 %v1630, %v1624
        %v1637 = vadd.f32 %v1631, %v1625
        %v1638 = vmul.f32 %v1632, 0.33333334
        %v1639 = vmul.f32 %v1633, 0.33333334
        %v1640 = vmul.f32 %v1634, 0.33333334
        %v1641 = vmul.f32 %v1635, 0.33333334
        %v1642 = vmul.f32 %v1636, 0.33333334
        %v1643 = vmul.f32 %v1637, 0.33333334
        %v1644 = vmul.f32 %v1524, 3.0
        %v1645 = vmul.f32 %v1525, 3.0
        %v1646 = vmul.f32 %v1526, 3.0
        %v1647 = vmul.f32 %v1527, 3.0
        %v1648 = vmul.f32 %v1528, 3.0
        %v1649 = vmul.f32 %v1529, 3.0
        %v1650 = vsub.f32 %v1638, %v1644
        %v1651 = vsub.f32 %v1639, %v1645
        %v1652 = vsub.f32 %v1640, %v1646
        %v1653 = vsub.f32 %v1641, %v1647
        %v1654 = vsub.f32 %v1642, %v1648
        %v1655 = vsub.f32 %v1643, %v1649
        %v1656 = vadd.f32 %v1518, %v1650
        %v1657 = vadd.f32 %v1519, %v1651
        %v1658 = vadd.f32 %v1520, %v1652
        %v1659 = vadd.f32 %v1521, %v1653
        %v1660 = vadd.f32 %v1522, %v1654
        %v1661 = vadd.f32 %v1523, %v1655
        %1662 = vrot.lane.b32.xlu0 %v1224, 1
        %v1663 = vpop.permute.xlu0 %1662
        %1664 = vrot.lane.b32.xlu0 %v1226, 1
        %v1665 = vpop.permute.xlu0 %1664
        %1666 = vrot.lane.b32.xlu0 %v1228, 1
        %v1667 = vpop.permute.xlu0 %1666
        %1668 = vrot.lane.b32.xlu0 %v1225, 1
        %v1669 = vpop.permute.xlu0 %1668
        %1670 = vrot.lane.b32.xlu0 %v1227, 1
        %v1671 = vpop.permute.xlu0 %1670
        %1672 = vrot.lane.b32.xlu0 %v1229, 1
        %v1673 = vpop.permute.xlu0 %1672
        %v1674 = vsel %vm566, %v1663, %v1669
        %v1675 = vsel %vm566, %v1665, %v1671
        %v1676 = vsel %vm566, %v1667, %v1673
        %v1677 = vsel %vm566, %v1669, %v1663
        %v1678 = vsel %vm566, %v1671, %v1665
        %v1679 = vsel %vm566, %v1673, %v1667
        %1680 = vrot.lane.b32.xlu0 %v1224, 127
        %v1681 = vpop.permute.xlu0 %1680
        %1682 = vrot.lane.b32.xlu0 %v1226, 127
        %v1683 = vpop.permute.xlu0 %1682
        %1684 = vrot.lane.b32.xlu0 %v1228, 127
        %v1685 = vpop.permute.xlu0 %1684
        %1686 = vrot.lane.b32.xlu0 %v1225, 127
        %v1687 = vpop.permute.xlu0 %1686
        %1688 = vrot.lane.b32.xlu0 %v1227, 127
        %v1689 = vpop.permute.xlu0 %1688
        %1690 = vrot.lane.b32.xlu0 %v1229, 127
        %v1691 = vpop.permute.xlu0 %1690
        %v1692 = vsel %vm585, %v1681, %v1687
        %v1693 = vsel %vm585, %v1683, %v1689
        %v1694 = vsel %vm585, %v1685, %v1691
        %v1695 = vsel %vm585, %v1687, %v1681
        %v1696 = vsel %vm585, %v1689, %v1683
        %v1697 = vsel %vm585, %v1691, %v1685
        %v1698 = vsel %vm550, 0.0, %v1677
        %v1699 = vsel %vm551, 0.0, %v1674
        %v1700 = vsel %vm550, 0.0, %v1678
        %v1701 = vsel %vm551, 0.0, %v1675
        %v1702 = vsel %vm550, 0.0, %v1679
        %v1703 = vsel %vm551, 0.0, %v1676
        %v1704 = vsel %vm552, 0.0, %v1692
        %v1705 = vsel %vm553, 0.0, %v1695
        %v1706 = vsel %vm552, 0.0, %v1693
        %v1707 = vsel %vm553, 0.0, %v1696
        %v1708 = vsel %vm552, 0.0, %v1694
        %v1709 = vsel %vm553, 0.0, %v1697
        %v1710 = vadd.f32 %v1698, %v1224
        %v1711 = vadd.f32 %v1699, %v1225
        %v1712 = vadd.f32 %v1700, %v1226
        %v1713 = vadd.f32 %v1701, %v1227
        %v1714 = vadd.f32 %v1702, %v1228
        %v1715 = vadd.f32 %v1703, %v1229
        %v1716 = vadd.f32 %v1710, %v1704
        %v1717 = vadd.f32 %v1711, %v1705
        %v1718 = vadd.f32 %v1712, %v1706
        %v1719 = vadd.f32 %v1713, %v1707
        %v1720 = vadd.f32 %v1714, %v1708
        %v1721 = vadd.f32 %v1715, %v1709
        %v1722 = vrot.slane %v1716, 7
        %v1723 = vrot.slane %v1717, 7
        %v1724 = vrot.slane %v1718, 7
        %v1725 = vrot.slane %v1719, 7
        %v1726 = vrot.slane %v1720, 7
        %v1727 = vrot.slane %v1721, 7
        %v1728 = vsel %vm652, %v1724, %v1726
        %v1729 = vsel %vm652, %v1725, %v1727
        %v1730 = vsel %vm652, %v1722, %v1724
        %v1731 = vsel %vm652, %v1723, %v1725
        %v1732 = vsel %vm652, %v1726, %v1722
        %v1733 = vsel %vm652, %v1727, %v1723
        %v1734 = vrot.slane %v1716, 1
        %v1735 = vrot.slane %v1717, 1
        %v1736 = vrot.slane %v1718, 1
        %v1737 = vrot.slane %v1719, 1
        %v1738 = vrot.slane %v1720, 1
        %v1739 = vrot.slane %v1721, 1
        %v1740 = vsel %vm665, %v1736, %v1738
        %v1741 = vsel %vm665, %v1737, %v1739
        %v1742 = vsel %vm665, %v1734, %v1736
        %v1743 = vsel %vm665, %v1735, %v1737
        %v1744 = vsel %vm665, %v1738, %v1734
        %v1745 = vsel %vm665, %v1739, %v1735
        %v1746 = vsel %vm544, 0.0, %v1732
        %v1747 = vsel %vm544, 0.0, %v1733
        %v1748 = vsel %vm545, 0.0, %v1730
        %v1749 = vsel %vm545, 0.0, %v1731
        %v1750 = vsel %vm546, 0.0, %v1728
        %v1751 = vsel %vm546, 0.0, %v1729
        %v1752 = vsel %vm547, 0.0, %v1742
        %v1753 = vsel %vm547, 0.0, %v1743
        %v1754 = vsel %vm548, 0.0, %v1740
        %v1755 = vsel %vm548, 0.0, %v1741
        %v1756 = vsel %vm549, 0.0, %v1744
        %v1757 = vsel %vm549, 0.0, %v1745
        %v1758 = vadd.f32 %v1746, %v1716
        %v1759 = vadd.f32 %v1747, %v1717
        %v1760 = vadd.f32 %v1748, %v1718
        %v1761 = vadd.f32 %v1749, %v1719
        %v1762 = vadd.f32 %v1750, %v1720
        %v1763 = vadd.f32 %v1751, %v1721
        %v1764 = vadd.f32 %v1758, %v1752
        %v1765 = vadd.f32 %v1759, %v1753
        %v1766 = vadd.f32 %v1760, %v1754
        %v1767 = vadd.f32 %v1761, %v1755
        %v1768 = vadd.f32 %v1762, %v1756
        %v1769 = vadd.f32 %v1763, %v1757
        %v1770 = vmul.f32 %v1764, 0.33333334
        %v1771 = vmul.f32 %v1765, 0.33333334
        %v1772 = vmul.f32 %v1766, 0.33333334
        %v1773 = vmul.f32 %v1767, 0.33333334
        %v1774 = vmul.f32 %v1768, 0.33333334
        %v1775 = vmul.f32 %v1769, 0.33333334
        %v1776 = vmul.f32 %v1224, 3.0
        %v1777 = vmul.f32 %v1225, 3.0
        %v1778 = vmul.f32 %v1226, 3.0
        %v1779 = vmul.f32 %v1227, 3.0
        %v1780 = vmul.f32 %v1228, 3.0
        %v1781 = vmul.f32 %v1229, 3.0
        %v1782 = vsub.f32 %v1770, %v1776
        %v1783 = vsub.f32 %v1771, %v1777
        %v1784 = vsub.f32 %v1772, %v1778
        %v1785 = vsub.f32 %v1773, %v1779
        %v1786 = vsub.f32 %v1774, %v1780
        %v1787 = vsub.f32 %v1775, %v1781
        %v1788 = vmul.f32 %v495, %v1782
        %v1789 = vmul.f32 %v496, %v1783
        %v1790 = vmul.f32 %v497, %v1784
        %v1791 = vmul.f32 %v498, %v1785
        %v1792 = vmul.f32 %v499, %v1786
        %v1793 = vmul.f32 %v500, %v1787
        %v1794 = vsub.f32 %v1656, %v1788
        %v1795 = vsub.f32 %v1657, %v1789
        %v1796 = vsub.f32 %v1658, %v1790
        %v1797 = vsub.f32 %v1659, %v1791
        %v1798 = vsub.f32 %v1660, %v1792
        %v1799 = vsub.f32 %v1661, %v1793
        %v1800 = vmul.f32 %v1794, 0.5
        %v1801 = vmul.f32 %v1795, 0.5
        %v1802 = vmul.f32 %v1796, 0.5
        %v1803 = vmul.f32 %v1797, 0.5
        %v1804 = vmul.f32 %v1798, 0.5
        %v1805 = vmul.f32 %v1799, 0.5
        %v1806 = vmul.f32 %v489, %v804
        %v1807 = vmul.f32 %v490, %v805
        %v1808 = vmul.f32 %v491, %v806
        %v1809 = vmul.f32 %v492, %v807
        %v1810 = vmul.f32 %v493, %v808
        %v1811 = vmul.f32 %v494, %v809
        %v1812 = vsub.f32 %v1512, %v1806
        %v1813 = vsub.f32 %v1513, %v1807
        %v1814 = vsub.f32 %v1514, %v1808
        %v1815 = vsub.f32 %v1515, %v1809
        %v1816 = vsub.f32 %v1516, %v1810
        %v1817 = vsub.f32 %v1517, %v1811
        %v1818 = vmul.f32 %v495, %v810
        %v1819 = vmul.f32 %v496, %v811
        %v1820 = vmul.f32 %v497, %v812
        %v1821 = vmul.f32 %v498, %v813
        %v1822 = vmul.f32 %v499, %v814
        %v1823 = vmul.f32 %v500, %v815
        %v1824 = vsub.f32 %v1812, %v1818
        %v1825 = vsub.f32 %v1813, %v1819
        %v1826 = vsub.f32 %v1814, %v1820
        %v1827 = vsub.f32 %v1815, %v1821
        %v1828 = vsub.f32 %v1816, %v1822
        %v1829 = vsub.f32 %v1817, %v1823
        %v1830 = vmul.f32 %v1824, 0.25
        %v1831 = vmul.f32 %v1825, 0.25
        %v1832 = vmul.f32 %v1826, 0.25
        %v1833 = vmul.f32 %v1827, 0.25
        %v1834 = vmul.f32 %v1828, 0.25
        %v1835 = vmul.f32 %v1829, 0.25
        %v1836 = vadd.f32 %v1830, %v489
        %v1837 = vadd.f32 %v1831, %v490
        %v1838 = vadd.f32 %v1832, %v491
        %v1839 = vadd.f32 %v1833, %v492
        %v1840 = vadd.f32 %v1834, %v493
        %v1841 = vadd.f32 %v1835, %v494
        %v1842 = vmul.f32 %v1836, %v1062
        %v1843 = vmul.f32 %v1837, %v1063
        %v1844 = vmul.f32 %v1838, %v1064
        %v1845 = vmul.f32 %v1839, %v1065
        %v1846 = vmul.f32 %v1840, %v1066
        %v1847 = vmul.f32 %v1841, %v1067
        %v1848 = vsub.f32 %v1800, %v1842
        %v1849 = vsub.f32 %v1801, %v1843
        %v1850 = vsub.f32 %v1802, %v1844
        %v1851 = vsub.f32 %v1803, %v1845
        %v1852 = vsub.f32 %v1804, %v1846
        %v1853 = vsub.f32 %v1805, %v1847
        %v1854 = vmul.f32 %v495, %v1068
        %v1855 = vmul.f32 %v496, %v1069
        %v1856 = vmul.f32 %v497, %v1070
        %v1857 = vmul.f32 %v498, %v1071
        %v1858 = vmul.f32 %v499, %v1072
        %v1859 = vmul.f32 %v500, %v1073
        %v1860 = vsub.f32 %v1848, %v1854
        %v1861 = vsub.f32 %v1849, %v1855
        %v1862 = vsub.f32 %v1850, %v1856
        %v1863 = vsub.f32 %v1851, %v1857
        %v1864 = vsub.f32 %v1852, %v1858
        %v1865 = vsub.f32 %v1853, %v1859
        %v1866 = vmul.f32 %v1860, 0.25
        %v1867 = vmul.f32 %v1861, 0.25
        %v1868 = vmul.f32 %v1862, 0.25
        %v1869 = vmul.f32 %v1863, 0.25
        %v1870 = vmul.f32 %v1864, 0.25
        %v1871 = vmul.f32 %v1865, 0.25
        %v1872 = vadd.f32 %v1866, %v495
        %v1873 = vadd.f32 %v1867, %v496
        %v1874 = vadd.f32 %v1868, %v497
        %v1875 = vadd.f32 %v1869, %v498
        %v1876 = vadd.f32 %v1870, %v499
        %v1877 = vadd.f32 %v1871, %v500
        %1878 = vrot.lane.b32.xlu0 %v507, 1
        %v1879 = vpop.permute.xlu0 %1878
        %1880 = vrot.lane.b32.xlu0 %v509, 1
        %v1881 = vpop.permute.xlu0 %1880
        %1882 = vrot.lane.b32.xlu0 %v511, 1
        %v1883 = vpop.permute.xlu0 %1882
        %1884 = vrot.lane.b32.xlu0 %v508, 1
        %v1885 = vpop.permute.xlu0 %1884
        %1886 = vrot.lane.b32.xlu0 %v510, 1
        %v1887 = vpop.permute.xlu0 %1886
        %1888 = vrot.lane.b32.xlu0 %v512, 1
        %v1889 = vpop.permute.xlu0 %1888
        %v1890 = vsel %vm566, %v1879, %v1885
        %v1891 = vsel %vm566, %v1881, %v1887
        %v1892 = vsel %vm566, %v1883, %v1889
        %v1893 = vsel %vm566, %v1885, %v1879
        %v1894 = vsel %vm566, %v1887, %v1881
        %v1895 = vsel %vm566, %v1889, %v1883
        %1896 = vrot.lane.b32.xlu0 %v507, 127
        %v1897 = vpop.permute.xlu0 %1896
        %1898 = vrot.lane.b32.xlu0 %v509, 127
        %v1899 = vpop.permute.xlu0 %1898
        %1900 = vrot.lane.b32.xlu0 %v511, 127
        %v1901 = vpop.permute.xlu0 %1900
        %1902 = vrot.lane.b32.xlu0 %v508, 127
        %v1903 = vpop.permute.xlu0 %1902
        %1904 = vrot.lane.b32.xlu0 %v510, 127
        %v1905 = vpop.permute.xlu0 %1904
        %1906 = vrot.lane.b32.xlu0 %v512, 127
        %v1907 = vpop.permute.xlu0 %1906
        %v1908 = vsel %vm585, %v1897, %v1903
        %v1909 = vsel %vm585, %v1899, %v1905
        %v1910 = vsel %vm585, %v1901, %v1907
        %v1911 = vsel %vm585, %v1903, %v1897
        %v1912 = vsel %vm585, %v1905, %v1899
        %v1913 = vsel %vm585, %v1907, %v1901
        %v1914 = vsel %vm550, 0.0, %v1893
        %v1915 = vsel %vm551, 0.0, %v1890
        %v1916 = vsel %vm550, 0.0, %v1894
        %v1917 = vsel %vm551, 0.0, %v1891
        %v1918 = vsel %vm550, 0.0, %v1895
        %v1919 = vsel %vm551, 0.0, %v1892
        %v1920 = vsel %vm552, 0.0, %v1908
        %v1921 = vsel %vm553, 0.0, %v1911
        %v1922 = vsel %vm552, 0.0, %v1909
        %v1923 = vsel %vm553, 0.0, %v1912
        %v1924 = vsel %vm552, 0.0, %v1910
        %v1925 = vsel %vm553, 0.0, %v1913
        %v1926 = vsub.f32 %v1914, %v1920
        %v1927 = vsub.f32 %v1915, %v1921
        %v1928 = vsub.f32 %v1916, %v1922
        %v1929 = vsub.f32 %v1917, %v1923
        %v1930 = vsub.f32 %v1918, %v1924
        %v1931 = vsub.f32 %v1919, %v1925
        %v1932 = vadd.f32 %v1914, %v1920
        %v1933 = vadd.f32 %v1915, %v1921
        %v1934 = vadd.f32 %v1916, %v1922
        %v1935 = vadd.f32 %v1917, %v1923
        %v1936 = vadd.f32 %v1918, %v1924
        %v1937 = vadd.f32 %v1919, %v1925
        %v1938 = vmul.f32 %v1932, 0.083333336
        %v1939 = vmul.f32 %v1933, 0.083333336
        %v1940 = vmul.f32 %v1934, 0.083333336
        %v1941 = vmul.f32 %v1935, 0.083333336
        %v1942 = vmul.f32 %v1936, 0.083333336
        %v1943 = vmul.f32 %v1937, 0.083333336
        %v1944 = vmul.f32 %v507, 0.33333334
        %v1945 = vmul.f32 %v508, 0.33333334
        %v1946 = vmul.f32 %v509, 0.33333334
        %v1947 = vmul.f32 %v510, 0.33333334
        %v1948 = vmul.f32 %v511, 0.33333334
        %v1949 = vmul.f32 %v512, 0.33333334
        %v1950 = vadd.f32 %v1938, %v1944
        %v1951 = vadd.f32 %v1939, %v1945
        %v1952 = vadd.f32 %v1940, %v1946
        %v1953 = vadd.f32 %v1941, %v1947
        %v1954 = vadd.f32 %v1942, %v1948
        %v1955 = vadd.f32 %v1943, %v1949
        %v1956 = vrot.slane %v1926, 7
        %v1957 = vrot.slane %v1927, 7
        %v1958 = vrot.slane %v1928, 7
        %v1959 = vrot.slane %v1929, 7
        %v1960 = vrot.slane %v1930, 7
        %v1961 = vrot.slane %v1931, 7
        %v1962 = vsel %vm652, %v1958, %v1960
        %v1963 = vsel %vm652, %v1959, %v1961
        %v1964 = vsel %vm652, %v1956, %v1958
        %v1965 = vsel %vm652, %v1957, %v1959
        %v1966 = vsel %vm652, %v1960, %v1956
        %v1967 = vsel %vm652, %v1961, %v1957
        %v1968 = vrot.slane %v1926, 1
        %v1969 = vrot.slane %v1927, 1
        %v1970 = vrot.slane %v1928, 1
        %v1971 = vrot.slane %v1929, 1
        %v1972 = vrot.slane %v1930, 1
        %v1973 = vrot.slane %v1931, 1
        %v1974 = vsel %vm665, %v1970, %v1972
        %v1975 = vsel %vm665, %v1971, %v1973
        %v1976 = vsel %vm665, %v1968, %v1970
        %v1977 = vsel %vm665, %v1969, %v1971
        %v1978 = vsel %vm665, %v1972, %v1968
        %v1979 = vsel %vm665, %v1973, %v1969
        %v1980 = vsel %vm544, 0.0, %v1966
        %v1981 = vsel %vm544, 0.0, %v1967
        %v1982 = vsel %vm545, 0.0, %v1964
        %v1983 = vsel %vm545, 0.0, %v1965
        %v1984 = vsel %vm546, 0.0, %v1962
        %v1985 = vsel %vm546, 0.0, %v1963
        %v1986 = vsel %vm547, 0.0, %v1976
        %v1987 = vsel %vm547, 0.0, %v1977
        %v1988 = vsel %vm548, 0.0, %v1974
        %v1989 = vsel %vm548, 0.0, %v1975
        %v1990 = vsel %vm549, 0.0, %v1978
        %v1991 = vsel %vm549, 0.0, %v1979
        %v1992 = vrot.slane %v1950, 7
        %v1993 = vrot.slane %v1951, 7
        %v1994 = vrot.slane %v1952, 7
        %v1995 = vrot.slane %v1953, 7
        %v1996 = vrot.slane %v1954, 7
        %v1997 = vrot.slane %v1955, 7
        %v1998 = vsel %vm652, %v1994, %v1996
        %v1999 = vsel %vm652, %v1995, %v1997
        %v2000 = vsel %vm652, %v1992, %v1994
        %v2001 = vsel %vm652, %v1993, %v1995
        %v2002 = vsel %vm652, %v1996, %v1992
        %v2003 = vsel %vm652, %v1997, %v1993
        %v2004 = vrot.slane %v1950, 1
        %v2005 = vrot.slane %v1951, 1
        %v2006 = vrot.slane %v1952, 1
        %v2007 = vrot.slane %v1953, 1
        %v2008 = vrot.slane %v1954, 1
        %v2009 = vrot.slane %v1955, 1
        %v2010 = vsel %vm665, %v2006, %v2008
        %v2011 = vsel %vm665, %v2007, %v2009
        %v2012 = vsel %vm665, %v2004, %v2006
        %v2013 = vsel %vm665, %v2005, %v2007
        %v2014 = vsel %vm665, %v2008, %v2004
        %v2015 = vsel %vm665, %v2009, %v2005
        %v2016 = vsel %vm544, 0.0, %v2002
        %v2017 = vsel %vm544, 0.0, %v2003
        %v2018 = vsel %vm545, 0.0, %v2000
        %v2019 = vsel %vm545, 0.0, %v2001
        %v2020 = vsel %vm546, 0.0, %v1998
        %v2021 = vsel %vm546, 0.0, %v1999
        %v2022 = vsel %vm547, 0.0, %v2012
        %v2023 = vsel %vm547, 0.0, %v2013
        %v2024 = vsel %vm548, 0.0, %v2010
        %v2025 = vsel %vm548, 0.0, %v2011
        %v2026 = vsel %vm549, 0.0, %v2014
        %v2027 = vsel %vm549, 0.0, %v2015
        %v2028 = vadd.f32 %v1980, %v1986
        %v2029 = vadd.f32 %v1981, %v1987
        %v2030 = vadd.f32 %v1982, %v1988
        %v2031 = vadd.f32 %v1983, %v1989
        %v2032 = vadd.f32 %v1984, %v1990
        %v2033 = vadd.f32 %v1985, %v1991
        %v2034 = vmul.f32 %v2028, 0.083333336
        %v2035 = vmul.f32 %v2029, 0.083333336
        %v2036 = vmul.f32 %v2030, 0.083333336
        %v2037 = vmul.f32 %v2031, 0.083333336
        %v2038 = vmul.f32 %v2032, 0.083333336
        %v2039 = vmul.f32 %v2033, 0.083333336
        %v2040 = vmul.f32 %v1926, 0.33333334
        %v2041 = vmul.f32 %v1927, 0.33333334
        %v2042 = vmul.f32 %v1928, 0.33333334
        %v2043 = vmul.f32 %v1929, 0.33333334
        %v2044 = vmul.f32 %v1930, 0.33333334
        %v2045 = vmul.f32 %v1931, 0.33333334
        %v2046 = vadd.f32 %v2034, %v2040
        %v2047 = vadd.f32 %v2035, %v2041
        %v2048 = vadd.f32 %v2036, %v2042
        %v2049 = vadd.f32 %v2037, %v2043
        %v2050 = vadd.f32 %v2038, %v2044
        %v2051 = vadd.f32 %v2039, %v2045
        %v2052 = vsub.f32 %v2022, %v2016
        %v2053 = vsub.f32 %v2023, %v2017
        %v2054 = vsub.f32 %v2024, %v2018
        %v2055 = vsub.f32 %v2025, %v2019
        %v2056 = vsub.f32 %v2026, %v2020
        %v2057 = vsub.f32 %v2027, %v2021
        %v2058 = vmul.f32 %v2046, 0.5
        %v2059 = vmul.f32 %v2047, 0.5
        %v2060 = vmul.f32 %v2048, 0.5
        %v2061 = vmul.f32 %v2049, 0.5
        %v2062 = vmul.f32 %v2050, 0.5
        %v2063 = vmul.f32 %v2051, 0.5
        %v2064 = vsub.f32 %v1836, %v2058
        %v2065 = vsub.f32 %v1837, %v2059
        %v2066 = vsub.f32 %v1838, %v2060
        %v2067 = vsub.f32 %v1839, %v2061
        %v2068 = vsub.f32 %v1840, %v2062
        %v2069 = vsub.f32 %v1841, %v2063
        %v2070 = vmul.f32 %v2052, 0.5
        %v2071 = vmul.f32 %v2053, 0.5
        %v2072 = vmul.f32 %v2054, 0.5
        %v2073 = vmul.f32 %v2055, 0.5
        %v2074 = vmul.f32 %v2056, 0.5
        %v2075 = vmul.f32 %v2057, 0.5
        %v2076 = vsub.f32 %v1872, %v2070
        %v2077 = vsub.f32 %v1873, %v2071
        %v2078 = vsub.f32 %v1874, %v2072
        %v2079 = vsub.f32 %v1875, %v2073
        %v2080 = vsub.f32 %v1876, %v2074
        %v2081 = vsub.f32 %v1877, %v2075
        %v2082 = vadd.f32 %v501, %v507
        %v2083 = vadd.f32 %v502, %v508
        %v2084 = vadd.f32 %v503, %v509
        %v2085 = vadd.f32 %v504, %v510
        %v2086 = vadd.f32 %v505, %v511
        %v2087 = vadd.f32 %v506, %v512
        %2088 = vrot.lane.b32.xlu0 %v2082, 1
        %v2089 = vpop.permute.xlu0 %2088
        %2090 = vrot.lane.b32.xlu0 %v2084, 1
        %v2091 = vpop.permute.xlu0 %2090
        %2092 = vrot.lane.b32.xlu0 %v2086, 1
        %v2093 = vpop.permute.xlu0 %2092
        %2094 = vrot.lane.b32.xlu0 %v2083, 1
        %v2095 = vpop.permute.xlu0 %2094
        %2096 = vrot.lane.b32.xlu0 %v2085, 1
        %v2097 = vpop.permute.xlu0 %2096
        %2098 = vrot.lane.b32.xlu0 %v2087, 1
        %v2099 = vpop.permute.xlu0 %2098
        %v2100 = vsel %vm566, %v2089, %v2095
        %v2101 = vsel %vm566, %v2091, %v2097
        %v2102 = vsel %vm566, %v2093, %v2099
        %v2103 = vsel %vm566, %v2095, %v2089
        %v2104 = vsel %vm566, %v2097, %v2091
        %v2105 = vsel %vm566, %v2099, %v2093
        %2106 = vrot.lane.b32.xlu0 %v2082, 127
        %v2107 = vpop.permute.xlu0 %2106
        %2108 = vrot.lane.b32.xlu0 %v2084, 127
        %v2109 = vpop.permute.xlu0 %2108
        %2110 = vrot.lane.b32.xlu0 %v2086, 127
        %v2111 = vpop.permute.xlu0 %2110
        %2112 = vrot.lane.b32.xlu0 %v2083, 127
        %v2113 = vpop.permute.xlu0 %2112
        %2114 = vrot.lane.b32.xlu0 %v2085, 127
        %v2115 = vpop.permute.xlu0 %2114
        %2116 = vrot.lane.b32.xlu0 %v2087, 127
        %v2117 = vpop.permute.xlu0 %2116
        %v2118 = vsel %vm585, %v2107, %v2113
        %v2119 = vsel %vm585, %v2109, %v2115
        %v2120 = vsel %vm585, %v2111, %v2117
        %v2121 = vsel %vm585, %v2113, %v2107
        %v2122 = vsel %vm585, %v2115, %v2109
        %v2123 = vsel %vm585, %v2117, %v2111
        %v2124 = vsel %vm550, 0.0, %v2103
        %v2125 = vsel %vm551, 0.0, %v2100
        %v2126 = vsel %vm550, 0.0, %v2104
        %v2127 = vsel %vm551, 0.0, %v2101
        %v2128 = vsel %vm550, 0.0, %v2105
        %v2129 = vsel %vm551, 0.0, %v2102
        %v2130 = vsel %vm552, 0.0, %v2118
        %v2131 = vsel %vm553, 0.0, %v2121
        %v2132 = vsel %vm552, 0.0, %v2119
        %v2133 = vsel %vm553, 0.0, %v2122
        %v2134 = vsel %vm552, 0.0, %v2120
        %v2135 = vsel %vm553, 0.0, %v2123
        %v2136 = vadd.f32 %v2124, %v2082
        %v2137 = vadd.f32 %v2125, %v2083
        %v2138 = vadd.f32 %v2126, %v2084
        %v2139 = vadd.f32 %v2127, %v2085
        %v2140 = vadd.f32 %v2128, %v2086
        %v2141 = vadd.f32 %v2129, %v2087
        %v2142 = vadd.f32 %v2136, %v2130
        %v2143 = vadd.f32 %v2137, %v2131
        %v2144 = vadd.f32 %v2138, %v2132
        %v2145 = vadd.f32 %v2139, %v2133
        %v2146 = vadd.f32 %v2140, %v2134
        %v2147 = vadd.f32 %v2141, %v2135
        %v2148 = vrot.slane %v2142, 7
        %v2149 = vrot.slane %v2143, 7
        %v2150 = vrot.slane %v2144, 7
        %v2151 = vrot.slane %v2145, 7
        %v2152 = vrot.slane %v2146, 7
        %v2153 = vrot.slane %v2147, 7
        %v2154 = vsel %vm652, %v2150, %v2152
        %v2155 = vsel %vm652, %v2151, %v2153
        %v2156 = vsel %vm652, %v2148, %v2150
        %v2157 = vsel %vm652, %v2149, %v2151
        %v2158 = vsel %vm652, %v2152, %v2148
        %v2159 = vsel %vm652, %v2153, %v2149
        %v2160 = vrot.slane %v2142, 1
        %v2161 = vrot.slane %v2143, 1
        %v2162 = vrot.slane %v2144, 1
        %v2163 = vrot.slane %v2145, 1
        %v2164 = vrot.slane %v2146, 1
        %v2165 = vrot.slane %v2147, 1
        %v2166 = vsel %vm665, %v2162, %v2164
        %v2167 = vsel %vm665, %v2163, %v2165
        %v2168 = vsel %vm665, %v2160, %v2162
        %v2169 = vsel %vm665, %v2161, %v2163
        %v2170 = vsel %vm665, %v2164, %v2160
        %v2171 = vsel %vm665, %v2165, %v2161
        %v2172 = vsel %vm544, 0.0, %v2158
        %v2173 = vsel %vm544, 0.0, %v2159
        %v2174 = vsel %vm545, 0.0, %v2156
        %v2175 = vsel %vm545, 0.0, %v2157
        %v2176 = vsel %vm546, 0.0, %v2154
        %v2177 = vsel %vm546, 0.0, %v2155
        %v2178 = vsel %vm547, 0.0, %v2168
        %v2179 = vsel %vm547, 0.0, %v2169
        %v2180 = vsel %vm548, 0.0, %v2166
        %v2181 = vsel %vm548, 0.0, %v2167
        %v2182 = vsel %vm549, 0.0, %v2170
        %v2183 = vsel %vm549, 0.0, %v2171
        %v2184 = vadd.f32 %v2172, %v2142
        %v2185 = vadd.f32 %v2173, %v2143
        %v2186 = vadd.f32 %v2174, %v2144
        %v2187 = vadd.f32 %v2175, %v2145
        %v2188 = vadd.f32 %v2176, %v2146
        %v2189 = vadd.f32 %v2177, %v2147
        %v2190 = vadd.f32 %v2184, %v2178
        %v2191 = vadd.f32 %v2185, %v2179
        %v2192 = vadd.f32 %v2186, %v2180
        %v2193 = vadd.f32 %v2187, %v2181
        %v2194 = vadd.f32 %v2188, %v2182
        %v2195 = vadd.f32 %v2189, %v2183
        %v2196 = vmul.f32 %v2190, 0.11111111
        %v2197 = vmul.f32 %v2191, 0.11111111
        %v2198 = vmul.f32 %v2192, 0.11111111
        %v2199 = vmul.f32 %v2193, 0.11111111
        %v2200 = vmul.f32 %v2194, 0.11111111
        %v2201 = vmul.f32 %v2195, 0.11111111
        %v2202 = vmul.f32 %v2196, 0.01
        %v2203 = vmul.f32 %v2197, 0.01
        %v2204 = vmul.f32 %v2198, 0.01
        %v2205 = vmul.f32 %v2199, 0.01
        %v2206 = vmul.f32 %v2200, 0.01
        %v2207 = vmul.f32 %v2201, 0.01
        %v2208 = vmul.f32 %v2082, 0.99
        %v2209 = vmul.f32 %v2083, 0.99
        %v2210 = vmul.f32 %v2084, 0.99
        %v2211 = vmul.f32 %v2085, 0.99
        %v2212 = vmul.f32 %v2086, 0.99
        %v2213 = vmul.f32 %v2087, 0.99
        %v2214 = vadd.f32 %v2202, %v2208
        %v2215 = vadd.f32 %v2203, %v2209
        %v2216 = vadd.f32 %v2204, %v2210
        %v2217 = vadd.f32 %v2205, %v2211
        %v2218 = vadd.f32 %v2206, %v2212
        %v2219 = vadd.f32 %v2207, %v2213
        %v2220 = vmax.f32 %v2214, 0.001
        %v2221 = vmax.f32 %v2215, 0.001
        %v2222 = vmax.f32 %v2216, 0.001
        %v2223 = vmax.f32 %v2217, 0.001
        %v2224 = vmax.f32 %v2218, 0.001
        %v2225 = vmax.f32 %v2219, 0.001
        %v2226 = vlog2.pop %v2220
        %v2227 = vmul.f32 %v2226, 0.6931472
        %v2228 = vlog2.pop %v2221
        %v2229 = vmul.f32 %v2228, 0.6931472
        %v2230 = vlog2.pop %v2222
        %v2231 = vmul.f32 %v2230, 0.6931472
        %v2232 = vlog2.pop %v2223
        %v2233 = vmul.f32 %v2232, 0.6931472
        %v2234 = vlog2.pop %v2224
        %v2235 = vmul.f32 %v2234, 0.6931472
        %v2236 = vlog2.pop %v2225
        %v2237 = vmul.f32 %v2236, 0.6931472
        %v2238 = vmul.f32 %v2227, -1.3333334
        %v2239 = vmul.f32 %v2229, -1.3333334
        %v2240 = vmul.f32 %v2231, -1.3333334
        %v2241 = vmul.f32 %v2233, -1.3333334
        %v2242 = vmul.f32 %v2235, -1.3333334
        %v2243 = vmul.f32 %v2237, -1.3333334
        %v2244 = vmul.f32 %v2238, 1.442695
        %v2245 = vpow.pop %v2244
        %v2246 = vmul.f32 %v2239, 1.442695
        %v2247 = vpow.pop %v2246
        %v2248 = vmul.f32 %v2240, 1.442695
        %v2249 = vpow.pop %v2248
        %v2250 = vmul.f32 %v2241, 1.442695
        %v2251 = vpow.pop %v2250
        %v2252 = vmul.f32 %v2242, 1.442695
        %v2253 = vpow.pop %v2252
        %v2254 = vmul.f32 %v2243, 1.442695
        %v2255 = vpow.pop %v2254
        %v2256 = vmul.f32 %v2064, %v2064
        %v2257 = vmul.f32 %v2065, %v2065
        %v2258 = vmul.f32 %v2066, %v2066
        %v2259 = vmul.f32 %v2067, %v2067
        %v2260 = vmul.f32 %v2068, %v2068
        %v2261 = vmul.f32 %v2069, %v2069
        %v2262 = vmul.f32 %v2076, %v2076
        %v2263 = vmul.f32 %v2077, %v2077
        %v2264 = vmul.f32 %v2078, %v2078
        %v2265 = vmul.f32 %v2079, %v2079
        %v2266 = vmul.f32 %v2080, %v2080
        %v2267 = vmul.f32 %v2081, %v2081
        %v2268 = vadd.f32 %v2256, %v2262
        %v2269 = vadd.f32 %v2257, %v2263
        %v2270 = vadd.f32 %v2258, %v2264
        %v2271 = vadd.f32 %v2259, %v2265
        %v2272 = vadd.f32 %v2260, %v2266
        %v2273 = vadd.f32 %v2261, %v2267
        %v2274 = vrsqrt.pop %v2268
        %v2275 = vmul.f32 %v2268, %v2274
        %vm2276 = vcmp.eq.f32.partialorder %v2268, inf
        %v2277 = vsel %vm2276, %v2268, %v2275
        %vm2278 = vcmp.eq.f32.partialorder %v2268, 0.0
        %v2279 = vand.u32 %v2268, 2147483648
        %v2280 = vsel %vm2278, %v2279, %v2277
        %v2281 = vrsqrt.pop %v2269
        %v2282 = vmul.f32 %v2269, %v2281
        %vm2283 = vcmp.eq.f32.partialorder %v2269, inf
        %v2284 = vsel %vm2283, %v2269, %v2282
        %vm2285 = vcmp.eq.f32.partialorder %v2269, 0.0
        %v2286 = vand.u32 %v2269, 2147483648
        %v2287 = vsel %vm2285, %v2286, %v2284
        %v2288 = vrsqrt.pop %v2270
        %v2289 = vmul.f32 %v2270, %v2288
        %vm2290 = vcmp.eq.f32.partialorder %v2270, inf
        %v2291 = vsel %vm2290, %v2270, %v2289
        %vm2292 = vcmp.eq.f32.partialorder %v2270, 0.0
        %v2293 = vand.u32 %v2270, 2147483648
        %v2294 = vsel %vm2292, %v2293, %v2291
        %v2295 = vrsqrt.pop %v2271
        %v2296 = vmul.f32 %v2271, %v2295
        %vm2297 = vcmp.eq.f32.partialorder %v2271, inf
        %v2298 = vsel %vm2297, %v2271, %v2296
        %vm2299 = vcmp.eq.f32.partialorder %v2271, 0.0
        %v2300 = vand.u32 %v2271, 2147483648
        %v2301 = vsel %vm2299, %v2300, %v2298
        %v2302 = vrsqrt.pop %v2272
        %v2303 = vmul.f32 %v2272, %v2302
        %vm2304 = vcmp.eq.f32.partialorder %v2272, inf
        %v2305 = vsel %vm2304, %v2272, %v2303
        %vm2306 = vcmp.eq.f32.partialorder %v2272, 0.0
        %v2307 = vand.u32 %v2272, 2147483648
        %v2308 = vsel %vm2306, %v2307, %v2305
        %v2309 = vrsqrt.pop %v2273
        %v2310 = vmul.f32 %v2273, %v2309
        %vm2311 = vcmp.eq.f32.partialorder %v2273, inf
        %v2312 = vsel %vm2311, %v2273, %v2310
        %vm2313 = vcmp.eq.f32.partialorder %v2273, 0.0
        %v2314 = vand.u32 %v2273, 2147483648
        %v2315 = vsel %vm2313, %v2314, %v2312
        %v2316 = vmul.f32 %v2280, 0.003025
        %v2317 = vmul.f32 %v2287, 0.003025
        %v2318 = vmul.f32 %v2294, 0.003025
        %v2319 = vmul.f32 %v2301, 0.003025
        %v2320 = vmul.f32 %v2308, 0.003025
        %v2321 = vmul.f32 %v2315, 0.003025
        %v2322 = vmul.f32 %v2316, %v2245
        %v2323 = vmul.f32 %v2317, %v2247
        %v2324 = vmul.f32 %v2318, %v2249
        %v2325 = vmul.f32 %v2319, %v2251
        %v2326 = vmul.f32 %v2320, %v2253
        %v2327 = vmul.f32 %v2321, %v2255
        %v2328 = vmul.f32 %v2322, 4.905
        %v2329 = vmul.f32 %v2323, 4.905
        %v2330 = vmul.f32 %v2324, 4.905
        %v2331 = vmul.f32 %v2325, 4.905
        %v2332 = vmul.f32 %v2326, 4.905
        %v2333 = vmul.f32 %v2327, 4.905
        %v2334 = vadd.f32 %v2328, 1.0
        %v2335 = vadd.f32 %v2329, 1.0
        %v2336 = vadd.f32 %v2330, 1.0
        %v2337 = vadd.f32 %v2331, 1.0
        %v2338 = vadd.f32 %v2332, 1.0
        %v2339 = vadd.f32 %v2333, 1.0
        %v2340 = vrcp.pop %v2334
        %v2341 = vmul.f32 1.0, %v2340
        %v2342 = vrcp.pop %v2335
        %v2343 = vmul.f32 1.0, %v2342
        %v2344 = vrcp.pop %v2336
        %v2345 = vmul.f32 1.0, %v2344
        %v2346 = vrcp.pop %v2337
        %v2347 = vmul.f32 1.0, %v2346
        %v2348 = vrcp.pop %v2338
        %v2349 = vmul.f32 1.0, %v2348
        %v2350 = vrcp.pop %v2339
        %v2351 = vmul.f32 1.0, %v2350
        %v2352 = vmul.f32 %v2064, %v2341
        %v2353 = vmul.f32 %v2065, %v2343
        %v2354 = vmul.f32 %v2066, %v2345
        %v2355 = vmul.f32 %v2067, %v2347
        %v2356 = vmul.f32 %v2068, %v2349
        %v2357 = vmul.f32 %v2069, %v2351
        %v2358 = vmul.f32 %v2076, %v2341
        %v2359 = vmul.f32 %v2077, %v2343
        %v2360 = vmul.f32 %v2078, %v2345
        %v2361 = vmul.f32 %v2079, %v2347
        %v2362 = vmul.f32 %v2080, %v2349
        %v2363 = vmul.f32 %v2081, %v2351
        %v2364 = vmax.f32 %v2082, 0.001
        %v2365 = vmax.f32 %v2083, 0.001
        %v2366 = vmax.f32 %v2084, 0.001
        %v2367 = vmax.f32 %v2085, 0.001
        %v2368 = vmax.f32 %v2086, 0.001
        %v2369 = vmax.f32 %v2087, 0.001
        %v2370 = vrcp.pop %v2364
        %v2371 = vmul.f32 1.0, %v2370
        %v2372 = vrcp.pop %v2365
        %v2373 = vmul.f32 1.0, %v2372
        %v2374 = vrcp.pop %v2366
        %v2375 = vmul.f32 1.0, %v2374
        %v2376 = vrcp.pop %v2367
        %v2377 = vmul.f32 1.0, %v2376
        %v2378 = vrcp.pop %v2368
        %v2379 = vmul.f32 1.0, %v2378
        %v2380 = vrcp.pop %v2369
        %v2381 = vmul.f32 1.0, %v2380
        %2382 = vrot.lane.b32.xlu0 %v2364, 1
        %v2383 = vpop.permute.xlu0 %2382
        %2384 = vrot.lane.b32.xlu0 %v2366, 1
        %v2385 = vpop.permute.xlu0 %2384
        %2386 = vrot.lane.b32.xlu0 %v2368, 1
        %v2387 = vpop.permute.xlu0 %2386
        %2388 = vrot.lane.b32.xlu0 %v2365, 1
        %v2389 = vpop.permute.xlu0 %2388
        %2390 = vrot.lane.b32.xlu0 %v2367, 1
        %v2391 = vpop.permute.xlu0 %2390
        %2392 = vrot.lane.b32.xlu0 %v2369, 1
        %v2393 = vpop.permute.xlu0 %2392
        %v2394 = vsel %vm566, %v2383, %v2389
        %v2395 = vsel %vm566, %v2385, %v2391
        %v2396 = vsel %vm566, %v2387, %v2393
        %v2397 = vsel %vm566, %v2389, %v2383
        %v2398 = vsel %vm566, %v2391, %v2385
        %v2399 = vsel %vm566, %v2393, %v2387
        %2400 = vrot.lane.b32.xlu0 %v2364, 127
        %v2401 = vpop.permute.xlu0 %2400
        %2402 = vrot.lane.b32.xlu0 %v2366, 127
        %v2403 = vpop.permute.xlu0 %2402
        %2404 = vrot.lane.b32.xlu0 %v2368, 127
        %v2405 = vpop.permute.xlu0 %2404
        %2406 = vrot.lane.b32.xlu0 %v2365, 127
        %v2407 = vpop.permute.xlu0 %2406
        %2408 = vrot.lane.b32.xlu0 %v2367, 127
        %v2409 = vpop.permute.xlu0 %2408
        %2410 = vrot.lane.b32.xlu0 %v2369, 127
        %v2411 = vpop.permute.xlu0 %2410
        %v2412 = vsel %vm585, %v2401, %v2407
        %v2413 = vsel %vm585, %v2403, %v2409
        %v2414 = vsel %vm585, %v2405, %v2411
        %v2415 = vsel %vm585, %v2407, %v2401
        %v2416 = vsel %vm585, %v2409, %v2403
        %v2417 = vsel %vm585, %v2411, %v2405
        %v2418 = vsel %vm550, 0.0, %v2397
        %v2419 = vsel %vm551, 0.0, %v2394
        %v2420 = vsel %vm550, 0.0, %v2398
        %v2421 = vsel %vm551, 0.0, %v2395
        %v2422 = vsel %vm550, 0.0, %v2399
        %v2423 = vsel %vm551, 0.0, %v2396
        %v2424 = vsel %vm552, 0.0, %v2412
        %v2425 = vsel %vm553, 0.0, %v2415
        %v2426 = vsel %vm552, 0.0, %v2413
        %v2427 = vsel %vm553, 0.0, %v2416
        %v2428 = vsel %vm552, 0.0, %v2414
        %v2429 = vsel %vm553, 0.0, %v2417
        %v2430 = vadd.f32 %v2418, %v2364
        %v2431 = vadd.f32 %v2419, %v2365
        %v2432 = vadd.f32 %v2420, %v2366
        %v2433 = vadd.f32 %v2421, %v2367
        %v2434 = vadd.f32 %v2422, %v2368
        %v2435 = vadd.f32 %v2423, %v2369
        %v2436 = vadd.f32 %v2430, %v2424
        %v2437 = vadd.f32 %v2431, %v2425
        %v2438 = vadd.f32 %v2432, %v2426
        %v2439 = vadd.f32 %v2433, %v2427
        %v2440 = vadd.f32 %v2434, %v2428
        %v2441 = vadd.f32 %v2435, %v2429
        %v2442 = vsub.f32 %v2418, %v2424
        %v2443 = vsub.f32 %v2419, %v2425
        %v2444 = vsub.f32 %v2420, %v2426
        %v2445 = vsub.f32 %v2421, %v2427
        %v2446 = vsub.f32 %v2422, %v2428
        %v2447 = vsub.f32 %v2423, %v2429
        %v2448 = vadd.f32 %v2418, %v2424
        %v2449 = vadd.f32 %v2419, %v2425
        %v2450 = vadd.f32 %v2420, %v2426
        %v2451 = vadd.f32 %v2421, %v2427
        %v2452 = vadd.f32 %v2422, %v2428
        %v2453 = vadd.f32 %v2423, %v2429
        %v2454 = vmul.f32 %v2448, 0.083333336
        %v2455 = vmul.f32 %v2449, 0.083333336
        %v2456 = vmul.f32 %v2450, 0.083333336
        %v2457 = vmul.f32 %v2451, 0.083333336
        %v2458 = vmul.f32 %v2452, 0.083333336
        %v2459 = vmul.f32 %v2453, 0.083333336
        %v2460 = vmul.f32 %v2364, 0.33333334
        %v2461 = vmul.f32 %v2365, 0.33333334
        %v2462 = vmul.f32 %v2366, 0.33333334
        %v2463 = vmul.f32 %v2367, 0.33333334
        %v2464 = vmul.f32 %v2368, 0.33333334
        %v2465 = vmul.f32 %v2369, 0.33333334
        %v2466 = vadd.f32 %v2454, %v2460
        %v2467 = vadd.f32 %v2455, %v2461
        %v2468 = vadd.f32 %v2456, %v2462
        %v2469 = vadd.f32 %v2457, %v2463
        %v2470 = vadd.f32 %v2458, %v2464
        %v2471 = vadd.f32 %v2459, %v2465
        %v2472 = vrot.slane %v2436, 7
        %v2473 = vrot.slane %v2437, 7
        %v2474 = vrot.slane %v2438, 7
        %v2475 = vrot.slane %v2439, 7
        %v2476 = vrot.slane %v2440, 7
        %v2477 = vrot.slane %v2441, 7
        %v2478 = vsel %vm652, %v2474, %v2476
        %v2479 = vsel %vm652, %v2475, %v2477
        %v2480 = vsel %vm652, %v2472, %v2474
        %v2481 = vsel %vm652, %v2473, %v2475
        %v2482 = vsel %vm652, %v2476, %v2472
        %v2483 = vsel %vm652, %v2477, %v2473
        %v2484 = vrot.slane %v2436, 1
        %v2485 = vrot.slane %v2437, 1
        %v2486 = vrot.slane %v2438, 1
        %v2487 = vrot.slane %v2439, 1
        %v2488 = vrot.slane %v2440, 1
        %v2489 = vrot.slane %v2441, 1
        %v2490 = vsel %vm665, %v2486, %v2488
        %v2491 = vsel %vm665, %v2487, %v2489
        %v2492 = vsel %vm665, %v2484, %v2486
        %v2493 = vsel %vm665, %v2485, %v2487
        %v2494 = vsel %vm665, %v2488, %v2484
        %v2495 = vsel %vm665, %v2489, %v2485
        %v2496 = vsel %vm544, 0.0, %v2482
        %v2497 = vsel %vm544, 0.0, %v2483
        %v2498 = vsel %vm545, 0.0, %v2480
        %v2499 = vsel %vm545, 0.0, %v2481
        %v2500 = vsel %vm546, 0.0, %v2478
        %v2501 = vsel %vm546, 0.0, %v2479
        %v2502 = vsel %vm547, 0.0, %v2492
        %v2503 = vsel %vm547, 0.0, %v2493
        %v2504 = vsel %vm548, 0.0, %v2490
        %v2505 = vsel %vm548, 0.0, %v2491
        %v2506 = vsel %vm549, 0.0, %v2494
        %v2507 = vsel %vm549, 0.0, %v2495
        %v2508 = vrot.slane %v2442, 7
        %v2509 = vrot.slane %v2443, 7
        %v2510 = vrot.slane %v2444, 7
        %v2511 = vrot.slane %v2445, 7
        %v2512 = vrot.slane %v2446, 7
        %v2513 = vrot.slane %v2447, 7
        %v2514 = vsel %vm652, %v2510, %v2512
        %v2515 = vsel %vm652, %v2511, %v2513
        %v2516 = vsel %vm652, %v2508, %v2510
        %v2517 = vsel %vm652, %v2509, %v2511
        %v2518 = vsel %vm652, %v2512, %v2508
        %v2519 = vsel %vm652, %v2513, %v2509
        %v2520 = vrot.slane %v2442, 1
        %v2521 = vrot.slane %v2443, 1
        %v2522 = vrot.slane %v2444, 1
        %v2523 = vrot.slane %v2445, 1
        %v2524 = vrot.slane %v2446, 1
        %v2525 = vrot.slane %v2447, 1
        %v2526 = vsel %vm665, %v2522, %v2524
        %v2527 = vsel %vm665, %v2523, %v2525
        %v2528 = vsel %vm665, %v2520, %v2522
        %v2529 = vsel %vm665, %v2521, %v2523
        %v2530 = vsel %vm665, %v2524, %v2520
        %v2531 = vsel %vm665, %v2525, %v2521
        %v2532 = vsel %vm544, 0.0, %v2518
        %v2533 = vsel %vm544, 0.0, %v2519
        %v2534 = vsel %vm545, 0.0, %v2516
        %v2535 = vsel %vm545, 0.0, %v2517
        %v2536 = vsel %vm546, 0.0, %v2514
        %v2537 = vsel %vm546, 0.0, %v2515
        %v2538 = vsel %vm547, 0.0, %v2528
        %v2539 = vsel %vm547, 0.0, %v2529
        %v2540 = vsel %vm548, 0.0, %v2526
        %v2541 = vsel %vm548, 0.0, %v2527
        %v2542 = vsel %vm549, 0.0, %v2530
        %v2543 = vsel %vm549, 0.0, %v2531
        %v2544 = vrot.slane %v2466, 7
        %v2545 = vrot.slane %v2467, 7
        %v2546 = vrot.slane %v2468, 7
        %v2547 = vrot.slane %v2469, 7
        %v2548 = vrot.slane %v2470, 7
        %v2549 = vrot.slane %v2471, 7
        %v2550 = vsel %vm652, %v2546, %v2548
        %v2551 = vsel %vm652, %v2547, %v2549
        %v2552 = vsel %vm652, %v2544, %v2546
        %v2553 = vsel %vm652, %v2545, %v2547
        %v2554 = vsel %vm652, %v2548, %v2544
        %v2555 = vsel %vm652, %v2549, %v2545
        %v2556 = vrot.slane %v2466, 1
        %v2557 = vrot.slane %v2467, 1
        %v2558 = vrot.slane %v2468, 1
        %v2559 = vrot.slane %v2469, 1
        %v2560 = vrot.slane %v2470, 1
        %v2561 = vrot.slane %v2471, 1
        %v2562 = vsel %vm665, %v2558, %v2560
        %v2563 = vsel %vm665, %v2559, %v2561
        %v2564 = vsel %vm665, %v2556, %v2558
        %v2565 = vsel %vm665, %v2557, %v2559
        %v2566 = vsel %vm665, %v2560, %v2556
        %v2567 = vsel %vm665, %v2561, %v2557
        %v2568 = vsel %vm544, 0.0, %v2554
        %v2569 = vsel %vm544, 0.0, %v2555
        %v2570 = vsel %vm545, 0.0, %v2552
        %v2571 = vsel %vm545, 0.0, %v2553
        %v2572 = vsel %vm546, 0.0, %v2550
        %v2573 = vsel %vm546, 0.0, %v2551
        %v2574 = vsel %vm547, 0.0, %v2564
        %v2575 = vsel %vm547, 0.0, %v2565
        %v2576 = vsel %vm548, 0.0, %v2562
        %v2577 = vsel %vm548, 0.0, %v2563
        %v2578 = vsel %vm549, 0.0, %v2566
        %v2579 = vsel %vm549, 0.0, %v2567
        %v2580 = vadd.f32 %v2496, %v2436
        %v2581 = vadd.f32 %v2497, %v2437
        %v2582 = vadd.f32 %v2498, %v2438
        %v2583 = vadd.f32 %v2499, %v2439
        %v2584 = vadd.f32 %v2500, %v2440
        %v2585 = vadd.f32 %v2501, %v2441
        %v2586 = vadd.f32 %v2580, %v2502
        %v2587 = vadd.f32 %v2581, %v2503
        %v2588 = vadd.f32 %v2582, %v2504
        %v2589 = vadd.f32 %v2583, %v2505
        %v2590 = vadd.f32 %v2584, %v2506
        %v2591 = vadd.f32 %v2585, %v2507
        %v2592 = vmul.f32 %v2586, 0.33333334
        %v2593 = vmul.f32 %v2587, 0.33333334
        %v2594 = vmul.f32 %v2588, 0.33333334
        %v2595 = vmul.f32 %v2589, 0.33333334
        %v2596 = vmul.f32 %v2590, 0.33333334
        %v2597 = vmul.f32 %v2591, 0.33333334
        %v2598 = vmul.f32 %v2364, 3.0
        %v2599 = vmul.f32 %v2365, 3.0
        %v2600 = vmul.f32 %v2366, 3.0
        %v2601 = vmul.f32 %v2367, 3.0
        %v2602 = vmul.f32 %v2368, 3.0
        %v2603 = vmul.f32 %v2369, 3.0
        %v2604 = vsub.f32 %v2592, %v2598
        %v2605 = vsub.f32 %v2593, %v2599
        %v2606 = vsub.f32 %v2594, %v2600
        %v2607 = vsub.f32 %v2595, %v2601
        %v2608 = vsub.f32 %v2596, %v2602
        %v2609 = vsub.f32 %v2597, %v2603
        %v2610 = vadd.f32 %v2532, %v2538
        %v2611 = vadd.f32 %v2533, %v2539
        %v2612 = vadd.f32 %v2534, %v2540
        %v2613 = vadd.f32 %v2535, %v2541
        %v2614 = vadd.f32 %v2536, %v2542
        %v2615 = vadd.f32 %v2537, %v2543
        %v2616 = vmul.f32 %v2610, 0.083333336
        %v2617 = vmul.f32 %v2611, 0.083333336
        %v2618 = vmul.f32 %v2612, 0.083333336
        %v2619 = vmul.f32 %v2613, 0.083333336
        %v2620 = vmul.f32 %v2614, 0.083333336
        %v2621 = vmul.f32 %v2615, 0.083333336
        %v2622 = vmul.f32 %v2442, 0.33333334
        %v2623 = vmul.f32 %v2443, 0.33333334
        %v2624 = vmul.f32 %v2444, 0.33333334
        %v2625 = vmul.f32 %v2445, 0.33333334
        %v2626 = vmul.f32 %v2446, 0.33333334
        %v2627 = vmul.f32 %v2447, 0.33333334
        %v2628 = vadd.f32 %v2616, %v2622
        %v2629 = vadd.f32 %v2617, %v2623
        %v2630 = vadd.f32 %v2618, %v2624
        %v2631 = vadd.f32 %v2619, %v2625
        %v2632 = vadd.f32 %v2620, %v2626
        %v2633 = vadd.f32 %v2621, %v2627
        %v2634 = vsub.f32 %v2574, %v2568
        %v2635 = vsub.f32 %v2575, %v2569
        %v2636 = vsub.f32 %v2576, %v2570
        %v2637 = vsub.f32 %v2577, %v2571
        %v2638 = vsub.f32 %v2578, %v2572
        %v2639 = vsub.f32 %v2579, %v2573
        %v2640 = vand.u32 2147483647, %v2352
        %v2641 = vand.u32 2147483647, %v2353
        %v2642 = vand.u32 2147483647, %v2354
        %v2643 = vand.u32 2147483647, %v2355
        %v2644 = vand.u32 2147483647, %v2356
        %v2645 = vand.u32 2147483647, %v2357
        %v2646 = vand.u32 2147483647, %v2358
        %v2647 = vand.u32 2147483647, %v2359
        %v2648 = vand.u32 2147483647, %v2360
        %v2649 = vand.u32 2147483647, %v2361
        %v2650 = vand.u32 2147483647, %v2362
        %v2651 = vand.u32 2147483647, %v2363
        %v2652 = vadd.f32 %v2640, %v2646
        %v2653 = vadd.f32 %v2641, %v2647
        %v2654 = vadd.f32 %v2642, %v2648
        %v2655 = vadd.f32 %v2643, %v2649
        %v2656 = vadd.f32 %v2644, %v2650
        %v2657 = vadd.f32 %v2645, %v2651
        %v2658 = vmul.f32 %v2652, 0.5
        %v2659 = vmul.f32 %v2653, 0.5
        %v2660 = vmul.f32 %v2654, 0.5
        %v2661 = vmul.f32 %v2655, 0.5
        %v2662 = vmul.f32 %v2656, 0.5
        %v2663 = vmul.f32 %v2657, 0.5
        %v2664 = vmul.f32 %v2658, %v2604
        %v2665 = vmul.f32 %v2659, %v2605
        %v2666 = vmul.f32 %v2660, %v2606
        %v2667 = vmul.f32 %v2661, %v2607
        %v2668 = vmul.f32 %v2662, %v2608
        %v2669 = vmul.f32 %v2663, %v2609
        %v2670 = vand.u32 2147483647, %v2664
        %v2671 = vand.u32 2147483647, %v2665
        %v2672 = vand.u32 2147483647, %v2666
        %v2673 = vand.u32 2147483647, %v2667
        %v2674 = vand.u32 2147483647, %v2668
        %v2675 = vand.u32 2147483647, %v2669
        %v2676 = vmul.f32 %v2670, 0.25
        %v2677 = vmul.f32 %v2671, 0.25
        %v2678 = vmul.f32 %v2672, 0.25
        %v2679 = vmul.f32 %v2673, 0.25
        %v2680 = vmul.f32 %v2674, 0.25
        %v2681 = vmul.f32 %v2675, 0.25
        %v2682 = vand.u32 2147483647, %v2628
        %v2683 = vand.u32 2147483647, %v2629
        %v2684 = vand.u32 2147483647, %v2630
        %v2685 = vand.u32 2147483647, %v2631
        %v2686 = vand.u32 2147483647, %v2632
        %v2687 = vand.u32 2147483647, %v2633
        %v2688 = vand.u32 2147483647, %v2634
        %v2689 = vand.u32 2147483647, %v2635
        %v2690 = vand.u32 2147483647, %v2636
        %v2691 = vand.u32 2147483647, %v2637
        %v2692 = vand.u32 2147483647, %v2638
        %v2693 = vand.u32 2147483647, %v2639
        %v2694 = vadd.f32 %v2682, %v2688
        %v2695 = vadd.f32 %v2683, %v2689
        %v2696 = vadd.f32 %v2684, %v2690
        %v2697 = vadd.f32 %v2685, %v2691
        %v2698 = vadd.f32 %v2686, %v2692
        %v2699 = vadd.f32 %v2687, %v2693
        %v2700 = vmul.f32 %v2694, 0.5
        %v2701 = vmul.f32 %v2695, 0.5
        %v2702 = vmul.f32 %v2696, 0.5
        %v2703 = vmul.f32 %v2697, 0.5
        %v2704 = vmul.f32 %v2698, 0.5
        %v2705 = vmul.f32 %v2699, 0.5
        %v2706 = vadd.f32 %v2700, 0.001
        %v2707 = vadd.f32 %v2701, 0.001
        %v2708 = vadd.f32 %v2702, 0.001
        %v2709 = vadd.f32 %v2703, 0.001
        %v2710 = vadd.f32 %v2704, 0.001
        %v2711 = vadd.f32 %v2705, 0.001
        %v2712 = vrcp.pop %v2706
        %v2713 = vrcp.pop %v2707
        %v2714 = vrcp.pop %v2708
        %v2715 = vrcp.pop %v2709
        %v2716 = vrcp.pop %v2710
        %v2717 = vrcp.pop %v2711
        %v2718 = vmul.f32 %v2676, %v2712
        %v2719 = vmul.f32 %v2677, %v2713
        %v2720 = vmul.f32 %v2678, %v2714
        %v2721 = vmul.f32 %v2679, %v2715
        %v2722 = vmul.f32 %v2680, %v2716
        %v2723 = vmul.f32 %v2681, %v2717
        %v2724 = vmin.f32 %v2718, 0.01
        %v2725 = vmin.f32 %v2719, 0.01
        %v2726 = vmin.f32 %v2720, 0.01
        %v2727 = vmin.f32 %v2721, 0.01
        %v2728 = vmin.f32 %v2722, 0.01
        %v2729 = vmin.f32 %v2723, 0.01
        %v2730 = vmul.f32 %v2718, %v2604
        %v2731 = vmul.f32 %v2719, %v2605
        %v2732 = vmul.f32 %v2720, %v2606
        %v2733 = vmul.f32 %v2721, %v2607
        %v2734 = vmul.f32 %v2722, %v2608
        %v2735 = vmul.f32 %v2723, %v2609
        %v2736 = vmul.f32 %v2364, %v2724
        %v2737 = vmul.f32 %v2365, %v2725
        %v2738 = vmul.f32 %v2366, %v2726
        %v2739 = vmul.f32 %v2367, %v2727
        %v2740 = vmul.f32 %v2368, %v2728
        %v2741 = vmul.f32 %v2369, %v2729
        %2742 = vrot.lane.b32.xlu0 %v2736, 1
        %v2743 = vpop.permute.xlu0 %2742
        %2744 = vrot.lane.b32.xlu0 %v2738, 1
        %v2745 = vpop.permute.xlu0 %2744
        %2746 = vrot.lane.b32.xlu0 %v2740, 1
        %v2747 = vpop.permute.xlu0 %2746
        %2748 = vrot.lane.b32.xlu0 %v2737, 1
        %v2749 = vpop.permute.xlu0 %2748
        %2750 = vrot.lane.b32.xlu0 %v2739, 1
        %v2751 = vpop.permute.xlu0 %2750
        %2752 = vrot.lane.b32.xlu0 %v2741, 1
        %v2753 = vpop.permute.xlu0 %2752
        %v2754 = vsel %vm566, %v2743, %v2749
        %v2755 = vsel %vm566, %v2745, %v2751
        %v2756 = vsel %vm566, %v2747, %v2753
        %v2757 = vsel %vm566, %v2749, %v2743
        %v2758 = vsel %vm566, %v2751, %v2745
        %v2759 = vsel %vm566, %v2753, %v2747
        %2760 = vrot.lane.b32.xlu0 %v2736, 127
        %v2761 = vpop.permute.xlu0 %2760
        %2762 = vrot.lane.b32.xlu0 %v2738, 127
        %v2763 = vpop.permute.xlu0 %2762
        %2764 = vrot.lane.b32.xlu0 %v2740, 127
        %v2765 = vpop.permute.xlu0 %2764
        %2766 = vrot.lane.b32.xlu0 %v2737, 127
        %v2767 = vpop.permute.xlu0 %2766
        %2768 = vrot.lane.b32.xlu0 %v2739, 127
        %v2769 = vpop.permute.xlu0 %2768
        %2770 = vrot.lane.b32.xlu0 %v2741, 127
        %v2771 = vpop.permute.xlu0 %2770
        %v2772 = vsel %vm585, %v2761, %v2767
        %v2773 = vsel %vm585, %v2763, %v2769
        %v2774 = vsel %vm585, %v2765, %v2771
        %v2775 = vsel %vm585, %v2767, %v2761
        %v2776 = vsel %vm585, %v2769, %v2763
        %v2777 = vsel %vm585, %v2771, %v2765
        %v2778 = vsel %vm550, 0.0, %v2757
        %v2779 = vsel %vm551, 0.0, %v2754
        %v2780 = vsel %vm550, 0.0, %v2758
        %v2781 = vsel %vm551, 0.0, %v2755
        %v2782 = vsel %vm550, 0.0, %v2759
        %v2783 = vsel %vm551, 0.0, %v2756
        %v2784 = vsel %vm552, 0.0, %v2772
        %v2785 = vsel %vm553, 0.0, %v2775
        %v2786 = vsel %vm552, 0.0, %v2773
        %v2787 = vsel %vm553, 0.0, %v2776
        %v2788 = vsel %vm552, 0.0, %v2774
        %v2789 = vsel %vm553, 0.0, %v2777
        %v2790 = vadd.f32 %v2778, %v2736
        %v2791 = vadd.f32 %v2779, %v2737
        %v2792 = vadd.f32 %v2780, %v2738
        %v2793 = vadd.f32 %v2781, %v2739
        %v2794 = vadd.f32 %v2782, %v2740
        %v2795 = vadd.f32 %v2783, %v2741
        %v2796 = vadd.f32 %v2790, %v2784
        %v2797 = vadd.f32 %v2791, %v2785
        %v2798 = vadd.f32 %v2792, %v2786
        %v2799 = vadd.f32 %v2793, %v2787
        %v2800 = vadd.f32 %v2794, %v2788
        %v2801 = vadd.f32 %v2795, %v2789
        %v2802 = vrot.slane %v2796, 7
        %v2803 = vrot.slane %v2797, 7
        %v2804 = vrot.slane %v2798, 7
        %v2805 = vrot.slane %v2799, 7
        %v2806 = vrot.slane %v2800, 7
        %v2807 = vrot.slane %v2801, 7
        %v2808 = vsel %vm652, %v2804, %v2806
        %v2809 = vsel %vm652, %v2805, %v2807
        %v2810 = vsel %vm652, %v2802, %v2804
        %v2811 = vsel %vm652, %v2803, %v2805
        %v2812 = vsel %vm652, %v2806, %v2802
        %v2813 = vsel %vm652, %v2807, %v2803
        %v2814 = vrot.slane %v2796, 1
        %v2815 = vrot.slane %v2797, 1
        %v2816 = vrot.slane %v2798, 1
        %v2817 = vrot.slane %v2799, 1
        %v2818 = vrot.slane %v2800, 1
        %v2819 = vrot.slane %v2801, 1
        %v2820 = vsel %vm665, %v2816, %v2818
        %v2821 = vsel %vm665, %v2817, %v2819
        %v2822 = vsel %vm665, %v2814, %v2816
        %v2823 = vsel %vm665, %v2815, %v2817
        %v2824 = vsel %vm665, %v2818, %v2814
        %v2825 = vsel %vm665, %v2819, %v2815
        %v2826 = vsel %vm544, 0.0, %v2812
        %v2827 = vsel %vm544, 0.0, %v2813
        %v2828 = vsel %vm545, 0.0, %v2810
        %v2829 = vsel %vm545, 0.0, %v2811
        %v2830 = vsel %vm546, 0.0, %v2808
        %v2831 = vsel %vm546, 0.0, %v2809
        %v2832 = vsel %vm547, 0.0, %v2822
        %v2833 = vsel %vm547, 0.0, %v2823
        %v2834 = vsel %vm548, 0.0, %v2820
        %v2835 = vsel %vm548, 0.0, %v2821
        %v2836 = vsel %vm549, 0.0, %v2824
        %v2837 = vsel %vm549, 0.0, %v2825
        %v2838 = vadd.f32 %v2826, %v2796
        %v2839 = vadd.f32 %v2827, %v2797
        %v2840 = vadd.f32 %v2828, %v2798
        %v2841 = vadd.f32 %v2829, %v2799
        %v2842 = vadd.f32 %v2830, %v2800
        %v2843 = vadd.f32 %v2831, %v2801
        %v2844 = vadd.f32 %v2838, %v2832
        %v2845 = vadd.f32 %v2839, %v2833
        %v2846 = vadd.f32 %v2840, %v2834
        %v2847 = vadd.f32 %v2841, %v2835
        %v2848 = vadd.f32 %v2842, %v2836
        %v2849 = vadd.f32 %v2843, %v2837
        %v2850 = vmul.f32 %v2844, 0.33333334
        %v2851 = vmul.f32 %v2845, 0.33333334
        %v2852 = vmul.f32 %v2846, 0.33333334
        %v2853 = vmul.f32 %v2847, 0.33333334
        %v2854 = vmul.f32 %v2848, 0.33333334
        %v2855 = vmul.f32 %v2849, 0.33333334
        %v2856 = vmul.f32 %v2736, 3.0
        %v2857 = vmul.f32 %v2737, 3.0
        %v2858 = vmul.f32 %v2738, 3.0
        %v2859 = vmul.f32 %v2739, 3.0
        %v2860 = vmul.f32 %v2740, 3.0
        %v2861 = vmul.f32 %v2741, 3.0
        %v2862 = vsub.f32 %v2850, %v2856
        %v2863 = vsub.f32 %v2851, %v2857
        %v2864 = vsub.f32 %v2852, %v2858
        %v2865 = vsub.f32 %v2853, %v2859
        %v2866 = vsub.f32 %v2854, %v2860
        %v2867 = vsub.f32 %v2855, %v2861
        %v2868 = vadd.f32 %v2730, %v2862
        %v2869 = vadd.f32 %v2731, %v2863
        %v2870 = vadd.f32 %v2732, %v2864
        %v2871 = vadd.f32 %v2733, %v2865
        %v2872 = vadd.f32 %v2734, %v2866
        %v2873 = vadd.f32 %v2735, %v2867
        %2874 = vrot.lane.b32.xlu0 %v2724, 1
        %v2875 = vpop.permute.xlu0 %2874
        %2876 = vrot.lane.b32.xlu0 %v2726, 1
        %v2877 = vpop.permute.xlu0 %2876
        %2878 = vrot.lane.b32.xlu0 %v2728, 1
        %v2879 = vpop.permute.xlu0 %2878
        %2880 = vrot.lane.b32.xlu0 %v2725, 1
        %v2881 = vpop.permute.xlu0 %2880
        %2882 = vrot.lane.b32.xlu0 %v2727, 1
        %v2883 = vpop.permute.xlu0 %2882
        %2884 = vrot.lane.b32.xlu0 %v2729, 1
        %v2885 = vpop.permute.xlu0 %2884
        %v2886 = vsel %vm566, %v2875, %v2881
        %v2887 = vsel %vm566, %v2877, %v2883
        %v2888 = vsel %vm566, %v2879, %v2885
        %v2889 = vsel %vm566, %v2881, %v2875
        %v2890 = vsel %vm566, %v2883, %v2877
        %v2891 = vsel %vm566, %v2885, %v2879
        %2892 = vrot.lane.b32.xlu0 %v2724, 127
        %v2893 = vpop.permute.xlu0 %2892
        %2894 = vrot.lane.b32.xlu0 %v2726, 127
        %v2895 = vpop.permute.xlu0 %2894
        %2896 = vrot.lane.b32.xlu0 %v2728, 127
        %v2897 = vpop.permute.xlu0 %2896
        %2898 = vrot.lane.b32.xlu0 %v2725, 127
        %v2899 = vpop.permute.xlu0 %2898
        %2900 = vrot.lane.b32.xlu0 %v2727, 127
        %v2901 = vpop.permute.xlu0 %2900
        %2902 = vrot.lane.b32.xlu0 %v2729, 127
        %v2903 = vpop.permute.xlu0 %2902
        %v2904 = vsel %vm585, %v2893, %v2899
        %v2905 = vsel %vm585, %v2895, %v2901
        %v2906 = vsel %vm585, %v2897, %v2903
        %v2907 = vsel %vm585, %v2899, %v2893
        %v2908 = vsel %vm585, %v2901, %v2895
        %v2909 = vsel %vm585, %v2903, %v2897
        %v2910 = vsel %vm550, 0.0, %v2889
        %v2911 = vsel %vm551, 0.0, %v2886
        %v2912 = vsel %vm550, 0.0, %v2890
        %v2913 = vsel %vm551, 0.0, %v2887
        %v2914 = vsel %vm550, 0.0, %v2891
        %v2915 = vsel %vm551, 0.0, %v2888
        %v2916 = vsel %vm552, 0.0, %v2904
        %v2917 = vsel %vm553, 0.0, %v2907
        %v2918 = vsel %vm552, 0.0, %v2905
        %v2919 = vsel %vm553, 0.0, %v2908
        %v2920 = vsel %vm552, 0.0, %v2906
        %v2921 = vsel %vm553, 0.0, %v2909
        %v2922 = vadd.f32 %v2910, %v2724
        %v2923 = vadd.f32 %v2911, %v2725
        %v2924 = vadd.f32 %v2912, %v2726
        %v2925 = vadd.f32 %v2913, %v2727
        %v2926 = vadd.f32 %v2914, %v2728
        %v2927 = vadd.f32 %v2915, %v2729
        %v2928 = vadd.f32 %v2922, %v2916
        %v2929 = vadd.f32 %v2923, %v2917
        %v2930 = vadd.f32 %v2924, %v2918
        %v2931 = vadd.f32 %v2925, %v2919
        %v2932 = vadd.f32 %v2926, %v2920
        %v2933 = vadd.f32 %v2927, %v2921
        %v2934 = vrot.slane %v2928, 7
        %v2935 = vrot.slane %v2929, 7
        %v2936 = vrot.slane %v2930, 7
        %v2937 = vrot.slane %v2931, 7
        %v2938 = vrot.slane %v2932, 7
        %v2939 = vrot.slane %v2933, 7
        %v2940 = vsel %vm652, %v2936, %v2938
        %v2941 = vsel %vm652, %v2937, %v2939
        %v2942 = vsel %vm652, %v2934, %v2936
        %v2943 = vsel %vm652, %v2935, %v2937
        %v2944 = vsel %vm652, %v2938, %v2934
        %v2945 = vsel %vm652, %v2939, %v2935
        %v2946 = vrot.slane %v2928, 1
        %v2947 = vrot.slane %v2929, 1
        %v2948 = vrot.slane %v2930, 1
        %v2949 = vrot.slane %v2931, 1
        %v2950 = vrot.slane %v2932, 1
        %v2951 = vrot.slane %v2933, 1
        %v2952 = vsel %vm665, %v2948, %v2950
        %v2953 = vsel %vm665, %v2949, %v2951
        %v2954 = vsel %vm665, %v2946, %v2948
        %v2955 = vsel %vm665, %v2947, %v2949
        %v2956 = vsel %vm665, %v2950, %v2946
        %v2957 = vsel %vm665, %v2951, %v2947
        %v2958 = vsel %vm544, 0.0, %v2944
        %v2959 = vsel %vm544, 0.0, %v2945
        %v2960 = vsel %vm545, 0.0, %v2942
        %v2961 = vsel %vm545, 0.0, %v2943
        %v2962 = vsel %vm546, 0.0, %v2940
        %v2963 = vsel %vm546, 0.0, %v2941
        %v2964 = vsel %vm547, 0.0, %v2954
        %v2965 = vsel %vm547, 0.0, %v2955
        %v2966 = vsel %vm548, 0.0, %v2952
        %v2967 = vsel %vm548, 0.0, %v2953
        %v2968 = vsel %vm549, 0.0, %v2956
        %v2969 = vsel %vm549, 0.0, %v2957
        %v2970 = vadd.f32 %v2958, %v2928
        %v2971 = vadd.f32 %v2959, %v2929
        %v2972 = vadd.f32 %v2960, %v2930
        %v2973 = vadd.f32 %v2961, %v2931
        %v2974 = vadd.f32 %v2962, %v2932
        %v2975 = vadd.f32 %v2963, %v2933
        %v2976 = vadd.f32 %v2970, %v2964
        %v2977 = vadd.f32 %v2971, %v2965
        %v2978 = vadd.f32 %v2972, %v2966
        %v2979 = vadd.f32 %v2973, %v2967
        %v2980 = vadd.f32 %v2974, %v2968
        %v2981 = vadd.f32 %v2975, %v2969
        %v2982 = vmul.f32 %v2976, 0.33333334
        %v2983 = vmul.f32 %v2977, 0.33333334
        %v2984 = vmul.f32 %v2978, 0.33333334
        %v2985 = vmul.f32 %v2979, 0.33333334
        %v2986 = vmul.f32 %v2980, 0.33333334
        %v2987 = vmul.f32 %v2981, 0.33333334
        %v2988 = vmul.f32 %v2724, 3.0
        %v2989 = vmul.f32 %v2725, 3.0
        %v2990 = vmul.f32 %v2726, 3.0
        %v2991 = vmul.f32 %v2727, 3.0
        %v2992 = vmul.f32 %v2728, 3.0
        %v2993 = vmul.f32 %v2729, 3.0
        %v2994 = vsub.f32 %v2982, %v2988
        %v2995 = vsub.f32 %v2983, %v2989
        %v2996 = vsub.f32 %v2984, %v2990
        %v2997 = vsub.f32 %v2985, %v2991
        %v2998 = vsub.f32 %v2986, %v2992
        %v2999 = vsub.f32 %v2987, %v2993
        %v3000 = vmul.f32 %v2364, %v2994
        %v3001 = vmul.f32 %v2365, %v2995
        %v3002 = vmul.f32 %v2366, %v2996
        %v3003 = vmul.f32 %v2367, %v2997
        %v3004 = vmul.f32 %v2368, %v2998
        %v3005 = vmul.f32 %v2369, %v2999
        %v3006 = vsub.f32 %v2868, %v3000
        %v3007 = vsub.f32 %v2869, %v3001
        %v3008 = vsub.f32 %v2870, %v3002
        %v3009 = vsub.f32 %v2871, %v3003
        %v3010 = vsub.f32 %v2872, %v3004
        %v3011 = vsub.f32 %v2873, %v3005
        %v3012 = vmul.f32 %v3006, 0.5
        %v3013 = vmul.f32 %v3007, 0.5
        %v3014 = vmul.f32 %v3008, 0.5
        %v3015 = vmul.f32 %v3009, 0.5
        %v3016 = vmul.f32 %v3010, 0.5
        %v3017 = vmul.f32 %v3011, 0.5
        %3018 = vrot.lane.b32.xlu0 %v2352, 1
        %v3019 = vpop.permute.xlu0 %3018
        %3020 = vrot.lane.b32.xlu0 %v2354, 1
        %v3021 = vpop.permute.xlu0 %3020
        %3022 = vrot.lane.b32.xlu0 %v2356, 1
        %v3023 = vpop.permute.xlu0 %3022
        %3024 = vrot.lane.b32.xlu0 %v2353, 1
        %v3025 = vpop.permute.xlu0 %3024
        %3026 = vrot.lane.b32.xlu0 %v2355, 1
        %v3027 = vpop.permute.xlu0 %3026
        %3028 = vrot.lane.b32.xlu0 %v2357, 1
        %v3029 = vpop.permute.xlu0 %3028
        %v3030 = vsel %vm566, %v3019, %v3025
        %v3031 = vsel %vm566, %v3021, %v3027
        %v3032 = vsel %vm566, %v3023, %v3029
        %v3033 = vsel %vm566, %v3025, %v3019
        %v3034 = vsel %vm566, %v3027, %v3021
        %v3035 = vsel %vm566, %v3029, %v3023
        %3036 = vrot.lane.b32.xlu0 %v2352, 127
        %v3037 = vpop.permute.xlu0 %3036
        %3038 = vrot.lane.b32.xlu0 %v2354, 127
        %v3039 = vpop.permute.xlu0 %3038
        %3040 = vrot.lane.b32.xlu0 %v2356, 127
        %v3041 = vpop.permute.xlu0 %3040
        %3042 = vrot.lane.b32.xlu0 %v2353, 127
        %v3043 = vpop.permute.xlu0 %3042
        %3044 = vrot.lane.b32.xlu0 %v2355, 127
        %v3045 = vpop.permute.xlu0 %3044
        %3046 = vrot.lane.b32.xlu0 %v2357, 127
        %v3047 = vpop.permute.xlu0 %3046
        %v3048 = vsel %vm585, %v3037, %v3043
        %v3049 = vsel %vm585, %v3039, %v3045
        %v3050 = vsel %vm585, %v3041, %v3047
        %v3051 = vsel %vm585, %v3043, %v3037
        %v3052 = vsel %vm585, %v3045, %v3039
        %v3053 = vsel %vm585, %v3047, %v3041
        %v3054 = vsel %vm550, 0.0, %v3033
        %v3055 = vsel %vm551, 0.0, %v3030
        %v3056 = vsel %vm550, 0.0, %v3034
        %v3057 = vsel %vm551, 0.0, %v3031
        %v3058 = vsel %vm550, 0.0, %v3035
        %v3059 = vsel %vm551, 0.0, %v3032
        %v3060 = vsel %vm552, 0.0, %v3048
        %v3061 = vsel %vm553, 0.0, %v3051
        %v3062 = vsel %vm552, 0.0, %v3049
        %v3063 = vsel %vm553, 0.0, %v3052
        %v3064 = vsel %vm552, 0.0, %v3050
        %v3065 = vsel %vm553, 0.0, %v3053
        %v3066 = vsub.f32 %v3054, %v3060
        %v3067 = vsub.f32 %v3055, %v3061
        %v3068 = vsub.f32 %v3056, %v3062
        %v3069 = vsub.f32 %v3057, %v3063
        %v3070 = vsub.f32 %v3058, %v3064
        %v3071 = vsub.f32 %v3059, %v3065
        %v3072 = vrot.slane %v3066, 7
        %v3073 = vrot.slane %v3067, 7
        %v3074 = vrot.slane %v3068, 7
        %v3075 = vrot.slane %v3069, 7
        %v3076 = vrot.slane %v3070, 7
        %v3077 = vrot.slane %v3071, 7
        %v3078 = vsel %vm652, %v3074, %v3076
        %v3079 = vsel %vm652, %v3075, %v3077
        %v3080 = vsel %vm652, %v3072, %v3074
        %v3081 = vsel %vm652, %v3073, %v3075
        %v3082 = vsel %vm652, %v3076, %v3072
        %v3083 = vsel %vm652, %v3077, %v3073
        %v3084 = vrot.slane %v3066, 1
        %v3085 = vrot.slane %v3067, 1
        %v3086 = vrot.slane %v3068, 1
        %v3087 = vrot.slane %v3069, 1
        %v3088 = vrot.slane %v3070, 1
        %v3089 = vrot.slane %v3071, 1
        %v3090 = vsel %vm665, %v3086, %v3088
        %v3091 = vsel %vm665, %v3087, %v3089
        %v3092 = vsel %vm665, %v3084, %v3086
        %v3093 = vsel %vm665, %v3085, %v3087
        %v3094 = vsel %vm665, %v3088, %v3084
        %v3095 = vsel %vm665, %v3089, %v3085
        %v3096 = vsel %vm544, %v3066, %v3082
        %v3097 = vsel %vm544, %v3067, %v3083
        %v3098 = vsel %vm545, %v3068, %v3080
        %v3099 = vsel %vm545, %v3069, %v3081
        %v3100 = vsel %vm546, %v3070, %v3078
        %v3101 = vsel %vm546, %v3071, %v3079
        %v3102 = vsel %vm547, %v3066, %v3092
        %v3103 = vsel %vm547, %v3067, %v3093
        %v3104 = vsel %vm548, %v3068, %v3090
        %v3105 = vsel %vm548, %v3069, %v3091
        %v3106 = vsel %vm549, %v3070, %v3094
        %v3107 = vsel %vm549, %v3071, %v3095
        %v3108 = vadd.f32 %v3096, %v3102
        %v3109 = vadd.f32 %v3097, %v3103
        %v3110 = vadd.f32 %v3098, %v3104
        %v3111 = vadd.f32 %v3099, %v3105
        %v3112 = vadd.f32 %v3100, %v3106
        %v3113 = vadd.f32 %v3101, %v3107
        %v3114 = vmul.f32 %v3108, 0.083333336
        %v3115 = vmul.f32 %v3109, 0.083333336
        %v3116 = vmul.f32 %v3110, 0.083333336
        %v3117 = vmul.f32 %v3111, 0.083333336
        %v3118 = vmul.f32 %v3112, 0.083333336
        %v3119 = vmul.f32 %v3113, 0.083333336
        %v3120 = vmul.f32 %v3066, 0.33333334
        %v3121 = vmul.f32 %v3067, 0.33333334
        %v3122 = vmul.f32 %v3068, 0.33333334
        %v3123 = vmul.f32 %v3069, 0.33333334
        %v3124 = vmul.f32 %v3070, 0.33333334
        %v3125 = vmul.f32 %v3071, 0.33333334
        %v3126 = vadd.f32 %v3114, %v3120
        %v3127 = vadd.f32 %v3115, %v3121
        %v3128 = vadd.f32 %v3116, %v3122
        %v3129 = vadd.f32 %v3117, %v3123
        %v3130 = vadd.f32 %v3118, %v3124
        %v3131 = vadd.f32 %v3119, %v3125
        %3132 = vrot.lane.b32.xlu0 %v2358, 1
        %v3133 = vpop.permute.xlu0 %3132
        %3134 = vrot.lane.b32.xlu0 %v2360, 1
        %v3135 = vpop.permute.xlu0 %3134
        %3136 = vrot.lane.b32.xlu0 %v2362, 1
        %v3137 = vpop.permute.xlu0 %3136
        %3138 = vrot.lane.b32.xlu0 %v2359, 1
        %v3139 = vpop.permute.xlu0 %3138
        %3140 = vrot.lane.b32.xlu0 %v2361, 1
        %v3141 = vpop.permute.xlu0 %3140
        %3142 = vrot.lane.b32.xlu0 %v2363, 1
        %v3143 = vpop.permute.xlu0 %3142
        %v3144 = vsel %vm566, %v3133, %v3139
        %v3145 = vsel %vm566, %v3135, %v3141
        %v3146 = vsel %vm566, %v3137, %v3143
        %v3147 = vsel %vm566, %v3139, %v3133
        %v3148 = vsel %vm566, %v3141, %v3135
        %v3149 = vsel %vm566, %v3143, %v3137
        %3150 = vrot.lane.b32.xlu0 %v2358, 127
        %v3151 = vpop.permute.xlu0 %3150
        %3152 = vrot.lane.b32.xlu0 %v2360, 127
        %v3153 = vpop.permute.xlu0 %3152
        %3154 = vrot.lane.b32.xlu0 %v2362, 127
        %v3155 = vpop.permute.xlu0 %3154
        %3156 = vrot.lane.b32.xlu0 %v2359, 127
        %v3157 = vpop.permute.xlu0 %3156
        %3158 = vrot.lane.b32.xlu0 %v2361, 127
        %v3159 = vpop.permute.xlu0 %3158
        %3160 = vrot.lane.b32.xlu0 %v2363, 127
        %v3161 = vpop.permute.xlu0 %3160
        %v3162 = vsel %vm585, %v3151, %v3157
        %v3163 = vsel %vm585, %v3153, %v3159
        %v3164 = vsel %vm585, %v3155, %v3161
        %v3165 = vsel %vm585, %v3157, %v3151
        %v3166 = vsel %vm585, %v3159, %v3153
        %v3167 = vsel %vm585, %v3161, %v3155
        %v3168 = vsel %vm550, %v2358, %v3147
        %v3169 = vsel %vm551, %v2359, %v3144
        %v3170 = vsel %vm550, %v2360, %v3148
        %v3171 = vsel %vm551, %v2361, %v3145
        %v3172 = vsel %vm550, %v2362, %v3149
        %v3173 = vsel %vm551, %v2363, %v3146
        %v3174 = vsel %vm552, %v2358, %v3162
        %v3175 = vsel %vm553, %v2359, %v3165
        %v3176 = vsel %vm552, %v2360, %v3163
        %v3177 = vsel %vm553, %v2361, %v3166
        %v3178 = vsel %vm552, %v2362, %v3164
        %v3179 = vsel %vm553, %v2363, %v3167
        %v3180 = vadd.f32 %v3168, %v3174
        %v3181 = vadd.f32 %v3169, %v3175
        %v3182 = vadd.f32 %v3170, %v3176
        %v3183 = vadd.f32 %v3171, %v3177
        %v3184 = vadd.f32 %v3172, %v3178
        %v3185 = vadd.f32 %v3173, %v3179
        %v3186 = vmul.f32 %v3180, 0.083333336
        %v3187 = vmul.f32 %v3181, 0.083333336
        %v3188 = vmul.f32 %v3182, 0.083333336
        %v3189 = vmul.f32 %v3183, 0.083333336
        %v3190 = vmul.f32 %v3184, 0.083333336
        %v3191 = vmul.f32 %v3185, 0.083333336
        %v3192 = vmul.f32 %v2358, 0.33333334
        %v3193 = vmul.f32 %v2359, 0.33333334
        %v3194 = vmul.f32 %v2360, 0.33333334
        %v3195 = vmul.f32 %v2361, 0.33333334
        %v3196 = vmul.f32 %v2362, 0.33333334
        %v3197 = vmul.f32 %v2363, 0.33333334
        %v3198 = vadd.f32 %v3186, %v3192
        %v3199 = vadd.f32 %v3187, %v3193
        %v3200 = vadd.f32 %v3188, %v3194
        %v3201 = vadd.f32 %v3189, %v3195
        %v3202 = vadd.f32 %v3190, %v3196
        %v3203 = vadd.f32 %v3191, %v3197
        %v3204 = vrot.slane %v3198, 7
        %v3205 = vrot.slane %v3199, 7
        %v3206 = vrot.slane %v3200, 7
        %v3207 = vrot.slane %v3201, 7
        %v3208 = vrot.slane %v3202, 7
        %v3209 = vrot.slane %v3203, 7
        %v3210 = vsel %vm652, %v3206, %v3208
        %v3211 = vsel %vm652, %v3207, %v3209
        %v3212 = vsel %vm652, %v3204, %v3206
        %v3213 = vsel %vm652, %v3205, %v3207
        %v3214 = vsel %vm652, %v3208, %v3204
        %v3215 = vsel %vm652, %v3209, %v3205
        %v3216 = vrot.slane %v3198, 1
        %v3217 = vrot.slane %v3199, 1
        %v3218 = vrot.slane %v3200, 1
        %v3219 = vrot.slane %v3201, 1
        %v3220 = vrot.slane %v3202, 1
        %v3221 = vrot.slane %v3203, 1
        %v3222 = vsel %vm665, %v3218, %v3220
        %v3223 = vsel %vm665, %v3219, %v3221
        %v3224 = vsel %vm665, %v3216, %v3218
        %v3225 = vsel %vm665, %v3217, %v3219
        %v3226 = vsel %vm665, %v3220, %v3216
        %v3227 = vsel %vm665, %v3221, %v3217
        %v3228 = vsel %vm544, 0.0, %v3214
        %v3229 = vsel %vm544, 0.0, %v3215
        %v3230 = vsel %vm545, 0.0, %v3212
        %v3231 = vsel %vm545, 0.0, %v3213
        %v3232 = vsel %vm546, 0.0, %v3210
        %v3233 = vsel %vm546, 0.0, %v3211
        %v3234 = vsel %vm547, 0.0, %v3224
        %v3235 = vsel %vm547, 0.0, %v3225
        %v3236 = vsel %vm548, 0.0, %v3222
        %v3237 = vsel %vm548, 0.0, %v3223
        %v3238 = vsel %vm549, 0.0, %v3226
        %v3239 = vsel %vm549, 0.0, %v3227
        %v3240 = vsub.f32 %v3234, %v3228
        %v3241 = vsub.f32 %v3235, %v3229
        %v3242 = vsub.f32 %v3236, %v3230
        %v3243 = vsub.f32 %v3237, %v3231
        %v3244 = vsub.f32 %v3238, %v3232
        %v3245 = vsub.f32 %v3239, %v3233
        %v3246 = vsub.f32 0.0, %v2628
        %v3247 = vsub.f32 0.0, %v2629
        %v3248 = vsub.f32 0.0, %v2630
        %v3249 = vsub.f32 0.0, %v2631
        %v3250 = vsub.f32 0.0, %v2632
        %v3251 = vsub.f32 0.0, %v2633
        %v3252 = vmul.f32 %v3246, %v2352
        %v3253 = vmul.f32 %v3247, %v2353
        %v3254 = vmul.f32 %v3248, %v2354
        %v3255 = vmul.f32 %v3249, %v2355
        %v3256 = vmul.f32 %v3250, %v2356
        %v3257 = vmul.f32 %v3251, %v2357
        %v3258 = vmul.f32 %v2634, %v2358
        %v3259 = vmul.f32 %v2635, %v2359
        %v3260 = vmul.f32 %v2636, %v2360
        %v3261 = vmul.f32 %v2637, %v2361
        %v3262 = vmul.f32 %v2638, %v2362
        %v3263 = vmul.f32 %v2639, %v2363
        %v3264 = vsub.f32 %v3252, %v3258
        %v3265 = vsub.f32 %v3253, %v3259
        %v3266 = vsub.f32 %v3254, %v3260
        %v3267 = vsub.f32 %v3255, %v3261
        %v3268 = vsub.f32 %v3256, %v3262
        %v3269 = vsub.f32 %v3257, %v3263
        %v3270 = vadd.f32 %v3126, %v3240
        %v3271 = vadd.f32 %v3127, %v3241
        %v3272 = vadd.f32 %v3128, %v3242
        %v3273 = vadd.f32 %v3129, %v3243
        %v3274 = vadd.f32 %v3130, %v3244
        %v3275 = vadd.f32 %v3131, %v3245
        %v3276 = vmul.f32 %v2364, %v3270
        %v3277 = vmul.f32 %v2365, %v3271
        %v3278 = vmul.f32 %v2366, %v3272
        %v3279 = vmul.f32 %v2367, %v3273
        %v3280 = vmul.f32 %v2368, %v3274
        %v3281 = vmul.f32 %v2369, %v3275
        %v3282 = vsub.f32 %v3264, %v3276
        %v3283 = vsub.f32 %v3265, %v3277
        %v3284 = vsub.f32 %v3266, %v3278
        %v3285 = vsub.f32 %v3267, %v3279
        %v3286 = vsub.f32 %v3268, %v3280
        %v3287 = vsub.f32 %v3269, %v3281
        %v3288 = vadd.f32 %v3282, %v3012
        %v3289 = vadd.f32 %v3283, %v3013
        %v3290 = vadd.f32 %v3284, %v3014
        %v3291 = vadd.f32 %v3285, %v3015
        %v3292 = vadd.f32 %v3286, %v3016
        %v3293 = vadd.f32 %v3287, %v3017
        %3294 = vrot.lane.b32.xlu0 %v519, 1
        %v3295 = vpop.permute.xlu0 %3294
        %3296 = vrot.lane.b32.xlu0 %v521, 1
        %v3297 = vpop.permute.xlu0 %3296
        %3298 = vrot.lane.b32.xlu0 %v523, 1
        %v3299 = vpop.permute.xlu0 %3298
        %3300 = vrot.lane.b32.xlu0 %v520, 1
        %v3301 = vpop.permute.xlu0 %3300
        %3302 = vrot.lane.b32.xlu0 %v522, 1
        %v3303 = vpop.permute.xlu0 %3302
        %3304 = vrot.lane.b32.xlu0 %v524, 1
        %v3305 = vpop.permute.xlu0 %3304
        %v3306 = vsel %vm566, %v3295, %v3301
        %v3307 = vsel %vm566, %v3297, %v3303
        %v3308 = vsel %vm566, %v3299, %v3305
        %v3309 = vsel %vm566, %v3301, %v3295
        %v3310 = vsel %vm566, %v3303, %v3297
        %v3311 = vsel %vm566, %v3305, %v3299
        %3312 = vrot.lane.b32.xlu0 %v519, 127
        %v3313 = vpop.permute.xlu0 %3312
        %3314 = vrot.lane.b32.xlu0 %v521, 127
        %v3315 = vpop.permute.xlu0 %3314
        %3316 = vrot.lane.b32.xlu0 %v523, 127
        %v3317 = vpop.permute.xlu0 %3316
        %3318 = vrot.lane.b32.xlu0 %v520, 127
        %v3319 = vpop.permute.xlu0 %3318
        %3320 = vrot.lane.b32.xlu0 %v522, 127
        %v3321 = vpop.permute.xlu0 %3320
        %3322 = vrot.lane.b32.xlu0 %v524, 127
        %v3323 = vpop.permute.xlu0 %3322
        %v3324 = vsel %vm585, %v3313, %v3319
        %v3325 = vsel %vm585, %v3315, %v3321
        %v3326 = vsel %vm585, %v3317, %v3323
        %v3327 = vsel %vm585, %v3319, %v3313
        %v3328 = vsel %vm585, %v3321, %v3315
        %v3329 = vsel %vm585, %v3323, %v3317
        %v3330 = vsel %vm550, 0.0, %v3309
        %v3331 = vsel %vm551, 0.0, %v3306
        %v3332 = vsel %vm550, 0.0, %v3310
        %v3333 = vsel %vm551, 0.0, %v3307
        %v3334 = vsel %vm550, 0.0, %v3311
        %v3335 = vsel %vm551, 0.0, %v3308
        %v3336 = vsel %vm552, 0.0, %v3324
        %v3337 = vsel %vm553, 0.0, %v3327
        %v3338 = vsel %vm552, 0.0, %v3325
        %v3339 = vsel %vm553, 0.0, %v3328
        %v3340 = vsel %vm552, 0.0, %v3326
        %v3341 = vsel %vm553, 0.0, %v3329
        %v3342 = vadd.f32 %v3330, %v519
        %v3343 = vadd.f32 %v3331, %v520
        %v3344 = vadd.f32 %v3332, %v521
        %v3345 = vadd.f32 %v3333, %v522
        %v3346 = vadd.f32 %v3334, %v523
        %v3347 = vadd.f32 %v3335, %v524
        %v3348 = vadd.f32 %v3342, %v3336
        %v3349 = vadd.f32 %v3343, %v3337
        %v3350 = vadd.f32 %v3344, %v3338
        %v3351 = vadd.f32 %v3345, %v3339
        %v3352 = vadd.f32 %v3346, %v3340
        %v3353 = vadd.f32 %v3347, %v3341
        %v3354 = vrot.slane %v3348, 7
        %v3355 = vrot.slane %v3349, 7
        %v3356 = vrot.slane %v3350, 7
        %v3357 = vrot.slane %v3351, 7
        %v3358 = vrot.slane %v3352, 7
        %v3359 = vrot.slane %v3353, 7
        %v3360 = vsel %vm652, %v3356, %v3358
        %v3361 = vsel %vm652, %v3357, %v3359
        %v3362 = vsel %vm652, %v3354, %v3356
        %v3363 = vsel %vm652, %v3355, %v3357
        %v3364 = vsel %vm652, %v3358, %v3354
        %v3365 = vsel %vm652, %v3359, %v3355
        %v3366 = vrot.slane %v3348, 1
        %v3367 = vrot.slane %v3349, 1
        %v3368 = vrot.slane %v3350, 1
        %v3369 = vrot.slane %v3351, 1
        %v3370 = vrot.slane %v3352, 1
        %v3371 = vrot.slane %v3353, 1
        %v3372 = vsel %vm665, %v3368, %v3370
        %v3373 = vsel %vm665, %v3369, %v3371
        %v3374 = vsel %vm665, %v3366, %v3368
        %v3375 = vsel %vm665, %v3367, %v3369
        %v3376 = vsel %vm665, %v3370, %v3366
        %v3377 = vsel %vm665, %v3371, %v3367
        %v3378 = vsel %vm544, 0.0, %v3364
        %v3379 = vsel %vm544, 0.0, %v3365
        %v3380 = vsel %vm545, 0.0, %v3362
        %v3381 = vsel %vm545, 0.0, %v3363
        %v3382 = vsel %vm546, 0.0, %v3360
        %v3383 = vsel %vm546, 0.0, %v3361
        %v3384 = vsel %vm547, 0.0, %v3374
        %v3385 = vsel %vm547, 0.0, %v3375
        %v3386 = vsel %vm548, 0.0, %v3372
        %v3387 = vsel %vm548, 0.0, %v3373
        %v3388 = vsel %vm549, 0.0, %v3376
        %v3389 = vsel %vm549, 0.0, %v3377
        %v3390 = vadd.f32 %v3378, %v3348
        %v3391 = vadd.f32 %v3379, %v3349
        %v3392 = vadd.f32 %v3380, %v3350
        %v3393 = vadd.f32 %v3381, %v3351
        %v3394 = vadd.f32 %v3382, %v3352
        %v3395 = vadd.f32 %v3383, %v3353
        %v3396 = vadd.f32 %v3390, %v3384
        %v3397 = vadd.f32 %v3391, %v3385
        %v3398 = vadd.f32 %v3392, %v3386
        %v3399 = vadd.f32 %v3393, %v3387
        %v3400 = vadd.f32 %v3394, %v3388
        %v3401 = vadd.f32 %v3395, %v3389
        %v3402 = vmul.f32 %v3396, 0.11111111
        %v3403 = vmul.f32 %v3397, 0.11111111
        %v3404 = vmul.f32 %v3398, 0.11111111
        %v3405 = vmul.f32 %v3399, 0.11111111
        %v3406 = vmul.f32 %v3400, 0.11111111
        %v3407 = vmul.f32 %v3401, 0.11111111
        %v3408 = vmul.f32 %v3402, 2.0
        %v3409 = vmul.f32 %v3403, 2.0
        %v3410 = vmul.f32 %v3404, 2.0
        %v3411 = vmul.f32 %v3405, 2.0
        %v3412 = vmul.f32 %v3406, 2.0
        %v3413 = vmul.f32 %v3407, 2.0
        %v3414 = vsub.f32 %v3288, %v3408
        %v3415 = vsub.f32 %v3289, %v3409
        %v3416 = vsub.f32 %v3290, %v3410
        %v3417 = vsub.f32 %v3291, %v3411
        %v3418 = vsub.f32 %v3292, %v3412
        %v3419 = vsub.f32 %v3293, %v3413
        %v3420 = vadd.f32 %v3414, %v525
        %v3421 = vadd.f32 %v3415, %v526
        %v3422 = vadd.f32 %v3416, %v527
        %v3423 = vadd.f32 %v3417, %v528
        %v3424 = vadd.f32 %v3418, %v529
        %v3425 = vadd.f32 %v3419, %v530
        %v3426 = vmul.f32 %v3420, 0.8154944
        %v3427 = vmul.f32 %v3421, 0.8154944
        %v3428 = vmul.f32 %v3422, 0.8154944
        %v3429 = vmul.f32 %v3423, 0.8154944
        %v3430 = vmul.f32 %v3424, 0.8154944
        %v3431 = vmul.f32 %v3425, 0.8154944
        %v3432 = vmul.f32 %v3426, %v2371
        %v3433 = vmul.f32 %v3427, %v2373
        %v3434 = vmul.f32 %v3428, %v2375
        %v3435 = vmul.f32 %v3429, %v2377
        %v3436 = vmul.f32 %v3430, %v2379
        %v3437 = vmul.f32 %v3431, %v2381
        %v3438 = vmul.f32 %v2371, 1.6309888
        %v3439 = vmul.f32 %v2373, 1.6309888
        %v3440 = vmul.f32 %v2375, 1.6309888
        %v3441 = vmul.f32 %v2377, 1.6309888
        %v3442 = vmul.f32 %v2379, 1.6309888
        %v3443 = vmul.f32 %v2381, 1.6309888
        %v3444 = vadd.f32 %v3438, 2.6666667
        %v3445 = vadd.f32 %v3439, 2.6666667
        %v3446 = vadd.f32 %v3440, 2.6666667
        %v3447 = vadd.f32 %v3441, 2.6666667
        %v3448 = vadd.f32 %v3442, 2.6666667
        %v3449 = vadd.f32 %v3443, 2.6666667
        %v3450 = vrcp.pop %v3444
        %v3451 = vmul.f32 1.0, %v3450
        %v3452 = vrcp.pop %v3445
        %v3453 = vmul.f32 1.0, %v3452
        %v3454 = vrcp.pop %v3446
        %v3455 = vmul.f32 1.0, %v3454
        %v3456 = vrcp.pop %v3447
        %v3457 = vmul.f32 1.0, %v3456
        %v3458 = vrcp.pop %v3448
        %v3459 = vmul.f32 1.0, %v3458
        %v3460 = vrcp.pop %v3449
        %v3461 = vmul.f32 1.0, %v3460
        %v3462 = vmul.f32 %v3432, %v3451
        %v3463 = vmul.f32 %v3433, %v3453
        %v3464 = vmul.f32 %v3434, %v3455
        %v3465 = vmul.f32 %v3435, %v3457
        %v3466 = vmul.f32 %v3436, %v3459
        %v3467 = vmul.f32 %v3437, %v3461
        %v3468 = vmul.f32 %v3438, %v513
        %v3469 = vmul.f32 %v3439, %v514
        %v3470 = vmul.f32 %v3440, %v515
        %v3471 = vmul.f32 %v3441, %v516
        %v3472 = vmul.f32 %v3442, %v517
        %v3473 = vmul.f32 %v3443, %v518
        %3474 = vrot.lane.b32.xlu0 %v513, 1
        %v3475 = vpop.permute.xlu0 %3474
        %3476 = vrot.lane.b32.xlu0 %v515, 1
        %v3477 = vpop.permute.xlu0 %3476
        %3478 = vrot.lane.b32.xlu0 %v517, 1
        %v3479 = vpop.permute.xlu0 %3478
        %3480 = vrot.lane.b32.xlu0 %v514, 1
        %v3481 = vpop.permute.xlu0 %3480
        %3482 = vrot.lane.b32.xlu0 %v516, 1
        %v3483 = vpop.permute.xlu0 %3482
        %3484 = vrot.lane.b32.xlu0 %v518, 1
        %v3485 = vpop.permute.xlu0 %3484
        %v3486 = vsel %vm566, %v3475, %v3481
        %v3487 = vsel %vm566, %v3477, %v3483
        %v3488 = vsel %vm566, %v3479, %v3485
        %v3489 = vsel %vm566, %v3481, %v3475
        %v3490 = vsel %vm566, %v3483, %v3477
        %v3491 = vsel %vm566, %v3485, %v3479
        %3492 = vrot.lane.b32.xlu0 %v513, 127
        %v3493 = vpop.permute.xlu0 %3492
        %3494 = vrot.lane.b32.xlu0 %v515, 127
        %v3495 = vpop.permute.xlu0 %3494
        %3496 = vrot.lane.b32.xlu0 %v517, 127
        %v3497 = vpop.permute.xlu0 %3496
        %3498 = vrot.lane.b32.xlu0 %v514, 127
        %v3499 = vpop.permute.xlu0 %3498
        %3500 = vrot.lane.b32.xlu0 %v516, 127
        %v3501 = vpop.permute.xlu0 %3500
        %3502 = vrot.lane.b32.xlu0 %v518, 127
        %v3503 = vpop.permute.xlu0 %3502
        %v3504 = vsel %vm585, %v3493, %v3499
        %v3505 = vsel %vm585, %v3495, %v3501
        %v3506 = vsel %vm585, %v3497, %v3503
        %v3507 = vsel %vm585, %v3499, %v3493
        %v3508 = vsel %vm585, %v3501, %v3495
        %v3509 = vsel %vm585, %v3503, %v3497
        %v3510 = vsel %vm550, 0.0, %v3489
        %v3511 = vsel %vm551, 0.0, %v3486
        %v3512 = vsel %vm550, 0.0, %v3490
        %v3513 = vsel %vm551, 0.0, %v3487
        %v3514 = vsel %vm550, 0.0, %v3491
        %v3515 = vsel %vm551, 0.0, %v3488
        %v3516 = vsel %vm552, 0.0, %v3504
        %v3517 = vsel %vm553, 0.0, %v3507
        %v3518 = vsel %vm552, 0.0, %v3505
        %v3519 = vsel %vm553, 0.0, %v3508
        %v3520 = vsel %vm552, 0.0, %v3506
        %v3521 = vsel %vm553, 0.0, %v3509
        %v3522 = vadd.f32 %v3510, %v513
        %v3523 = vadd.f32 %v3511, %v514
        %v3524 = vadd.f32 %v3512, %v515
        %v3525 = vadd.f32 %v3513, %v516
        %v3526 = vadd.f32 %v3514, %v517
        %v3527 = vadd.f32 %v3515, %v518
        %v3528 = vadd.f32 %v3522, %v3516
        %v3529 = vadd.f32 %v3523, %v3517
        %v3530 = vadd.f32 %v3524, %v3518
        %v3531 = vadd.f32 %v3525, %v3519
        %v3532 = vadd.f32 %v3526, %v3520
        %v3533 = vadd.f32 %v3527, %v3521
        %v3534 = vrot.slane %v3528, 7
        %v3535 = vrot.slane %v3529, 7
        %v3536 = vrot.slane %v3530, 7
        %v3537 = vrot.slane %v3531, 7
        %v3538 = vrot.slane %v3532, 7
        %v3539 = vrot.slane %v3533, 7
        %v3540 = vsel %vm652, %v3536, %v3538
        %v3541 = vsel %vm652, %v3537, %v3539
        %v3542 = vsel %vm652, %v3534, %v3536
        %v3543 = vsel %vm652, %v3535, %v3537
        %v3544 = vsel %vm652, %v3538, %v3534
        %v3545 = vsel %vm652, %v3539, %v3535
        %v3546 = vrot.slane %v3528, 1
        %v3547 = vrot.slane %v3529, 1
        %v3548 = vrot.slane %v3530, 1
        %v3549 = vrot.slane %v3531, 1
        %v3550 = vrot.slane %v3532, 1
        %v3551 = vrot.slane %v3533, 1
        %v3552 = vsel %vm665, %v3548, %v3550
        %v3553 = vsel %vm665, %v3549, %v3551
        %v3554 = vsel %vm665, %v3546, %v3548
        %v3555 = vsel %vm665, %v3547, %v3549
        %v3556 = vsel %vm665, %v3550, %v3546
        %v3557 = vsel %vm665, %v3551, %v3547
        %v3558 = vsel %vm544, 0.0, %v3544
        %v3559 = vsel %vm544, 0.0, %v3545
        %v3560 = vsel %vm545, 0.0, %v3542
        %v3561 = vsel %vm545, 0.0, %v3543
        %v3562 = vsel %vm546, 0.0, %v3540
        %v3563 = vsel %vm546, 0.0, %v3541
        %v3564 = vsel %vm547, 0.0, %v3554
        %v3565 = vsel %vm547, 0.0, %v3555
        %v3566 = vsel %vm548, 0.0, %v3552
        %v3567 = vsel %vm548, 0.0, %v3553
        %v3568 = vsel %vm549, 0.0, %v3556
        %v3569 = vsel %vm549, 0.0, %v3557
        %v3570 = vadd.f32 %v3558, %v3528
        %v3571 = vadd.f32 %v3559, %v3529
        %v3572 = vadd.f32 %v3560, %v3530
        %v3573 = vadd.f32 %v3561, %v3531
        %v3574 = vadd.f32 %v3562, %v3532
        %v3575 = vadd.f32 %v3563, %v3533
        %v3576 = vadd.f32 %v3570, %v3564
        %v3577 = vadd.f32 %v3571, %v3565
        %v3578 = vadd.f32 %v3572, %v3566
        %v3579 = vadd.f32 %v3573, %v3567
        %v3580 = vadd.f32 %v3574, %v3568
        %v3581 = vadd.f32 %v3575, %v3569
        %v3582 = vmul.f32 %v3576, 0.33333334
        %v3583 = vmul.f32 %v3577, 0.33333334
        %v3584 = vmul.f32 %v3578, 0.33333334
        %v3585 = vmul.f32 %v3579, 0.33333334
        %v3586 = vmul.f32 %v3580, 0.33333334
        %v3587 = vmul.f32 %v3581, 0.33333334
        %v3588 = vmul.f32 %v513, 3.0
        %v3589 = vmul.f32 %v514, 3.0
        %v3590 = vmul.f32 %v515, 3.0
        %v3591 = vmul.f32 %v516, 3.0
        %v3592 = vmul.f32 %v517, 3.0
        %v3593 = vmul.f32 %v518, 3.0
        %v3594 = vsub.f32 %v3582, %v3588
        %v3595 = vsub.f32 %v3583, %v3589
        %v3596 = vsub.f32 %v3584, %v3590
        %v3597 = vsub.f32 %v3585, %v3591
        %v3598 = vsub.f32 %v3586, %v3592
        %v3599 = vsub.f32 %v3587, %v3593
        %v3600 = vsub.f32 %v3468, %v3594
        %v3601 = vsub.f32 %v3469, %v3595
        %v3602 = vsub.f32 %v3470, %v3596
        %v3603 = vsub.f32 %v3471, %v3597
        %v3604 = vsub.f32 %v3472, %v3598
        %v3605 = vsub.f32 %v3473, %v3599
        %v3606 = vmul.f32 %v3600, %v3451
        %v3607 = vmul.f32 %v3601, %v3453
        %v3608 = vmul.f32 %v3602, %v3455
        %v3609 = vmul.f32 %v3603, %v3457
        %v3610 = vmul.f32 %v3604, %v3459
        %v3611 = vmul.f32 %v3605, %v3461
        %v3612 = vsub.f32 %v513, %v3606
        %v3613 = vsub.f32 %v514, %v3607
        %v3614 = vsub.f32 %v515, %v3608
        %v3615 = vsub.f32 %v516, %v3609
        %v3616 = vsub.f32 %v517, %v3610
        %v3617 = vsub.f32 %v518, %v3611
        %v3618 = vadd.f32 %v3612, %v3462
        %v3619 = vadd.f32 %v3613, %v3463
        %v3620 = vadd.f32 %v3614, %v3464
        %v3621 = vadd.f32 %v3615, %v3465
        %v3622 = vadd.f32 %v3616, %v3466
        %v3623 = vadd.f32 %v3617, %v3467
        %v3624 = vmul.f32 %v3438, %v3618
        %v3625 = vmul.f32 %v3439, %v3619
        %v3626 = vmul.f32 %v3440, %v3620
        %v3627 = vmul.f32 %v3441, %v3621
        %v3628 = vmul.f32 %v3442, %v3622
        %v3629 = vmul.f32 %v3443, %v3623
        %3630 = vrot.lane.b32.xlu0 %v3618, 1
        %v3631 = vpop.permute.xlu0 %3630
        %3632 = vrot.lane.b32.xlu0 %v3620, 1
        %v3633 = vpop.permute.xlu0 %3632
        %3634 = vrot.lane.b32.xlu0 %v3622, 1
        %v3635 = vpop.permute.xlu0 %3634
        %3636 = vrot.lane.b32.xlu0 %v3619, 1
        %v3637 = vpop.permute.xlu0 %3636
        %3638 = vrot.lane.b32.xlu0 %v3621, 1
        %v3639 = vpop.permute.xlu0 %3638
        %3640 = vrot.lane.b32.xlu0 %v3623, 1
        %v3641 = vpop.permute.xlu0 %3640
        %v3642 = vsel %vm566, %v3631, %v3637
        %v3643 = vsel %vm566, %v3633, %v3639
        %v3644 = vsel %vm566, %v3635, %v3641
        %v3645 = vsel %vm566, %v3637, %v3631
        %v3646 = vsel %vm566, %v3639, %v3633
        %v3647 = vsel %vm566, %v3641, %v3635
        %3648 = vrot.lane.b32.xlu0 %v3618, 127
        %v3649 = vpop.permute.xlu0 %3648
        %3650 = vrot.lane.b32.xlu0 %v3620, 127
        %v3651 = vpop.permute.xlu0 %3650
        %3652 = vrot.lane.b32.xlu0 %v3622, 127
        %v3653 = vpop.permute.xlu0 %3652
        %3654 = vrot.lane.b32.xlu0 %v3619, 127
        %v3655 = vpop.permute.xlu0 %3654
        %3656 = vrot.lane.b32.xlu0 %v3621, 127
        %v3657 = vpop.permute.xlu0 %3656
        %3658 = vrot.lane.b32.xlu0 %v3623, 127
        %v3659 = vpop.permute.xlu0 %3658
        %v3660 = vsel %vm585, %v3649, %v3655
        %v3661 = vsel %vm585, %v3651, %v3657
        %v3662 = vsel %vm585, %v3653, %v3659
        %v3663 = vsel %vm585, %v3655, %v3649
        %v3664 = vsel %vm585, %v3657, %v3651
        %v3665 = vsel %vm585, %v3659, %v3653
        %v3666 = vsel %vm550, 0.0, %v3645
        %v3667 = vsel %vm551, 0.0, %v3642
        %v3668 = vsel %vm550, 0.0, %v3646
        %v3669 = vsel %vm551, 0.0, %v3643
        %v3670 = vsel %vm550, 0.0, %v3647
        %v3671 = vsel %vm551, 0.0, %v3644
        %v3672 = vsel %vm552, 0.0, %v3660
        %v3673 = vsel %vm553, 0.0, %v3663
        %v3674 = vsel %vm552, 0.0, %v3661
        %v3675 = vsel %vm553, 0.0, %v3664
        %v3676 = vsel %vm552, 0.0, %v3662
        %v3677 = vsel %vm553, 0.0, %v3665
        %v3678 = vadd.f32 %v3666, %v3618
        %v3679 = vadd.f32 %v3667, %v3619
        %v3680 = vadd.f32 %v3668, %v3620
        %v3681 = vadd.f32 %v3669, %v3621
        %v3682 = vadd.f32 %v3670, %v3622
        %v3683 = vadd.f32 %v3671, %v3623
        %v3684 = vadd.f32 %v3678, %v3672
        %v3685 = vadd.f32 %v3679, %v3673
        %v3686 = vadd.f32 %v3680, %v3674
        %v3687 = vadd.f32 %v3681, %v3675
        %v3688 = vadd.f32 %v3682, %v3676
        %v3689 = vadd.f32 %v3683, %v3677
        %v3690 = vrot.slane %v3684, 7
        %v3691 = vrot.slane %v3685, 7
        %v3692 = vrot.slane %v3686, 7
        %v3693 = vrot.slane %v3687, 7
        %v3694 = vrot.slane %v3688, 7
        %v3695 = vrot.slane %v3689, 7
        %v3696 = vsel %vm652, %v3692, %v3694
        %v3697 = vsel %vm652, %v3693, %v3695
        %v3698 = vsel %vm652, %v3690, %v3692
        %v3699 = vsel %vm652, %v3691, %v3693
        %v3700 = vsel %vm652, %v3694, %v3690
        %v3701 = vsel %vm652, %v3695, %v3691
        %v3702 = vrot.slane %v3684, 1
        %v3703 = vrot.slane %v3685, 1
        %v3704 = vrot.slane %v3686, 1
        %v3705 = vrot.slane %v3687, 1
        %v3706 = vrot.slane %v3688, 1
        %v3707 = vrot.slane %v3689, 1
        %v3708 = vsel %vm665, %v3704, %v3706
        %v3709 = vsel %vm665, %v3705, %v3707
        %v3710 = vsel %vm665, %v3702, %v3704
        %v3711 = vsel %vm665, %v3703, %v3705
        %v3712 = vsel %vm665, %v3706, %v3702
        %v3713 = vsel %vm665, %v3707, %v3703
        %v3714 = vsel %vm544, 0.0, %v3700
        %v3715 = vsel %vm544, 0.0, %v3701
        %v3716 = vsel %vm545, 0.0, %v3698
        %v3717 = vsel %vm545, 0.0, %v3699
        %v3718 = vsel %vm546, 0.0, %v3696
        %v3719 = vsel %vm546, 0.0, %v3697
        %v3720 = vsel %vm547, 0.0, %v3710
        %v3721 = vsel %vm547, 0.0, %v3711
        %v3722 = vsel %vm548, 0.0, %v3708
        %v3723 = vsel %vm548, 0.0, %v3709
        %v3724 = vsel %vm549, 0.0, %v3712
        %v3725 = vsel %vm549, 0.0, %v3713
        %v3726 = vadd.f32 %v3714, %v3684
        %v3727 = vadd.f32 %v3715, %v3685
        %v3728 = vadd.f32 %v3716, %v3686
        %v3729 = vadd.f32 %v3717, %v3687
        %v3730 = vadd.f32 %v3718, %v3688
        %v3731 = vadd.f32 %v3719, %v3689
        %v3732 = vadd.f32 %v3726, %v3720
        %v3733 = vadd.f32 %v3727, %v3721
        %v3734 = vadd.f32 %v3728, %v3722
        %v3735 = vadd.f32 %v3729, %v3723
        %v3736 = vadd.f32 %v3730, %v3724
        %v3737 = vadd.f32 %v3731, %v3725
        %v3738 = vmul.f32 %v3732, 0.33333334
        %v3739 = vmul.f32 %v3733, 0.33333334
        %v3740 = vmul.f32 %v3734, 0.33333334
        %v3741 = vmul.f32 %v3735, 0.33333334
        %v3742 = vmul.f32 %v3736, 0.33333334
        %v3743 = vmul.f32 %v3737, 0.33333334
        %v3744 = vmul.f32 %v3618, 3.0
        %v3745 = vmul.f32 %v3619, 3.0
        %v3746 = vmul.f32 %v3620, 3.0
        %v3747 = vmul.f32 %v3621, 3.0
        %v3748 = vmul.f32 %v3622, 3.0
        %v3749 = vmul.f32 %v3623, 3.0
        %v3750 = vsub.f32 %v3738, %v3744
        %v3751 = vsub.f32 %v3739, %v3745
        %v3752 = vsub.f32 %v3740, %v3746
        %v3753 = vsub.f32 %v3741, %v3747
        %v3754 = vsub.f32 %v3742, %v3748
        %v3755 = vsub.f32 %v3743, %v3749
        %v3756 = vsub.f32 %v3624, %v3750
        %v3757 = vsub.f32 %v3625, %v3751
        %v3758 = vsub.f32 %v3626, %v3752
        %v3759 = vsub.f32 %v3627, %v3753
        %v3760 = vsub.f32 %v3628, %v3754
        %v3761 = vsub.f32 %v3629, %v3755
        %v3762 = vmul.f32 %v3756, %v3451
        %v3763 = vmul.f32 %v3757, %v3453
        %v3764 = vmul.f32 %v3758, %v3455
        %v3765 = vmul.f32 %v3759, %v3457
        %v3766 = vmul.f32 %v3760, %v3459
        %v3767 = vmul.f32 %v3761, %v3461
        %v3768 = vsub.f32 %v3618, %v3762
        %v3769 = vsub.f32 %v3619, %v3763
        %v3770 = vsub.f32 %v3620, %v3764
        %v3771 = vsub.f32 %v3621, %v3765
        %v3772 = vsub.f32 %v3622, %v3766
        %v3773 = vsub.f32 %v3623, %v3767
        %v3774 = vadd.f32 %v3768, %v3462
        %v3775 = vadd.f32 %v3769, %v3463
        %v3776 = vadd.f32 %v3770, %v3464
        %v3777 = vadd.f32 %v3771, %v3465
        %v3778 = vadd.f32 %v3772, %v3466
        %v3779 = vadd.f32 %v3773, %v3467
        %v3780 = vadd.f32 %v509, %v3776
        %v3781 = vadd.f32 %v510, %v3777
        %3782 = vrot.lane.b32.xlu0 %v3774, 1
        %v3783 = vpop.permute.xlu0 %3782
        %3784 = vrot.lane.b32.xlu0 %v3776, 1
        %v3785 = vpop.permute.xlu0 %3784
        %3786 = vrot.lane.b32.xlu0 %v3778, 1
        %v3787 = vpop.permute.xlu0 %3786
        %3788 = vrot.lane.b32.xlu0 %v3775, 1
        %v3789 = vpop.permute.xlu0 %3788
        %3790 = vrot.lane.b32.xlu0 %v3777, 1
        %v3791 = vpop.permute.xlu0 %3790
        %3792 = vrot.lane.b32.xlu0 %v3779, 1
        %v3793 = vpop.permute.xlu0 %3792
        %v3794 = vsel %vm566, %v3783, %v3789
        %v3795 = vsel %vm566, %v3785, %v3791
        %v3796 = vsel %vm566, %v3787, %v3793
        %v3797 = vsel %vm566, %v3789, %v3783
        %v3798 = vsel %vm566, %v3791, %v3785
        %v3799 = vsel %vm566, %v3793, %v3787
        %3800 = vrot.lane.b32.xlu0 %v3774, 127
        %v3801 = vpop.permute.xlu0 %3800
        %3802 = vrot.lane.b32.xlu0 %v3776, 127
        %v3803 = vpop.permute.xlu0 %3802
        %3804 = vrot.lane.b32.xlu0 %v3778, 127
        %v3805 = vpop.permute.xlu0 %3804
        %3806 = vrot.lane.b32.xlu0 %v3775, 127
        %v3807 = vpop.permute.xlu0 %3806
        %3808 = vrot.lane.b32.xlu0 %v3777, 127
        %v3809 = vpop.permute.xlu0 %3808
        %3810 = vrot.lane.b32.xlu0 %v3779, 127
        %v3811 = vpop.permute.xlu0 %3810
        %v3812 = vsel %vm585, %v3801, %v3807
        %v3813 = vsel %vm585, %v3803, %v3809
        %v3814 = vsel %vm585, %v3805, %v3811
        %v3815 = vsel %vm585, %v3807, %v3801
        %v3816 = vsel %vm585, %v3809, %v3803
        %v3817 = vsel %vm585, %v3811, %v3805
        %v3818 = vsel %vm550, 0.0, %v3797
        %v3819 = vsel %vm551, 0.0, %v3794
        %v3820 = vsel %vm550, 0.0, %v3798
        %v3821 = vsel %vm551, 0.0, %v3795
        %v3822 = vsel %vm550, 0.0, %v3799
        %v3823 = vsel %vm551, 0.0, %v3796
        %v3824 = vsel %vm552, 0.0, %v3812
        %v3825 = vsel %vm553, 0.0, %v3815
        %v3826 = vsel %vm552, 0.0, %v3813
        %v3827 = vsel %vm553, 0.0, %v3816
        %v3828 = vsel %vm552, 0.0, %v3814
        %v3829 = vsel %vm553, 0.0, %v3817
        %v3830 = vsub.f32 %v3818, %v3824
        %v3831 = vsub.f32 %v3819, %v3825
        %v3832 = vsub.f32 %v3820, %v3826
        %v3833 = vsub.f32 %v3821, %v3827
        %v3834 = vsub.f32 %v3822, %v3828
        %v3835 = vsub.f32 %v3823, %v3829
        %v3836 = vadd.f32 %v3818, %v3824
        %v3837 = vadd.f32 %v3819, %v3825
        %v3838 = vadd.f32 %v3820, %v3826
        %v3839 = vadd.f32 %v3821, %v3827
        %v3840 = vadd.f32 %v3822, %v3828
        %v3841 = vadd.f32 %v3823, %v3829
        %v3842 = vmul.f32 %v3836, 0.083333336
        %v3843 = vmul.f32 %v3837, 0.083333336
        %v3844 = vmul.f32 %v3838, 0.083333336
        %v3845 = vmul.f32 %v3839, 0.083333336
        %v3846 = vmul.f32 %v3840, 0.083333336
        %v3847 = vmul.f32 %v3841, 0.083333336
        %v3848 = vmul.f32 %v3774, 0.33333334
        %v3849 = vmul.f32 %v3775, 0.33333334
        %v3850 = vmul.f32 %v3776, 0.33333334
        %v3851 = vmul.f32 %v3777, 0.33333334
        %v3852 = vmul.f32 %v3778, 0.33333334
        %v3853 = vmul.f32 %v3779, 0.33333334
        %v3854 = vadd.f32 %v3842, %v3848
        %v3855 = vadd.f32 %v3843, %v3849
        %v3856 = vadd.f32 %v3844, %v3850
        %v3857 = vadd.f32 %v3845, %v3851
        %v3858 = vadd.f32 %v3846, %v3852
        %v3859 = vadd.f32 %v3847, %v3853
        %v3860 = vrot.slane %v3830, 7
        %v3861 = vrot.slane %v3831, 7
        %v3862 = vrot.slane %v3832, 7
        %v3863 = vrot.slane %v3833, 7
        %v3864 = vsel %vm652, %v3860, %v3862
        %v3865 = vsel %vm652, %v3861, %v3863
        %v3866 = vrot.slane %v3832, 1
        %v3867 = vrot.slane %v3833, 1
        %v3868 = vrot.slane %v3834, 1
        %v3869 = vrot.slane %v3835, 1
        %v3870 = vsel %vm665, %v3866, %v3868
        %v3871 = vsel %vm665, %v3867, %v3869
        %v3872 = vsel %vm545, 0.0, %v3864
        %v3873 = vsel %vm545, 0.0, %v3865
        %v3874 = vsel %vm548, 0.0, %v3870
        %v3875 = vsel %vm548, 0.0, %v3871
        %v3876 = vrot.slane %v3854, 7
        %v3877 = vrot.slane %v3855, 7
        %v3878 = vrot.slane %v3856, 7
        %v3879 = vrot.slane %v3857, 7
        %v3880 = vsel %vm652, %v3876, %v3878
        %v3881 = vsel %vm652, %v3877, %v3879
        %v3882 = vrot.slane %v3856, 1
        %v3883 = vrot.slane %v3857, 1
        %v3884 = vrot.slane %v3858, 1
        %v3885 = vrot.slane %v3859, 1
        %v3886 = vsel %vm665, %v3882, %v3884
        %v3887 = vsel %vm665, %v3883, %v3885
        %v3888 = vsel %vm545, 0.0, %v3880
        %v3889 = vsel %vm545, 0.0, %v3881
        %v3890 = vsel %vm548, 0.0, %v3886
        %v3891 = vsel %vm548, 0.0, %v3887
        %v3892 = vadd.f32 %v3872, %v3874
        %v3893 = vadd.f32 %v3873, %v3875
        %v3894 = vmul.f32 %v3892, 0.083333336
        %v3895 = vmul.f32 %v3893, 0.083333336
        %v3896 = vmul.f32 %v3832, 0.33333334
        %v3897 = vmul.f32 %v3833, 0.33333334
        %v3898 = vadd.f32 %v3894, %v3896
        %v3899 = vadd.f32 %v3895, %v3897
        %v3900 = vsub.f32 %v3890, %v3888
        %v3901 = vsub.f32 %v3891, %v3889
        %v3902 = vmul.f32 %v3898, 4.905
        %v3903 = vmul.f32 %v3899, 4.905
        %v3904 = vsub.f32 %v2354, %v3902
        %v3905 = vsub.f32 %v2355, %v3903
        %v3906 = vmul.f32 %v3900, 4.905
        %v3907 = vmul.f32 %v3901, 4.905
        %v3908 = vsub.f32 %v2360, %v3906
        %v3909 = vsub.f32 %v2361, %v3907
        %3910 = vst [vmem:[%s145] sm:$0xff] %v3904
        %3911 = vst [vmem:[%s145 + $0x8] sm:$0xff] %v3905
        %3912 = vst [vmem:[%s152] sm:$0xff] %v3908
        %3913 = vst [vmem:[%s152 + $0x8] sm:$0xff] %v3909
        %3914 = vst [vmem:[%s159] sm:$0xff] %v3780
        %3915 = vst [vmem:[%s159 + $0x8] sm:$0xff] %v3781
        %3916 = vst [vmem:[%s166] sm:$0xff] %v3776
        %3917 = vst [vmem:[%s166 + $0x8] sm:$0xff] %v3777
        %s3918 = sand.u32 %s49, 1
        %s3919 = scalar_lea.sflag [#allocation11], %s3918
        %s3920 = sand.u32 %s49, 1
        %s3921 = smul.addr %s3920, 16
        %s3922 = scalar_lea.vmem [#allocation10], %s3921
        %s3923 = sand.u32 %s26, 1
        %s3924 = scalar_lea.sflag [#allocation13], %s3923
        %s3925 = sand.u32 %s72, 1
        %s3926 = smul.addr %s3925, 16
        %s3927 = scalar_lea.vmem [#allocation12], %s3926
        %s3928 = sand.u32 %s26, 1
        %s3929 = scalar_lea.sflag [#allocation13], %s3928
        %s3930 = sand.u32 %s95, 1
        %s3931 = smul.addr %s3930, 16
        %s3932 = scalar_lea.vmem [#allocation14], %s3931
        %s3933 = sand.u32 %s118, 1
        %s3934 = scalar_lea.sflag [#allocation16], %s3933
        %s3935 = sand.u32 %s118, 1
        %s3936 = smul.addr %s3935, 16
        %s3937 = scalar_lea.vmem [#allocation15], %s3936
        // Predicated region
        $region77: #{tpu_custom_call.1} parent=11 // pred_check
          %p3938 = pneg %p55
        $region78: #{tpu_custom_call.1} parent=11 // pred_check_branch
          %3940 = sbr.rel (%p3938) target = $region80
        $region79: #{tpu_custom_call.1} parent=11 // pred_region
          %s3941 = smul.u32 %s32, 4
          %s3942 = sadd.s32 %s3941, %s33
          %s3944 = ssub.s32 256, 256
          %3945 = vsyncadd %s3919, %s3944
          %s3946 = smul.addr %s3942, 2
          %s3947 = smul.addr %s3946, 128
          %s3948 = scalar_lea.hbm %s7, %s3947
          %s3950 = sshll.u32 %s3922, 4
          %s3951 = int_to_ptr.vmem [resolvable:$true] %s3950
          %3953 = dma.vmem_to_hbm [thread:$0]  %s3951, 256, %s3948, %s3919
        $region80: #{tpu_custom_call.1} parent=11 // pred_fallthru
          _
        // Predicated region
        $region81: #{tpu_custom_call.1} parent=11 // pred_check
          %p3954 = pneg %p78
        $region82: #{tpu_custom_call.1} parent=11 // pred_check_branch
          %3956 = sbr.rel (%p3954) target = $region84
        $region83: #{tpu_custom_call.1} parent=11 // pred_region
          %s3957 = smul.u32 %s32, 4
          %s3958 = sadd.s32 %s3957, %s33
          %s3960 = ssub.s32 256, 256
          %3961 = vsyncadd %s3924, %s3960
          %s3962 = smul.addr %s3958, 2
          %s3963 = smul.addr %s3962, 128
          %s3964 = scalar_lea.hbm %s8, %s3963
          %s3966 = sshll.u32 %s3927, 4
          %s3967 = int_to_ptr.vmem [resolvable:$true] %s3966
          %3969 = dma.vmem_to_hbm [thread:$0]  %s3967, 256, %s3964, %s3924
        $region84: #{tpu_custom_call.1} parent=11 // pred_fallthru
          _
        // Predicated region
        $region85: #{tpu_custom_call.1} parent=11 // pred_check
          %p3970 = pneg %p101
        $region86: #{tpu_custom_call.1} parent=11 // pred_check_branch
          %3972 = sbr.rel (%p3970) target = $region88
        $region87: #{tpu_custom_call.1} parent=11 // pred_region
          %s3973 = smul.u32 %s32, 4
          %s3974 = sadd.s32 %s3973, %s33
          %s3976 = ssub.s32 256, 256
          %3977 = vsyncadd %s3929, %s3976
          %s3978 = smul.addr %s3974, 2
          %s3979 = smul.addr %s3978, 128
          %s3980 = scalar_lea.hbm %s9, %s3979
          %s3982 = sshll.u32 %s3932, 4
          %s3983 = int_to_ptr.vmem [resolvable:$true] %s3982
          %3985 = dma.vmem_to_hbm [thread:$0]  %s3983, 256, %s3980, %s3929
        $region88: #{tpu_custom_call.1} parent=11 // pred_fallthru
          _
        // Predicated region
        $region89: #{tpu_custom_call.1} parent=11 // pred_check
          %p3986 = pneg %p124
        $region90: #{tpu_custom_call.1} parent=11 // pred_check_branch
          %3988 = sbr.rel (%p3986) target = $region92
        $region91: #{tpu_custom_call.1} parent=11 // pred_region
          %s3989 = smul.u32 %s32, 4
          %s3990 = sadd.s32 %s3989, %s33
          %s3992 = ssub.s32 256, 256
          %3993 = vsyncadd %s3934, %s3992
          %s3994 = smul.addr %s3990, 2
          %s3995 = smul.addr %s3994, 128
          %s3996 = scalar_lea.hbm %s10, %s3995
          %s3998 = sshll.u32 %s3937, 4
          %s3999 = int_to_ptr.vmem [resolvable:$true] %s3998
          %4001 = dma.vmem_to_hbm [thread:$0]  %s3999, 256, %s3996, %s3934
        $region92: #{tpu_custom_call.1} parent=11 // pred_fallthru
          _
      $region12: #{tpu_custom_call.1} parent=5 // pred_fallthru
        _
      %p4002 = scmp.le.s32.totalorder 1, %s26
      // Predicated region
      $region93: #{tpu_custom_call.1} parent=5 // pred_check
        %p4003 = pneg %p4002
      $region94: #{tpu_custom_call.1} parent=5 // pred_check_branch
        %4005 = sbr.rel (%p4003) target = $region96
      $region95: #{tpu_custom_call.1} parent=5 // pred_region
        %s4006 = ssub.s32 %s26, 1
        // Predicated region
        $region97: #{tpu_custom_call.1} parent=95 // pred_check
          %p4007 = pneg %p61
        $region98: #{tpu_custom_call.1} parent=95 // pred_check_branch
          %4009 = sbr.rel (%p4007) target = $region100
        $region99: #{tpu_custom_call.1} parent=95 // pred_region
          %s4010 = sand.u32 %s52, 1
          %s4011 = scalar_lea.sflag [#allocation11], %s4010
          %s4012 = sand.u32 %s52, 1
          %s4013 = smul.addr %s4012, 16
          %s4014 = scalar_lea.vmem [#allocation10], %s4013
          %4015 = dma.done %s4011, 256
        $region100: #{tpu_custom_call.1} parent=95 // pred_fallthru
          _
        // Predicated region
        $region101: #{tpu_custom_call.1} parent=95 // pred_check
          %p4016 = pneg %p84
        $region102: #{tpu_custom_call.1} parent=95 // pred_check_branch
          %4018 = sbr.rel (%p4016) target = $region104
        $region103: #{tpu_custom_call.1} parent=95 // pred_region
          %s4019 = sand.u32 %s31, 1
          %s4020 = scalar_lea.sflag [#allocation13], %s4019
          %s4021 = sand.u32 %s75, 1
          %s4022 = smul.addr %s4021, 16
          %s4023 = scalar_lea.vmem [#allocation12], %s4022
          %4024 = dma.done %s4020, 256
        $region104: #{tpu_custom_call.1} parent=95 // pred_fallthru
          _
        // Predicated region
        $region105: #{tpu_custom_call.1} parent=95 // pred_check
          %p4025 = pneg %p107
        $region106: #{tpu_custom_call.1} parent=95 // pred_check_branch
          %4027 = sbr.rel (%p4025) target = $region108
        $region107: #{tpu_custom_call.1} parent=95 // pred_region
          %s4028 = sand.u32 %s31, 1
          %s4029 = scalar_lea.sflag [#allocation13], %s4028
          %s4030 = sand.u32 %s98, 1
          %s4031 = smul.addr %s4030, 16
          %s4032 = scalar_lea.vmem [#allocation14], %s4031
          %4033 = dma.done %s4029, 256
        $region108: #{tpu_custom_call.1} parent=95 // pred_fallthru
          _
        // Predicated region
        $region109: #{tpu_custom_call.1} parent=95 // pred_check
          %p4034 = pneg %p130
        $region110: #{tpu_custom_call.1} parent=95 // pred_check_branch
          %4036 = sbr.rel (%p4034) target = $region112
        $region111: #{tpu_custom_call.1} parent=95 // pred_region
          %s4037 = sand.u32 %s121, 1
          %s4038 = scalar_lea.sflag [#allocation16], %s4037
          %s4039 = sand.u32 %s121, 1
          %s4040 = smul.addr %s4039, 16
          %s4041 = scalar_lea.vmem [#allocation15], %s4040
          %4042 = dma.done %s4038, 256
        $region112: #{tpu_custom_call.1} parent=95 // pred_fallthru
          _
      $region96: #{tpu_custom_call.1} parent=5 // pred_fallthru
        _
    $region6: #{tpu_custom_call.1} parent=1 // loop_footer
      %s30 = sadd.s32 1, %s26
    $region7: #{tpu_custom_call.1} parent=1 // loop_footer_branch
      %25 = sbr.rel target = $region3
    $region8: #{tpu_custom_call.1} parent=1 // loop_exit
      _
    %4043 = vsyncpa [#allocation11], 1
    %s4044 = scalar_lea.sflag [#allocation11], 1
    %4045 = vsyncpa %s4044, 1
    %4046 = vsyncpa [#allocation13], 1
    %s4047 = scalar_lea.sflag [#allocation13], 1
    %4048 = vsyncpa %s4047, 1
    %4049 = vsyncpa [#allocation16], 1
    %s4050 = scalar_lea.sflag [#allocation16], 1
    %4051 = vsyncpa %s4050, 1
  %4052 = vsyncmov [#allocation9]
  %s4053 = vpop.sfrf %4052
  %p4054 = scmp.eq.s32.totalorder %s4053, 0
  %p4055 = pneg %p4054
  %4057 = shalt.err (%p4055)
  %s4058 = scalar_lea.sflag [#allocation9], 1
  %4059 = vsyncmov %s4058
  %s4060 = vpop.sfrf %4059
  %p4061 = scmp.eq.s32.totalorder %s4060, 0
  %p4062 = pneg %p4061
  %4064 = shalt.err (%p4062)
  %s4065 = scalar_lea.sflag [#allocation9], 2
  %4066 = vsyncmov %s4065
  %s4067 = vpop.sfrf %4066
  %p4068 = scmp.eq.s32.totalorder %s4067, 0
  %p4069 = pneg %p4068
  %4071 = shalt.err (%p4069)
  %s4072 = scalar_lea.sflag [#allocation9], 3
  %4073 = vsyncmov %s4072
  %s4074 = vpop.sfrf %4073
  %p4075 = scmp.eq.s32.totalorder %s4074, 0
  %p4076 = pneg %p4075
  %4078 = shalt.err (%p4076)
  %s4079 = scalar_lea.sflag [#allocation9], 4
  %4080 = vsyncmov %s4079
  %s4081 = vpop.sfrf %4080
  %p4082 = scmp.eq.s32.totalorder %s4081, 0
  %p4083 = pneg %p4082
  %4085 = shalt.err (%p4083)
  %s4086 = scalar_lea.sflag [#allocation9], 5
  %4087 = vsyncmov %s4086
  %s4088 = vpop.sfrf %4087
  %p4089 = scmp.eq.s32.totalorder %s4088, 0
  %p4090 = pneg %p4089
  %4092 = shalt.err (%p4090)
  %s4093 = scalar_lea.sflag [#allocation9], 6
  %4094 = vsyncmov %s4093
  %s4095 = vpop.sfrf %4094
  %p4096 = scmp.eq.s32.totalorder %s4095, 0
  %p4097 = pneg %p4096
  %4099 = shalt.err (%p4097)
  %s4100 = scalar_lea.sflag [#allocation9], 7
  %4101 = vsyncmov %s4100
  %s4102 = vpop.sfrf %4101
  %p4103 = scmp.eq.s32.totalorder %s4102, 0
  %p4104 = pneg %p4103
  %4106 = shalt.err (%p4104)
  %s4107 = scalar_lea.sflag [#allocation9], 8
  %4108 = vsyncmov %s4107
  %s4109 = vpop.sfrf %4108
  %p4110 = scmp.eq.s32.totalorder %s4109, 0
  %p4111 = pneg %p4110
  %4113 = shalt.err (%p4111)
  %s4114 = scalar_lea.sflag [#allocation9], 9
  %4115 = vsyncmov %s4114
  %s4116 = vpop.sfrf %4115
  %p4117 = scmp.eq.s32.totalorder %s4116, 0
  %p4118 = pneg %p4117
  %4120 = shalt.err (%p4118)
  %s4121 = scalar_lea.sflag [#allocation9], 10
  %4122 = vsyncmov %s4121
  %s4123 = vpop.sfrf %4122
  %p4124 = scmp.eq.s32.totalorder %s4123, 0
  %p4125 = pneg %p4124
  %4127 = shalt.err (%p4125)
  %s4128 = scalar_lea.sflag [#allocation9], 11
  %4129 = vsyncmov %s4128
  %s4130 = vpop.sfrf %4129
  %p4131 = scmp.eq.s32.totalorder %s4130, 0
  %p4132 = pneg %p4131
  %4134 = shalt.err (%p4132)
  %s4135 = scalar_lea.sflag [#allocation9], 12
  %4136 = vsyncmov %s4135
  %s4137 = vpop.sfrf %4136
  %p4138 = scmp.eq.s32.totalorder %s4137, 0
  %p4139 = pneg %p4138
  %4141 = shalt.err (%p4139)
  %s4142 = scalar_lea.sflag [#allocation9], 13
  %4143 = vsyncmov %s4142
  %s4144 = vpop.sfrf %4143
  %p4145 = scmp.eq.s32.totalorder %s4144, 0
  %p4146 = pneg %p4145
  %4148 = shalt.err (%p4146)

</llo_original>
